<compile_context>
chip_gen: v7x
topology: tpu7x:2x2x1
jax: 0.10.0
libtpu: 0.0.40
codegen_flags: <defaults>
</compile_context>

<pallas_src>
import functools

import jax
import jax.numpy as jnp
from jax.experimental import pallas as pl
from jax.experimental.pallas import tpu as pltpu


def _round_up(n, m):
    return ((n + m - 1) // m) * m


def _largest_divisor(n, cap):
    """Largest divisor of n that is <= cap (always >= 1)."""
    cap = max(1, min(n, cap))
    for d in range(cap, 0, -1):
        if n % d == 0:
            return d
    return 1


@functools.lru_cache(maxsize=None)
def _vmem_limit_bytes():
    """Per-kernel scoped-VMEM limit, derived from the hardware when possible."""
    try:
        cap = int(pltpu.get_tpu_info().vmem_capacity_bytes)
        return max(32 * 1024 * 1024, min(96 * 1024 * 1024, (cap * 3) // 4))
    except Exception:
        return 48 * 1024 * 1024   # safe on v5e/v6e (128 MiB) and v7x (64 MiB)


def _pick_time_chunk(T, b_pad, in_dim, hidden, cap=64):
    """Largest time chunk (divisor of T, <= cap) whose working set fits VMEM."""
    G = 4 * hidden
    budget = int(_vmem_limit_bytes() * 0.7)
    # single-buffered bf16 weights + f32 bias + f32 h/c carries
    fixed = 2 * (in_dim * G + hidden * G) + 4 * G + 2 * 4 * b_pad * hidden
    # per-time-step bytes: 2x bf16 x chunk, 2x bf16 out chunk (double buffered),
    # f32 projected-gate scratch, f32 h staging buffer
    per_t = (2 * 2 * b_pad * in_dim + 2 * 2 * b_pad * hidden
             + 4 * b_pad * G + 4 * b_pad * hidden)
    avail = max(budget - fixed, per_t)
    return _largest_divisor(T, max(1, min(cap, avail // per_t)))


# ------------------- fused bidirectional LSTM recurrence ---------------------
# grid = (2 directions ["parallel"], T//tc chunks ["arbitrary"]).
# Per grid step: project the bf16 (tc*B, in) activation slab through the bf16
# (in, 4H) input weights (one MXU matmul, f32 accumulation, BN-folded bias),
# then run the serial recurrence h @ W_hh + gate math, storing the chunk's h
# values and accumulating BN statistics of the real batch rows.
def _bilstm_kernel(x_ref, wih_ref, whh_ref, bias_ref,
                   out_ref, sum_ref, sq_ref,
                   h_ref, c_ref, xg_ref, hbuf_ref,
                   *, hidden, tc, b_pad, b_real):
    H = hidden
    d = pl.program_id(0)          # 0 = forward, 1 = backward

    @pl.when(pl.program_id(1) == 0)
    def _():
        h_ref[...] = jnp.zeros_like(h_ref)
        c_ref[...] = jnp.zeros_like(c_ref)
        sum_ref[...] = jnp.zeros_like(sum_ref)
        sq_ref[...] = jnp.zeros_like(sq_ref)

    # Fused input projection for the whole chunk: (tc*B, in) @ (in, 4H) in
    # bf16 on the MXU with f32 accumulation, plus the BN-folded shift bias.
    xg = jnp.dot(x_ref[...], wih_ref[0], preferred_element_type=jnp.float32)
    xg_ref[...] = (xg + bias_ref[0]).reshape(tc, b_pad, 4 * H)

    # Hoisted direction-dependent index math: s = base + stride * k.
    base = d * (tc - 1)
    stride = 1 - 2 * d

    def step(k, carry):
        h, c = carry
        s = base + stride * k
        gates = xg_ref[s] + jnp.dot(h.astype(jnp.bfloat16), whh_ref[0],
                                    preferred_element_type=jnp.float32)
        # sigmoid(x) = 0.5 * tanh(0.5 * x) + 0.5  (single EUP op per gate)
        ig = 0.5 * jnp.tanh(0.5 * gates[:, 0 * H:1 * H]) + 0.5
        fg = 0.5 * jnp.tanh(0.5 * gates[:, 1 * H:2 * H]) + 0.5
        gg = jnp.tanh(gates[:, 2 * H:3 * H])
        og = 0.5 * jnp.tanh(0.5 * gates[:, 3 * H:4 * H]) + 0.5
        c_new = fg * c + ig * gg
        h_new = og * jnp.tanh(c_new)
        hbuf_ref[s] = h_new
        return h_new, c_new

    h, c = jax.lax.fori_loop(0, tc, step, (h_ref[...], c_ref[...]),
                             unroll=min(tc, 8))
    h_ref[...] = h
    c_ref[...] = c

    vals = hbuf_ref[...]                          # (tc, B, H) float32
    out_ref[...] = vals.astype(out_ref.dtype)     # one lane-dense bf16 store
    # BatchNorm statistics fused into the recurrence (real batch rows only).
    valid = vals[:, :b_real, :]
    sum_ref[...] += jnp.sum(valid, axis=(0, 1))[None, :]
    sq_ref[...] += jnp.sum(valid * valid, axis=(0, 1))[None, :]


def bilstm(x, wih, whh, bias, *, b_real, time_chunk=None):
    """Fused bidirectional LSTM layer.

    x:    (T, Bp, in)  bf16   activations (Bp = sublane-padded batch)
    wih:  (2, in, 4H)  bf16   input-projection weights (BN scale pre-folded)
    whh:  (2, H, 4H)   bf16   recurrent weights
    bias: (2, 1, 4H)   f32    BN-folded shift projected through wih
    Returns (out, sum, sq):
      out: (T, Bp, 2H) bf16 (forward in cols [0,H), backward in [H,2H))
      sum/sq: (1, 2H) f32 per-feature sum / sum-of-squares over the first
      b_real batch rows of out (the BatchNorm batch statistics).
    """
    T, Bp, IN = x.shape
    H = whh.shape[1]
    G = 4 * H
    assert H % 128 == 0, "hidden size must be a multiple of 128 (lane width)"
    assert Bp % 8 == 0, "batch must be padded to a multiple of 8 (sublanes)"
    tc = _pick_time_chunk(T, Bp, IN, H) if time_chunk is None else time_chunk
    assert 1 <= tc <= T and T % tc == 0, (T, tc)
    nT = T // tc

    x2d = x.reshape(T * Bp, IN)     # row-major (t, b) packing; free in HBM

    def x_idx(d, g):
        # forward walks time chunks 0..nT-1, backward walks nT-1..0
        return (g + d * (nT - 1 - 2 * g), 0)

    def w_idx(d, g):
        return (d, 0, 0)

    def out_idx(d, g):
        # same time chunk; direction selects the column block (offset d*H)
        return (g + d * (nT - 1 - 2 * g), 0, d)

    def stat_idx(d, g):
        return (0, d)

    kernel = functools.partial(_bilstm_kernel, hidden=H, tc=tc,
                               b_pad=Bp, b_real=b_real)
    return pl.pallas_call(
        kernel,
        out_shape=(jax.ShapeDtypeStruct((T, Bp, 2 * H), jnp.bfloat16),
                   jax.ShapeDtypeStruct((1, 2 * H), jnp.float32),
                   jax.ShapeDtypeStruct((1, 2 * H), jnp.float32)),
        grid_spec=pltpu.PrefetchScalarGridSpec(
            num_scalar_prefetch=0,
            grid=(2, nT),
            in_specs=[
                pl.BlockSpec((tc * Bp, IN), x_idx),
                # Constant-per-direction weights: single-buffered to halve
                # their VMEM footprint (block index never changes within a d).
                pl.BlockSpec((1, IN, G), w_idx, pipeline_mode=pl.Buffered(1)),
                pl.BlockSpec((1, H, G), w_idx, pipeline_mode=pl.Buffered(1)),
                pl.BlockSpec((1, 1, G), w_idx, pipeline_mode=pl.Buffered(1)),
            ],
            out_specs=(
                pl.BlockSpec((tc, Bp, H), out_idx),
                pl.BlockSpec((1, H), stat_idx),
                pl.BlockSpec((1, H), stat_idx),
            ),
            scratch_shapes=[
                pltpu.VMEM((Bp, H), jnp.float32),       # h carry
                pltpu.VMEM((Bp, H), jnp.float32),       # c carry
                pltpu.VMEM((tc, Bp, G), jnp.float32),   # projected gates
                pltpu.VMEM((tc, Bp, H), jnp.float32),   # f32 h staging buffer
            ],
        ),
        compiler_params=pltpu.CompilerParams(
            # direction axis is independent -> both TensorCores on v7x;
            # time-chunk axis carries h/c/BN state -> "arbitrary".
            dimension_semantics=("parallel", "arbitrary"),
            vmem_limit_bytes=_vmem_limit_bytes()),
    )(x2d, wih, whh, bias)


# --------- fc head: (BN-folded) Linear + log_softmax, lane-dense classes -----
def _fc_kernel(x_ref, w_ref, b_ref, out_ref):
    logits = jnp.dot(x_ref[...], w_ref[...],
                     preferred_element_type=jnp.float32) + b_ref[...]
    m = jnp.max(logits, axis=-1, keepdims=True)
    shifted = logits - m
    lse = jnp.log(jnp.sum(jnp.exp(shifted), axis=-1, keepdims=True))
    out_ref[...] = shifted - lse


def fc_logsoftmax(x2d, w, b):
    """x2d (n, 2H) bf16, w (2H, Cp) bf16, b (1, Cp) f32 -> (n, Cp) f32."""
    n, f = x2d.shape
    cp = w.shape[1]
    assert n % 8 == 0 and f % 128 == 0 and cp % 128 == 0, (n, f, cp)
    rt = 8 * _largest_divisor(n // 8, 64)     # row tile: multiple of 8, <= 512
    return pl.pallas_call(
        _fc_kernel,
        out_shape=jax.ShapeDtypeStruct((n, cp), jnp.float32),
        grid_spec=pltpu.PrefetchScalarGridSpec(
            num_scalar_prefetch=0,
            grid=(n // rt,),
            in_specs=[
                pl.BlockSpec((rt, f), lambda i: (i, 0)),
                pl.BlockSpec((f, cp), lambda i: (0, 0),
                             pipeline_mode=pl.Buffered(1)),
                pl.BlockSpec((1, cp), lambda i: (0, 0),
                             pipeline_mode=pl.Buffered(1)),
            ],
            out_specs=pl.BlockSpec((rt, cp), lambda i: (i, 0)),
        ),
        compiler_params=pltpu.CompilerParams(
            dimension_semantics=("parallel",),
            vmem_limit_bytes=_vmem_limit_bytes()),
    )(x2d, w, b)


# ------------------------------- full model ----------------------------------
def blstm_forward(x, params, *, time_chunk=None):
    """x: (T, B, ni) float32 -> log_softmax logits (T, B, num_class)."""
    T, B, NI = x.shape
    H = params["l1_whh"].shape[1]
    C = params["fc_w_t"].shape[1]
    assert H % 128 == 0, "hidden size must be a multiple of 128"

    # Pad batch to a full sublane group; padded rows are masked out of the BN
    # statistics and sliced away at the end (the recurrence and all matmuls
    # are batch-row independent, so they never leak into real rows).
    Bp = _round_up(B, 8)
    if Bp != B:
        x = jnp.pad(x, ((0, 0), (0, Bp - B), (0, 0)))
    n = T * B                                   # real rows for BN statistics

    # ---- BatchRNN #1 (no BatchNorm) -----------------------------------------
    xb = x.astype(jnp.bfloat16)
    wih1 = params["l1_wih"].astype(jnp.bfloat16)
    whh1 = params["l1_whh"].astype(jnp.bfloat16)
    bias1 = jnp.zeros((2, 1, 4 * H), jnp.float32)
    x1, sum1, sq1 = bilstm(xb, wih1, whh1, bias1, b_real=B,
                           time_chunk=time_chunk)

    # ---- BatchRNN #2: BatchNorm1d(2H) folded into its input projection ------
    mean1 = sum1[0] / n
    var1 = sq1[0] / n - mean1 * mean1           # biased variance (train BN)
    scale1 = params["l2_gamma"] * jax.lax.rsqrt(var1 + 1e-5)
    shift1 = params["l2_beta"] - mean1 * scale1
    wih2 = (params["l2_wih"] * scale1[None, :, None]).astype(jnp.bfloat16)
    bias2 = jnp.einsum("f,dfg->dg", shift1,
                       params["l2_wih"]).reshape(2, 1, 4 * H)
    whh2 = params["l2_whh"].astype(jnp.bfloat16)
    x2, sum2, sq2 = bilstm(x1, wih2, whh2, bias2, b_real=B,
                           time_chunk=time_chunk)

    # ---- fc: SequenceWise(BatchNorm1d(2H) -> Linear(2H, C, bias=False)) -----
    # BN folded into the Linear weight; class dim zero-padded to a lane-dense
    # multiple of 128 (padded logits get a -1e30 bias so they vanish from the
    # softmax); log_softmax in-kernel; slice back to (T, B, C) outside.
    mean2 = sum2[0] / n
    var2 = sq2[0] / n - mean2 * mean2
    scale2 = params["fc_gamma"] * jax.lax.rsqrt(var2 + 1e-5)
    shift2 = params["fc_beta"] - mean2 * scale2
    Cp = _round_up(C, 128)
    w_fc = params["fc_w_t"] * scale2[:, None]                     # (2H, C)
    b_fc = shift2 @ params["fc_w_t"]                              # (C,)
    w_fc = jnp.pad(w_fc, ((0, 0), (0, Cp - C))).astype(jnp.bfloat16)
    b_fc = jnp.pad(b_fc, (0, Cp - C),
                   constant_values=-1e30).reshape(1, Cp).astype(jnp.float32)

    out = fc_logsoftmax(x2.reshape(T * Bp, 2 * H), w_fc, b_fc)    # (T*Bp, Cp)
    return out.reshape(T, Bp, Cp)[:, :B, :C]


def init_params(key, ni, hidden, num_class):
    ks = jax.random.split(key, 5)
    H = hidden

    def u(k, shape, fan):
        bound = 1.0 / (fan ** 0.5)
        return jax.random.uniform(k, shape, jnp.float32, -bound, bound)

    return {
        # LSTM weights, pre-transposed and stacked per direction:
        # w_ih: (2, in, 4H), w_hh: (2, H, 4H); PyTorch gate order [i, f, g, o],
        # bias=False as in the reference module.
        "l1_wih": u(ks[0], (2, ni, 4 * H), H),
        "l1_whh": u(ks[1], (2, H, 4 * H), H),
        "l2_wih": u(ks[2], (2, 2 * H, 4 * H), H),
        "l2_whh": u(ks[3], (2, H, 4 * H), H),
        # BatchNorm1d(2H) default init (gamma=1, beta=0).
        "l2_gamma": jnp.ones((2 * H,), jnp.float32),
        "l2_beta": jnp.zeros((2 * H,), jnp.float32),
        "fc_gamma": jnp.ones((2 * H,), jnp.float32),
        "fc_beta": jnp.zeros((2 * H,), jnp.float32),
        # Linear(2H -> C, bias=False), pre-transposed.
        "fc_w_t": u(ks[4], (2 * H, num_class), 2 * H),
    }


if __name__ == "__main__":
    # Small shapes consistent with the module (ni defaults to 6).  H is a
    # multiple of 128 so gate slices / output stores are lane-aligned;
    # prefer multiples of 256 on v6e/v7x when H is a free hyperparameter.
    T, B, NI, H, C = 8, 2, 6, 128, 11
    key = jax.random.PRNGKey(0)
    kx, kp = jax.random.split(key)
    x = jax.random.normal(kx, (T, B, NI), jnp.float32)
    params = init_params(kp, NI, H, C)

    # time_chunk=4 exercises the multi-chunk (grid nT=2) accumulator path.
    fwd = jax.jit(functools.partial(blstm_forward, time_chunk=4))
    out = jax.block_until_ready(fwd(x, params))

    assert out.shape == (T, B, C), out.shape
    # log_softmax sanity: exp(out) rows sum to 1
    row_sums = jnp.exp(out).sum(axis=-1)
    assert bool(jnp.allclose(row_sums, 1.0, atol=1e-3)), row_sums
    assert bool(jnp.all(jnp.isfinite(out)))
    print("KERNEL_OK")
</pallas_src>

<mosaic_0001>
module attributes {stable_mosaic.version = 11 : i64} {
  func.func @_bilstm_kernel(%arg0: i32, %arg1: i32, %arg2: memref<32x6xbf16, #tpu.memory_space<vmem>>, %arg3: memref<1x6x512xbf16, #tpu.memory_space<vmem>>, %arg4: memref<1x128x512xbf16, #tpu.memory_space<vmem>>, %arg5: memref<1x1x512xf32, #tpu.memory_space<vmem>>, %arg6: memref<4x8x128xbf16, #tpu.memory_space<vmem>>, %arg7: memref<1x128xf32, #tpu.memory_space<vmem>>, %arg8: memref<1x128xf32, #tpu.memory_space<vmem>>, %arg9: memref<8x128xf32, #tpu.memory_space<vmem>>, %arg10: memref<8x128xf32, #tpu.memory_space<vmem>>, %arg11: memref<4x8x512xf32, #tpu.memory_space<vmem>>, %arg12: memref<4x8x128xf32, #tpu.memory_space<vmem>>) attributes {dimension_semantics = [#tpu.dimension_semantics<parallel>, #tpu.dimension_semantics<arbitrary>], iteration_bounds = array<i64: 2, 2>, scalar_prefetch = 0 : i64, scratch_operands = 4 : i64, tpu.core_type = #tpu.core_type<tc>, window_params = [{transform_indices = @transform_0, window_bounds = array<i64: 32, 6>}, {pipeline_mode = #tpu.pipeline_mode<synchronous>, transform_indices = @transform_1, window_bounds = array<i64: 1, 6, 512>}, {pipeline_mode = #tpu.pipeline_mode<synchronous>, transform_indices = @transform_2, window_bounds = array<i64: 1, 128, 512>}, {pipeline_mode = #tpu.pipeline_mode<synchronous>, transform_indices = @transform_3, window_bounds = array<i64: 1, 1, 512>}, {transform_indices = @transform_4, window_bounds = array<i64: 4, 8, 128>}, {transform_indices = @transform_5, window_bounds = array<i64: 1, 128>}, {transform_indices = @transform_6, window_bounds = array<i64: 1, 128>}]} {
    %c0_i32 = arith.constant 0 : i32
    %0 = arith.cmpi eq, %arg1, %c0_i32 : i32
    %1 = arith.extui %0 : i1 to i32
    %c0_i32_0 = arith.constant 0 : i32
    %2 = arith.cmpi ne, %1, %c0_i32_0 : i32
    scf.if %2 {
      %cst_107 = arith.constant 0.000000e+00 : f32
      %215 = vector.broadcast %cst_107 : f32 to vector<8x128xf32>
      %c0_108 = arith.constant 0 : index
      %c0_109 = arith.constant 0 : index
      %216 = vector.load %arg9[%c0_108, %c0_109] : memref<8x128xf32, #tpu.memory_space<vmem>>, vector<8x128xf32>
      tpu.vector_store %arg9[%c0_108, %c0_109], %215 {strides = array<i32>} : memref<8x128xf32, #tpu.memory_space<vmem>>, vector<8x128xf32>,
      %cst_110 = arith.constant 0.000000e+00 : f32
      %217 = vector.broadcast %cst_110 : f32 to vector<8x128xf32>
      %c0_111 = arith.constant 0 : index
      %c0_112 = arith.constant 0 : index
      %218 = vector.load %arg10[%c0_111, %c0_112] : memref<8x128xf32, #tpu.memory_space<vmem>>, vector<8x128xf32>
      tpu.vector_store %arg10[%c0_111, %c0_112], %217 {strides = array<i32>} : memref<8x128xf32, #tpu.memory_space<vmem>>, vector<8x128xf32>,
      %cst_113 = arith.constant 0.000000e+00 : f32
      %219 = vector.broadcast %cst_113 : f32 to vector<1x128xf32>
      %c0_114 = arith.constant 0 : index
      %c0_115 = arith.constant 0 : index
      %220 = vector.load %arg7[%c0_114, %c0_115] : memref<1x128xf32, #tpu.memory_space<vmem>>, vector<1x128xf32>
      tpu.vector_store %arg7[%c0_114, %c0_115], %219 {strides = array<i32>} : memref<1x128xf32, #tpu.memory_space<vmem>>, vector<1x128xf32>,
      %cst_116 = arith.constant 0.000000e+00 : f32
      %221 = vector.broadcast %cst_116 : f32 to vector<1x128xf32>
      %c0_117 = arith.constant 0 : index
      %c0_118 = arith.constant 0 : index
      %222 = vector.load %arg8[%c0_117, %c0_118] : memref<1x128xf32, #tpu.memory_space<vmem>>, vector<1x128xf32>
      tpu.vector_store %arg8[%c0_117, %c0_118], %221 {strides = array<i32>} : memref<1x128xf32, #tpu.memory_space<vmem>>, vector<1x128xf32>,
    } else {
    }
    %c0 = arith.constant 0 : index
    %c0_1 = arith.constant 0 : index
    %3 = vector.load %arg2[%c0, %c0_1] : memref<32x6xbf16, #tpu.memory_space<vmem>>, vector<32x6xbf16>
    %c0_2 = arith.constant 0 : index
    %c0_3 = arith.constant 0 : index
    %c0_4 = arith.constant 0 : index
    %4 = vector.load %arg3[%c0_2, %c0_3, %c0_4] : memref<1x6x512xbf16, #tpu.memory_space<vmem>>, vector<1x6x512xbf16>
    %5 = vector.shape_cast %4 : vector<1x6x512xbf16> to vector<6x512xbf16>
    %cst = arith.constant dense<0.000000e+00> : vector<32x512xf32>
    %6 = tpu.matmul %3, %5, %cst {dimension_numbers = #tpu.dot_dimension_numbers<[1], [0], [0], [1], [0, 0, 1, 1], [], []>} : vector<32x6xbf16>, vector<6x512xbf16>, vector<32x512xf32> -> vector<32x512xf32>
    %c0_5 = arith.constant 0 : index
    %c0_6 = arith.constant 0 : index
    %c0_7 = arith.constant 0 : index
    %7 = vector.load %arg5[%c0_5, %c0_6, %c0_7] : memref<1x1x512xf32, #tpu.memory_space<vmem>>, vector<1x1x512xf32>
    %8 = vector.shape_cast %7 : vector<1x1x512xf32> to vector<1x512xf32>
    %9 = vector.broadcast %8 : vector<1x512xf32> to vector<32x512xf32>
    %10 = arith.addf %6, %9 : vector<32x512xf32>
    %11 = vector.shape_cast %10 : vector<32x512xf32> to vector<4x8x512xf32>
    %c0_8 = arith.constant 0 : index
    %c0_9 = arith.constant 0 : index
    %c0_10 = arith.constant 0 : index
    %12 = vector.load %arg11[%c0_8, %c0_9, %c0_10] : memref<4x8x512xf32, #tpu.memory_space<vmem>>, vector<4x8x512xf32>
    tpu.vector_store %arg11[%c0_8, %c0_9, %c0_10], %11 {strides = array<i32>} : memref<4x8x512xf32, #tpu.memory_space<vmem>>, vector<4x8x512xf32>,
    %c3_i32 = arith.constant 3 : i32
    %13 = arith.muli %arg0, %c3_i32 : i32
    %c2_i32 = arith.constant 2 : i32
    %14 = arith.muli %c2_i32, %arg0 : i32
    %c1_i32 = arith.constant 1 : i32
    %15 = arith.subi %c1_i32, %14 : i32
    %c0_11 = arith.constant 0 : index
    %c0_12 = arith.constant 0 : index
    %16 = vector.load %arg9[%c0_11, %c0_12] : memref<8x128xf32, #tpu.memory_space<vmem>>, vector<8x128xf32>
    %c0_13 = arith.constant 0 : index
    %c0_14 = arith.constant 0 : index
    %17 = vector.load %arg10[%c0_13, %c0_14] : memref<8x128xf32, #tpu.memory_space<vmem>>, vector<8x128xf32>
    %c0_i32_15 = arith.constant 0 : i32
    %18 = arith.muli %15, %c0_i32_15 : i32
    %19 = arith.addi %13, %18 : i32
    %20 = arith.index_cast %19 : i32 to index
    %c0_16 = arith.constant 0 : index
    %c0_17 = arith.constant 0 : index
    %21 = vector.load %arg11[%20, %c0_16, %c0_17] : memref<4x8x512xf32, #tpu.memory_space<vmem>>, vector<1x8x512xf32>
    %22 = vector.shape_cast %21 : vector<1x8x512xf32> to vector<8x512xf32>
    %23 = arith.truncf %16 : vector<8x128xf32> to vector<8x128xbf16>
    %c0_18 = arith.constant 0 : index
    %c0_19 = arith.constant 0 : index
    %c0_20 = arith.constant 0 : index
    %24 = vector.load %arg4[%c0_18, %c0_19, %c0_20] : memref<1x128x512xbf16, #tpu.memory_space<vmem>>, vector<1x128x512xbf16>
    %25 = vector.shape_cast %24 : vector<1x128x512xbf16> to vector<128x512xbf16>
    %cst_21 = arith.constant dense<0.000000e+00> : vector<8x512xf32>
    %26 = tpu.matmul %23, %25, %cst_21 {dimension_numbers = #tpu.dot_dimension_numbers<[1], [0], [0], [1], [0, 0, 1, 1], [], []>} : vector<8x128xbf16>, vector<128x512xbf16>, vector<8x512xf32> -> vector<8x512xf32>
    %27 = arith.addf %22, %26 : vector<8x512xf32>
    %28 = vector.extract_strided_slice %27 {offsets = [0, 0], sizes = [8, 128], strides = [1, 1]} : vector<8x512xf32> to vector<8x128xf32>
    %cst_22 = arith.constant 5.000000e-01 : f32
    %29 = vector.broadcast %cst_22 : f32 to vector<8x128xf32>
    %30 = arith.mulf %29, %28 : vector<8x128xf32>
    %31 = math.tanh %30 : vector<8x128xf32>
    %cst_23 = arith.constant 5.000000e-01 : f32
    %32 = vector.broadcast %cst_23 : f32 to vector<8x128xf32>
    %33 = arith.mulf %32, %31 : vector<8x128xf32>
    %cst_24 = arith.constant 5.000000e-01 : f32
    %34 = vector.broadcast %cst_24 : f32 to vector<8x128xf32>
    %35 = arith.addf %33, %34 : vector<8x128xf32>
    %36 = vector.extract_strided_slice %27 {offsets = [0, 128], sizes = [8, 128], strides = [1, 1]} : vector<8x512xf32> to vector<8x128xf32>
    %cst_25 = arith.constant 5.000000e-01 : f32
    %37 = vector.broadcast %cst_25 : f32 to vector<8x128xf32>
    %38 = arith.mulf %37, %36 : vector<8x128xf32>
    %39 = math.tanh %38 : vector<8x128xf32>
    %cst_26 = arith.constant 5.000000e-01 : f32
    %40 = vector.broadcast %cst_26 : f32 to vector<8x128xf32>
    %41 = arith.mulf %40, %39 : vector<8x128xf32>
    %cst_27 = arith.constant 5.000000e-01 : f32
    %42 = vector.broadcast %cst_27 : f32 to vector<8x128xf32>
    %43 = arith.addf %41, %42 : vector<8x128xf32>
    %44 = vector.extract_strided_slice %27 {offsets = [0, 256], sizes = [8, 128], strides = [1, 1]} : vector<8x512xf32> to vector<8x128xf32>
    %45 = math.tanh %44 : vector<8x128xf32>
    %46 = vector.extract_strided_slice %27 {offsets = [0, 384], sizes = [8, 128], strides = [1, 1]} : vector<8x512xf32> to vector<8x128xf32>
    %cst_28 = arith.constant 5.000000e-01 : f32
    %47 = vector.broadcast %cst_28 : f32 to vector<8x128xf32>
    %48 = arith.mulf %47, %46 : vector<8x128xf32>
    %49 = math.tanh %48 : vector<8x128xf32>
    %cst_29 = arith.constant 5.000000e-01 : f32
    %50 = vector.broadcast %cst_29 : f32 to vector<8x128xf32>
    %51 = arith.mulf %50, %49 : vector<8x128xf32>
    %cst_30 = arith.constant 5.000000e-01 : f32
    %52 = vector.broadcast %cst_30 : f32 to vector<8x128xf32>
    %53 = arith.addf %51, %52 : vector<8x128xf32>
    %54 = arith.mulf %43, %17 : vector<8x128xf32>
    %55 = arith.mulf %35, %45 : vector<8x128xf32>
    %56 = arith.addf %54, %55 : vector<8x128xf32>
    %57 = math.tanh %56 : vector<8x128xf32>
    %58 = arith.mulf %53, %57 : vector<8x128xf32>
    %59 = arith.index_cast %19 : i32 to index
    %c0_31 = arith.constant 0 : index
    %c0_32 = arith.constant 0 : index
    %60 = vector.load %arg12[%59, %c0_31, %c0_32] : memref<4x8x128xf32, #tpu.memory_space<vmem>>, vector<1x8x128xf32>
    %61 = vector.shape_cast %60 : vector<1x8x128xf32> to vector<8x128xf32>
    %62 = vector.shape_cast %58 : vector<8x128xf32> to vector<1x8x128xf32>
    tpu.vector_store %arg12[%59, %c0_31, %c0_32], %62 {strides = array<i32>} : memref<4x8x128xf32, #tpu.memory_space<vmem>>, vector<1x8x128xf32>,
    %c1_i32_33 = arith.constant 1 : i32
    %63 = arith.muli %15, %c1_i32_33 : i32
    %64 = arith.addi %13, %63 : i32
    %65 = arith.index_cast %64 : i32 to index
    %c0_34 = arith.constant 0 : index
    %c0_35 = arith.constant 0 : index
    %66 = vector.load %arg11[%65, %c0_34, %c0_35] : memref<4x8x512xf32, #tpu.memory_space<vmem>>, vector<1x8x512xf32>
    %67 = vector.shape_cast %66 : vector<1x8x512xf32> to vector<8x512xf32>
    %68 = arith.truncf %58 : vector<8x128xf32> to vector<8x128xbf16>
    %c0_36 = arith.constant 0 : index
    %c0_37 = arith.constant 0 : index
    %c0_38 = arith.constant 0 : index
    %69 = vector.load %arg4[%c0_36, %c0_37, %c0_38] : memref<1x128x512xbf16, #tpu.memory_space<vmem>>, vector<1x128x512xbf16>
    %70 = vector.shape_cast %69 : vector<1x128x512xbf16> to vector<128x512xbf16>
    %cst_39 = arith.constant dense<0.000000e+00> : vector<8x512xf32>
    %71 = tpu.matmul %68, %70, %cst_39 {dimension_numbers = #tpu.dot_dimension_numbers<[1], [0], [0], [1], [0, 0, 1, 1], [], []>} : vector<8x128xbf16>, vector<128x512xbf16>, vector<8x512xf32> -> vector<8x512xf32>
    %72 = arith.addf %67, %71 : vector<8x512xf32>
    %73 = vector.extract_strided_slice %72 {offsets = [0, 0], sizes = [8, 128], strides = [1, 1]} : vector<8x512xf32> to vector<8x128xf32>
    %cst_40 = arith.constant 5.000000e-01 : f32
    %74 = vector.broadcast %cst_40 : f32 to vector<8x128xf32>
    %75 = arith.mulf %74, %73 : vector<8x128xf32>
    %76 = math.tanh %75 : vector<8x128xf32>
    %cst_41 = arith.constant 5.000000e-01 : f32
    %77 = vector.broadcast %cst_41 : f32 to vector<8x128xf32>
    %78 = arith.mulf %77, %76 : vector<8x128xf32>
    %cst_42 = arith.constant 5.000000e-01 : f32
    %79 = vector.broadcast %cst_42 : f32 to vector<8x128xf32>
    %80 = arith.addf %78, %79 : vector<8x128xf32>
    %81 = vector.extract_strided_slice %72 {offsets = [0, 128], sizes = [8, 128], strides = [1, 1]} : vector<8x512xf32> to vector<8x128xf32>
    %cst_43 = arith.constant 5.000000e-01 : f32
    %82 = vector.broadcast %cst_43 : f32 to vector<8x128xf32>
    %83 = arith.mulf %82, %81 : vector<8x128xf32>
    %84 = math.tanh %83 : vector<8x128xf32>
    %cst_44 = arith.constant 5.000000e-01 : f32
    %85 = vector.broadcast %cst_44 : f32 to vector<8x128xf32>
    %86 = arith.mulf %85, %84 : vector<8x128xf32>
    %cst_45 = arith.constant 5.000000e-01 : f32
    %87 = vector.broadcast %cst_45 : f32 to vector<8x128xf32>
    %88 = arith.addf %86, %87 : vector<8x128xf32>
    %89 = vector.extract_strided_slice %72 {offsets = [0, 256], sizes = [8, 128], strides = [1, 1]} : vector<8x512xf32> to vector<8x128xf32>
    %90 = math.tanh %89 : vector<8x128xf32>
    %91 = vector.extract_strided_slice %72 {offsets = [0, 384], sizes = [8, 128], strides = [1, 1]} : vector<8x512xf32> to vector<8x128xf32>
    %cst_46 = arith.constant 5.000000e-01 : f32
    %92 = vector.broadcast %cst_46 : f32 to vector<8x128xf32>
    %93 = arith.mulf %92, %91 : vector<8x128xf32>
    %94 = math.tanh %93 : vector<8x128xf32>
    %cst_47 = arith.constant 5.000000e-01 : f32
    %95 = vector.broadcast %cst_47 : f32 to vector<8x128xf32>
    %96 = arith.mulf %95, %94 : vector<8x128xf32>
    %cst_48 = arith.constant 5.000000e-01 : f32
    %97 = vector.broadcast %cst_48 : f32 to vector<8x128xf32>
    %98 = arith.addf %96, %97 : vector<8x128xf32>
    %99 = arith.mulf %88, %56 : vector<8x128xf32>
    %100 = arith.mulf %80, %90 : vector<8x128xf32>
    %101 = arith.addf %99, %100 : vector<8x128xf32>
    %102 = math.tanh %101 : vector<8x128xf32>
    %103 = arith.mulf %98, %102 : vector<8x128xf32>
    %104 = arith.index_cast %64 : i32 to index
    %c0_49 = arith.constant 0 : index
    %c0_50 = arith.constant 0 : index
    %105 = vector.load %arg12[%104, %c0_49, %c0_50] : memref<4x8x128xf32, #tpu.memory_space<vmem>>, vector<1x8x128xf32>
    %106 = vector.shape_cast %105 : vector<1x8x128xf32> to vector<8x128xf32>
    %107 = vector.shape_cast %103 : vector<8x128xf32> to vector<1x8x128xf32>
    tpu.vector_store %arg12[%104, %c0_49, %c0_50], %107 {strides = array<i32>} : memref<4x8x128xf32, #tpu.memory_space<vmem>>, vector<1x8x128xf32>,
    %c2_i32_51 = arith.constant 2 : i32
    %108 = arith.muli %15, %c2_i32_51 : i32
    %109 = arith.addi %13, %108 : i32
    %110 = arith.index_cast %109 : i32 to index
    %c0_52 = arith.constant 0 : index
    %c0_53 = arith.constant 0 : index
    %111 = vector.load %arg11[%110, %c0_52, %c0_53] : memref<4x8x512xf32, #tpu.memory_space<vmem>>, vector<1x8x512xf32>
    %112 = vector.shape_cast %111 : vector<1x8x512xf32> to vector<8x512xf32>
    %113 = arith.truncf %103 : vector<8x128xf32> to vector<8x128xbf16>
    %c0_54 = arith.constant 0 : index
    %c0_55 = arith.constant 0 : index
    %c0_56 = arith.constant 0 : index
    %114 = vector.load %arg4[%c0_54, %c0_55, %c0_56] : memref<1x128x512xbf16, #tpu.memory_space<vmem>>, vector<1x128x512xbf16>
    %115 = vector.shape_cast %114 : vector<1x128x512xbf16> to vector<128x512xbf16>
    %cst_57 = arith.constant dense<0.000000e+00> : vector<8x512xf32>
    %116 = tpu.matmul %113, %115, %cst_57 {dimension_numbers = #tpu.dot_dimension_numbers<[1], [0], [0], [1], [0, 0, 1, 1], [], []>} : vector<8x128xbf16>, vector<128x512xbf16>, vector<8x512xf32> -> vector<8x512xf32>
    %117 = arith.addf %112, %116 : vector<8x512xf32>
    %118 = vector.extract_strided_slice %117 {offsets = [0, 0], sizes = [8, 128], strides = [1, 1]} : vector<8x512xf32> to vector<8x128xf32>
    %cst_58 = arith.constant 5.000000e-01 : f32
    %119 = vector.broadcast %cst_58 : f32 to vector<8x128xf32>
    %120 = arith.mulf %119, %118 : vector<8x128xf32>
    %121 = math.tanh %120 : vector<8x128xf32>
    %cst_59 = arith.constant 5.000000e-01 : f32
    %122 = vector.broadcast %cst_59 : f32 to vector<8x128xf32>
    %123 = arith.mulf %122, %121 : vector<8x128xf32>
    %cst_60 = arith.constant 5.000000e-01 : f32
    %124 = vector.broadcast %cst_60 : f32 to vector<8x128xf32>
    %125 = arith.addf %123, %124 : vector<8x128xf32>
    %126 = vector.extract_strided_slice %117 {offsets = [0, 128], sizes = [8, 128], strides = [1, 1]} : vector<8x512xf32> to vector<8x128xf32>
    %cst_61 = arith.constant 5.000000e-01 : f32
    %127 = vector.broadcast %cst_61 : f32 to vector<8x128xf32>
    %128 = arith.mulf %127, %126 : vector<8x128xf32>
    %129 = math.tanh %128 : vector<8x128xf32>
    %cst_62 = arith.constant 5.000000e-01 : f32
    %130 = vector.broadcast %cst_62 : f32 to vector<8x128xf32>
    %131 = arith.mulf %130, %129 : vector<8x128xf32>
    %cst_63 = arith.constant 5.000000e-01 : f32
    %132 = vector.broadcast %cst_63 : f32 to vector<8x128xf32>
    %133 = arith.addf %131, %132 : vector<8x128xf32>
    %134 = vector.extract_strided_slice %117 {offsets = [0, 256], sizes = [8, 128], strides = [1, 1]} : vector<8x512xf32> to vector<8x128xf32>
    %135 = math.tanh %134 : vector<8x128xf32>
    %136 = vector.extract_strided_slice %117 {offsets = [0, 384], sizes = [8, 128], strides = [1, 1]} : vector<8x512xf32> to vector<8x128xf32>
    %cst_64 = arith.constant 5.000000e-01 : f32
    %137 = vector.broadcast %cst_64 : f32 to vector<8x128xf32>
    %138 = arith.mulf %137, %136 : vector<8x128xf32>
    %139 = math.tanh %138 : vector<8x128xf32>
    %cst_65 = arith.constant 5.000000e-01 : f32
    %140 = vector.broadcast %cst_65 : f32 to vector<8x128xf32>
    %141 = arith.mulf %140, %139 : vector<8x128xf32>
    %cst_66 = arith.constant 5.000000e-01 : f32
    %142 = vector.broadcast %cst_66 : f32 to vector<8x128xf32>
    %143 = arith.addf %141, %142 : vector<8x128xf32>
    %144 = arith.mulf %133, %101 : vector<8x128xf32>
    %145 = arith.mulf %125, %135 : vector<8x128xf32>
    %146 = arith.addf %144, %145 : vector<8x128xf32>
    %147 = math.tanh %146 : vector<8x128xf32>
    %148 = arith.mulf %143, %147 : vector<8x128xf32>
    %149 = arith.index_cast %109 : i32 to index
    %c0_67 = arith.constant 0 : index
    %c0_68 = arith.constant 0 : index
    %150 = vector.load %arg12[%149, %c0_67, %c0_68] : memref<4x8x128xf32, #tpu.memory_space<vmem>>, vector<1x8x128xf32>
    %151 = vector.shape_cast %150 : vector<1x8x128xf32> to vector<8x128xf32>
    %152 = vector.shape_cast %148 : vector<8x128xf32> to vector<1x8x128xf32>
    tpu.vector_store %arg12[%149, %c0_67, %c0_68], %152 {strides = array<i32>} : memref<4x8x128xf32, #tpu.memory_space<vmem>>, vector<1x8x128xf32>,
    %c3_i32_69 = arith.constant 3 : i32
    %153 = arith.muli %15, %c3_i32_69 : i32
    %154 = arith.addi %13, %153 : i32
    %155 = arith.index_cast %154 : i32 to index
    %c0_70 = arith.constant 0 : index
    %c0_71 = arith.constant 0 : index
    %156 = vector.load %arg11[%155, %c0_70, %c0_71] : memref<4x8x512xf32, #tpu.memory_space<vmem>>, vector<1x8x512xf32>
    %157 = vector.shape_cast %156 : vector<1x8x512xf32> to vector<8x512xf32>
    %158 = arith.truncf %148 : vector<8x128xf32> to vector<8x128xbf16>
    %c0_72 = arith.constant 0 : index
    %c0_73 = arith.constant 0 : index
    %c0_74 = arith.constant 0 : index
    %159 = vector.load %arg4[%c0_72, %c0_73, %c0_74] : memref<1x128x512xbf16, #tpu.memory_space<vmem>>, vector<1x128x512xbf16>
    %160 = vector.shape_cast %159 : vector<1x128x512xbf16> to vector<128x512xbf16>
    %cst_75 = arith.constant dense<0.000000e+00> : vector<8x512xf32>
    %161 = tpu.matmul %158, %160, %cst_75 {dimension_numbers = #tpu.dot_dimension_numbers<[1], [0], [0], [1], [0, 0, 1, 1], [], []>} : vector<8x128xbf16>, vector<128x512xbf16>, vector<8x512xf32> -> vector<8x512xf32>
    %162 = arith.addf %157, %161 : vector<8x512xf32>
    %163 = vector.extract_strided_slice %162 {offsets = [0, 0], sizes = [8, 128], strides = [1, 1]} : vector<8x512xf32> to vector<8x128xf32>
    %cst_76 = arith.constant 5.000000e-01 : f32
    %164 = vector.broadcast %cst_76 : f32 to vector<8x128xf32>
    %165 = arith.mulf %164, %163 : vector<8x128xf32>
    %166 = math.tanh %165 : vector<8x128xf32>
    %cst_77 = arith.constant 5.000000e-01 : f32
    %167 = vector.broadcast %cst_77 : f32 to vector<8x128xf32>
    %168 = arith.mulf %167, %166 : vector<8x128xf32>
    %cst_78 = arith.constant 5.000000e-01 : f32
    %169 = vector.broadcast %cst_78 : f32 to vector<8x128xf32>
    %170 = arith.addf %168, %169 : vector<8x128xf32>
    %171 = vector.extract_strided_slice %162 {offsets = [0, 128], sizes = [8, 128], strides = [1, 1]} : vector<8x512xf32> to vector<8x128xf32>
    %cst_79 = arith.constant 5.000000e-01 : f32
    %172 = vector.broadcast %cst_79 : f32 to vector<8x128xf32>
    %173 = arith.mulf %172, %171 : vector<8x128xf32>
    %174 = math.tanh %173 : vector<8x128xf32>
    %cst_80 = arith.constant 5.000000e-01 : f32
    %175 = vector.broadcast %cst_80 : f32 to vector<8x128xf32>
    %176 = arith.mulf %175, %174 : vector<8x128xf32>
    %cst_81 = arith.constant 5.000000e-01 : f32
    %177 = vector.broadcast %cst_81 : f32 to vector<8x128xf32>
    %178 = arith.addf %176, %177 : vector<8x128xf32>
    %179 = vector.extract_strided_slice %162 {offsets = [0, 256], sizes = [8, 128], strides = [1, 1]} : vector<8x512xf32> to vector<8x128xf32>
    %180 = math.tanh %179 : vector<8x128xf32>
    %181 = vector.extract_strided_slice %162 {offsets = [0, 384], sizes = [8, 128], strides = [1, 1]} : vector<8x512xf32> to vector<8x128xf32>
    %cst_82 = arith.constant 5.000000e-01 : f32
    %182 = vector.broadcast %cst_82 : f32 to vector<8x128xf32>
    %183 = arith.mulf %182, %181 : vector<8x128xf32>
    %184 = math.tanh %183 : vector<8x128xf32>
    %cst_83 = arith.constant 5.000000e-01 : f32
    %185 = vector.broadcast %cst_83 : f32 to vector<8x128xf32>
    %186 = arith.mulf %185, %184 : vector<8x128xf32>
    %cst_84 = arith.constant 5.000000e-01 : f32
    %187 = vector.broadcast %cst_84 : f32 to vector<8x128xf32>
    %188 = arith.addf %186, %187 : vector<8x128xf32>
    %189 = arith.mulf %178, %146 : vector<8x128xf32>
    %190 = arith.mulf %170, %180 : vector<8x128xf32>
    %191 = arith.addf %189, %190 : vector<8x128xf32>
    %192 = math.tanh %191 : vector<8x128xf32>
    %193 = arith.mulf %188, %192 : vector<8x128xf32>
    %194 = arith.index_cast %154 : i32 to index
    %c0_85 = arith.constant 0 : index
    %c0_86 = arith.constant 0 : index
    %195 = vector.load %arg12[%194, %c0_85, %c0_86] : memref<4x8x128xf32, #tpu.memory_space<vmem>>, vector<1x8x128xf32>
    %196 = vector.shape_cast %195 : vector<1x8x128xf32> to vector<8x128xf32>
    %197 = vector.shape_cast %193 : vector<8x128xf32> to vector<1x8x128xf32>
    tpu.vector_store %arg12[%194, %c0_85, %c0_86], %197 {strides = array<i32>} : memref<4x8x128xf32, #tpu.memory_space<vmem>>, vector<1x8x128xf32>,
    %c4_i32 = arith.constant 4 : i32
    %c0_87 = arith.constant 0 : index
    %c0_88 = arith.constant 0 : index
    %198 = vector.load %arg9[%c0_87, %c0_88] : memref<8x128xf32, #tpu.memory_space<vmem>>, vector<8x128xf32>
    tpu.vector_store %arg9[%c0_87, %c0_88], %193 {strides = array<i32>} : memref<8x128xf32, #tpu.memory_space<vmem>>, vector<8x128xf32>,
    %c0_89 = arith.constant 0 : index
    %c0_90 = arith.constant 0 : index
    %199 = vector.load %arg10[%c0_89, %c0_90] : memref<8x128xf32, #tpu.memory_space<vmem>>, vector<8x128xf32>
    tpu.vector_store %arg10[%c0_89, %c0_90], %191 {strides = array<i32>} : memref<8x128xf32, #tpu.memory_space<vmem>>, vector<8x128xf32>,
    %c0_91 = arith.constant 0 : index
    %c0_92 = arith.constant 0 : index
    %c0_93 = arith.constant 0 : index
    %200 = vector.load %arg12[%c0_91, %c0_92, %c0_93] : memref<4x8x128xf32, #tpu.memory_space<vmem>>, vector<4x8x128xf32>
    %201 = arith.truncf %200 : vector<4x8x128xf32> to vector<4x8x128xbf16>
    %c0_94 = arith.constant 0 : index
    %c0_95 = arith.constant 0 : index
    %c0_96 = arith.constant 0 : index
    %202 = vector.load %arg6[%c0_94, %c0_95, %c0_96] : memref<4x8x128xbf16, #tpu.memory_space<vmem>>, vector<4x8x128xbf16>
    tpu.vector_store %arg6[%c0_94, %c0_95, %c0_96], %201 {strides = array<i32>} : memref<4x8x128xbf16, #tpu.memory_space<vmem>>, vector<4x8x128xbf16>,
    %203 = vector.extract_strided_slice %200 {offsets = [0, 0, 0], sizes = [4, 2, 128], strides = [1, 1, 1]} : vector<4x8x128xf32> to vector<4x2x128xf32>
    %c0_97 = arith.constant 0 : index
    %c0_98 = arith.constant 0 : index
    %204 = vector.load %arg7[%c0_97, %c0_98] : memref<1x128xf32, #tpu.memory_space<vmem>>, vector<1x128xf32>
    %cst_99 = arith.constant dense<0.000000e+00> : vector<128xf32>
    %205 = vector.multi_reduction <add>, %203, %cst_99 [0, 1] : vector<4x2x128xf32> to vector<128xf32>
    %206 = vector.shape_cast %205 : vector<128xf32> to vector<1x128xf32>
    %207 = arith.addf %204, %206 : vector<1x128xf32>
    %c0_100 = arith.constant 0 : index
    %c0_101 = arith.constant 0 : index
    %208 = vector.load %arg7[%c0_100, %c0_101] : memref<1x128xf32, #tpu.memory_space<vmem>>, vector<1x128xf32>
    tpu.vector_store %arg7[%c0_100, %c0_101], %207 {strides = array<i32>} : memref<1x128xf32, #tpu.memory_space<vmem>>, vector<1x128xf32>,
    %c0_102 = arith.constant 0 : index
    %c0_103 = arith.constant 0 : index
    %209 = vector.load %arg8[%c0_102, %c0_103] : memref<1x128xf32, #tpu.memory_space<vmem>>, vector<1x128xf32>
    %210 = arith.mulf %203, %203 : vector<4x2x128xf32>
    %cst_104 = arith.constant dense<0.000000e+00> : vector<128xf32>
    %211 = vector.multi_reduction <add>, %210, %cst_104 [0, 1] : vector<4x2x128xf32> to vector<128xf32>
    %212 = vector.shape_cast %211 : vector<128xf32> to vector<1x128xf32>
    %213 = arith.addf %209, %212 : vector<1x128xf32>
    %c0_105 = arith.constant 0 : index
    %c0_106 = arith.constant 0 : index
    %214 = vector.load %arg8[%c0_105, %c0_106] : memref<1x128xf32, #tpu.memory_space<vmem>>, vector<1x128xf32>
    tpu.vector_store %arg8[%c0_105, %c0_106], %213 {strides = array<i32>} : memref<1x128xf32, #tpu.memory_space<vmem>>, vector<1x128xf32>,
    return
  }
  func.func @transform_0(%arg0: i32, %arg1: i32) -> (i32, i32) {
    %c2_i32 = arith.constant 2 : i32
    %0 = arith.muli %c2_i32, %arg1 : i32
    %c1_i32 = arith.constant 1 : i32
    %1 = arith.subi %c1_i32, %0 : i32
    %2 = arith.muli %arg0, %1 : i32
    %3 = arith.addi %arg1, %2 : i32
    %c0_i32 = arith.constant 0 : i32
    %c0_i32_0 = arith.constant 0 : i32
    return %3, %c0_i32 : i32, i32
  }
  func.func @transform_1(%arg0: i32, %arg1: i32) -> (i32, i32, i32) {
    %c0_i32 = arith.constant 0 : i32
    %c0_i32_0 = arith.constant 0 : i32
    %c0_i32_1 = arith.constant 0 : i32
    return %arg0, %c0_i32, %c0_i32_0 : i32, i32, i32
  }
  func.func @transform_2(%arg0: i32, %arg1: i32) -> (i32, i32, i32) {
    %c0_i32 = arith.constant 0 : i32
    %c0_i32_0 = arith.constant 0 : i32
    %c0_i32_1 = arith.constant 0 : i32
    return %arg0, %c0_i32, %c0_i32_0 : i32, i32, i32
  }
  func.func @transform_3(%arg0: i32, %arg1: i32) -> (i32, i32, i32) {
    %c0_i32 = arith.constant 0 : i32
    %c0_i32_0 = arith.constant 0 : i32
    %c0_i32_1 = arith.constant 0 : i32
    return %arg0, %c0_i32, %c0_i32_0 : i32, i32, i32
  }
  func.func @transform_4(%arg0: i32, %arg1: i32) -> (i32, i32, i32) {
    %c2_i32 = arith.constant 2 : i32
    %0 = arith.muli %c2_i32, %arg1 : i32
    %c1_i32 = arith.constant 1 : i32
    %1 = arith.subi %c1_i32, %0 : i32
    %2 = arith.muli %arg0, %1 : i32
    %3 = arith.addi %arg1, %2 : i32
    %c0_i32 = arith.constant 0 : i32
    %c0_i32_0 = arith.constant 0 : i32
    return %3, %c0_i32, %arg0 : i32, i32, i32
  }
  func.func @transform_5(%arg0: i32, %arg1: i32) -> (i32, i32) {
    %c0_i32 = arith.constant 0 : i32
    %c0_i32_0 = arith.constant 0 : i32
    return %c0_i32, %arg0 : i32, i32
  }
  func.func @transform_6(%arg0: i32, %arg1: i32) -> (i32, i32) {
    %c0_i32 = arith.constant 0 : i32
    %c0_i32_0 = arith.constant 0 : i32
    return %c0_i32, %arg0 : i32, i32
  }
}

module attributes {stable_mosaic.version = 11 : i64} {
  func.func @_bilstm_kernel(%arg0: i32, %arg1: i32, %arg2: memref<32x256xbf16, #tpu.memory_space<vmem>>, %arg3: memref<1x256x512xbf16, #tpu.memory_space<vmem>>, %arg4: memref<1x128x512xbf16, #tpu.memory_space<vmem>>, %arg5: memref<1x1x512xf32, #tpu.memory_space<vmem>>, %arg6: memref<4x8x128xbf16, #tpu.memory_space<vmem>>, %arg7: memref<1x128xf32, #tpu.memory_space<vmem>>, %arg8: memref<1x128xf32, #tpu.memory_space<vmem>>, %arg9: memref<8x128xf32, #tpu.memory_space<vmem>>, %arg10: memref<8x128xf32, #tpu.memory_space<vmem>>, %arg11: memref<4x8x512xf32, #tpu.memory_space<vmem>>, %arg12: memref<4x8x128xf32, #tpu.memory_space<vmem>>) attributes {dimension_semantics = [#tpu.dimension_semantics<parallel>, #tpu.dimension_semantics<arbitrary>], iteration_bounds = array<i64: 2, 2>, scalar_prefetch = 0 : i64, scratch_operands = 4 : i64, tpu.core_type = #tpu.core_type<tc>, window_params = [{transform_indices = @transform_0, window_bounds = array<i64: 32, 256>}, {pipeline_mode = #tpu.pipeline_mode<synchronous>, transform_indices = @transform_1, window_bounds = array<i64: 1, 256, 512>}, {pipeline_mode = #tpu.pipeline_mode<synchronous>, transform_indices = @transform_2, window_bounds = array<i64: 1, 128, 512>}, {pipeline_mode = #tpu.pipeline_mode<synchronous>, transform_indices = @transform_3, window_bounds = array<i64: 1, 1, 512>}, {transform_indices = @transform_4, window_bounds = array<i64: 4, 8, 128>}, {transform_indices = @transform_5, window_bounds = array<i64: 1, 128>}, {transform_indices = @transform_6, window_bounds = array<i64: 1, 128>}]} {
    %c0_i32 = arith.constant 0 : i32
    %0 = arith.cmpi eq, %arg1, %c0_i32 : i32
    %1 = arith.extui %0 : i1 to i32
    %c0_i32_0 = arith.constant 0 : i32
    %2 = arith.cmpi ne, %1, %c0_i32_0 : i32
    scf.if %2 {
      %cst_107 = arith.constant 0.000000e+00 : f32
      %215 = vector.broadcast %cst_107 : f32 to vector<8x128xf32>
      %c0_108 = arith.constant 0 : index
      %c0_109 = arith.constant 0 : index
      %216 = vector.load %arg9[%c0_108, %c0_109] : memref<8x128xf32, #tpu.memory_space<vmem>>, vector<8x128xf32>
      tpu.vector_store %arg9[%c0_108, %c0_109], %215 {strides = array<i32>} : memref<8x128xf32, #tpu.memory_space<vmem>>, vector<8x128xf32>,
      %cst_110 = arith.constant 0.000000e+00 : f32
      %217 = vector.broadcast %cst_110 : f32 to vector<8x128xf32>
      %c0_111 = arith.constant 0 : index
      %c0_112 = arith.constant 0 : index
      %218 = vector.load %arg10[%c0_111, %c0_112] : memref<8x128xf32, #tpu.memory_space<vmem>>, vector<8x128xf32>
      tpu.vector_store %arg10[%c0_111, %c0_112], %217 {strides = array<i32>} : memref<8x128xf32, #tpu.memory_space<vmem>>, vector<8x128xf32>,
      %cst_113 = arith.constant 0.000000e+00 : f32
      %219 = vector.broadcast %cst_113 : f32 to vector<1x128xf32>
      %c0_114 = arith.constant 0 : index
      %c0_115 = arith.constant 0 : index
      %220 = vector.load %arg7[%c0_114, %c0_115] : memref<1x128xf32, #tpu.memory_space<vmem>>, vector<1x128xf32>
      tpu.vector_store %arg7[%c0_114, %c0_115], %219 {strides = array<i32>} : memref<1x128xf32, #tpu.memory_space<vmem>>, vector<1x128xf32>,
      %cst_116 = arith.constant 0.000000e+00 : f32
      %221 = vector.broadcast %cst_116 : f32 to vector<1x128xf32>
      %c0_117 = arith.constant 0 : index
      %c0_118 = arith.constant 0 : index
      %222 = vector.load %arg8[%c0_117, %c0_118] : memref<1x128xf32, #tpu.memory_space<vmem>>, vector<1x128xf32>
      tpu.vector_store %arg8[%c0_117, %c0_118], %221 {strides = array<i32>} : memref<1x128xf32, #tpu.memory_space<vmem>>, vector<1x128xf32>,
    } else {
    }
    %c0 = arith.constant 0 : index
    %c0_1 = arith.constant 0 : index
    %3 = vector.load %arg2[%c0, %c0_1] : memref<32x256xbf16, #tpu.memory_space<vmem>>, vector<32x256xbf16>
    %c0_2 = arith.constant 0 : index
    %c0_3 = arith.constant 0 : index
    %c0_4 = arith.constant 0 : index
    %4 = vector.load %arg3[%c0_2, %c0_3, %c0_4] : memref<1x256x512xbf16, #tpu.memory_space<vmem>>, vector<1x256x512xbf16>
    %5 = vector.shape_cast %4 : vector<1x256x512xbf16> to vector<256x512xbf16>
    %cst = arith.constant dense<0.000000e+00> : vector<32x512xf32>
    %6 = tpu.matmul %3, %5, %cst {dimension_numbers = #tpu.dot_dimension_numbers<[1], [0], [0], [1], [0, 0, 1, 1], [], []>} : vector<32x256xbf16>, vector<256x512xbf16>, vector<32x512xf32> -> vector<32x512xf32>
    %c0_5 = arith.constant 0 : index
    %c0_6 = arith.constant 0 : index
    %c0_7 = arith.constant 0 : index
    %7 = vector.load %arg5[%c0_5, %c0_6, %c0_7] : memref<1x1x512xf32, #tpu.memory_space<vmem>>, vector<1x1x512xf32>
    %8 = vector.shape_cast %7 : vector<1x1x512xf32> to vector<1x512xf32>
    %9 = vector.broadcast %8 : vector<1x512xf32> to vector<32x512xf32>
    %10 = arith.addf %6, %9 : vector<32x512xf32>
    %11 = vector.shape_cast %10 : vector<32x512xf32> to vector<4x8x512xf32>
    %c0_8 = arith.constant 0 : index
    %c0_9 = arith.constant 0 : index
    %c0_10 = arith.constant 0 : index
    %12 = vector.load %arg11[%c0_8, %c0_9, %c0_10] : memref<4x8x512xf32, #tpu.memory_space<vmem>>, vector<4x8x512xf32>
    tpu.vector_store %arg11[%c0_8, %c0_9, %c0_10], %11 {strides = array<i32>} : memref<4x8x512xf32, #tpu.memory_space<vmem>>, vector<4x8x512xf32>,
    %c3_i32 = arith.constant 3 : i32
    %13 = arith.muli %arg0, %c3_i32 : i32
    %c2_i32 = arith.constant 2 : i32
    %14 = arith.muli %c2_i32, %arg0 : i32
    %c1_i32 = arith.constant 1 : i32
    %15 = arith.subi %c1_i32, %14 : i32
    %c0_11 = arith.constant 0 : index
    %c0_12 = arith.constant 0 : index
    %16 = vector.load %arg9[%c0_11, %c0_12] : memref<8x128xf32, #tpu.memory_space<vmem>>, vector<8x128xf32>
    %c0_13 = arith.constant 0 : index
    %c0_14 = arith.constant 0 : index
    %17 = vector.load %arg10[%c0_13, %c0_14] : memref<8x128xf32, #tpu.memory_space<vmem>>, vector<8x128xf32>
    %c0_i32_15 = arith.constant 0 : i32
    %18 = arith.muli %15, %c0_i32_15 : i32
    %19 = arith.addi %13, %18 : i32
    %20 = arith.index_cast %19 : i32 to index
    %c0_16 = arith.constant 0 : index
    %c0_17 = arith.constant 0 : index
    %21 = vector.load %arg11[%20, %c0_16, %c0_17] : memref<4x8x512xf32, #tpu.memory_space<vmem>>, vector<1x8x512xf32>
    %22 = vector.shape_cast %21 : vector<1x8x512xf32> to vector<8x512xf32>
    %23 = arith.truncf %16 : vector<8x128xf32> to vector<8x128xbf16>
    %c0_18 = arith.constant 0 : index
    %c0_19 = arith.constant 0 : index
    %c0_20 = arith.constant 0 : index
    %24 = vector.load %arg4[%c0_18, %c0_19, %c0_20] : memref<1x128x512xbf16, #tpu.memory_space<vmem>>, vector<1x128x512xbf16>
    %25 = vector.shape_cast %24 : vector<1x128x512xbf16> to vector<128x512xbf16>
    %cst_21 = arith.constant dense<0.000000e+00> : vector<8x512xf32>
    %26 = tpu.matmul %23, %25, %cst_21 {dimension_numbers = #tpu.dot_dimension_numbers<[1], [0], [0], [1], [0, 0, 1, 1], [], []>} : vector<8x128xbf16>, vector<128x512xbf16>, vector<8x512xf32> -> vector<8x512xf32>
    %27 = arith.addf %22, %26 : vector<8x512xf32>
    %28 = vector.extract_strided_slice %27 {offsets = [0, 0], sizes = [8, 128], strides = [1, 1]} : vector<8x512xf32> to vector<8x128xf32>
    %cst_22 = arith.constant 5.000000e-01 : f32
    %29 = vector.broadcast %cst_22 : f32 to vector<8x128xf32>
    %30 = arith.mulf %29, %28 : vector<8x128xf32>
    %31 = math.tanh %30 : vector<8x128xf32>
    %cst_23 = arith.constant 5.000000e-01 : f32
    %32 = vector.broadcast %cst_23 : f32 to vector<8x128xf32>
    %33 = arith.mulf %32, %31 : vector<8x128xf32>
    %cst_24 = arith.constant 5.000000e-01 : f32
    %34 = vector.broadcast %cst_24 : f32 to vector<8x128xf32>
    %35 = arith.addf %33, %34 : vector<8x128xf32>
    %36 = vector.extract_strided_slice %27 {offsets = [0, 128], sizes = [8, 128], strides = [1, 1]} : vector<8x512xf32> to vector<8x128xf32>
    %cst_25 = arith.constant 5.000000e-01 : f32
    %37 = vector.broadcast %cst_25 : f32 to vector<8x128xf32>
    %38 = arith.mulf %37, %36 : vector<8x128xf32>
    %39 = math.tanh %38 : vector<8x128xf32>
    %cst_26 = arith.constant 5.000000e-01 : f32
    %40 = vector.broadcast %cst_26 : f32 to vector<8x128xf32>
    %41 = arith.mulf %40, %39 : vector<8x128xf32>
    %cst_27 = arith.constant 5.000000e-01 : f32
    %42 = vector.broadcast %cst_27 : f32 to vector<8x128xf32>
    %43 = arith.addf %41, %42 : vector<8x128xf32>
    %44 = vector.extract_strided_slice %27 {offsets = [0, 256], sizes = [8, 128], strides = [1, 1]} : vector<8x512xf32> to vector<8x128xf32>
    %45 = math.tanh %44 : vector<8x128xf32>
    %46 = vector.extract_strided_slice %27 {offsets = [0, 384], sizes = [8, 128], strides = [1, 1]} : vector<8x512xf32> to vector<8x128xf32>
    %cst_28 = arith.constant 5.000000e-01 : f32
    %47 = vector.broadcast %cst_28 : f32 to vector<8x128xf32>
    %48 = arith.mulf %47, %46 : vector<8x128xf32>
    %49 = math.tanh %48 : vector<8x128xf32>
    %cst_29 = arith.constant 5.000000e-01 : f32
    %50 = vector.broadcast %cst_29 : f32 to vector<8x128xf32>
    %51 = arith.mulf %50, %49 : vector<8x128xf32>
    %cst_30 = arith.constant 5.000000e-01 : f32
    %52 = vector.broadcast %cst_30 : f32 to vector<8x128xf32>
    %53 = arith.addf %51, %52 : vector<8x128xf32>
    %54 = arith.mulf %43, %17 : vector<8x128xf32>
    %55 = arith.mulf %35, %45 : vector<8x128xf32>
    %56 = arith.addf %54, %55 : vector<8x128xf32>
    %57 = math.tanh %56 : vector<8x128xf32>
    %58 = arith.mulf %53, %57 : vector<8x128xf32>
    %59 = arith.index_cast %19 : i32 to index
    %c0_31 = arith.constant 0 : index
    %c0_32 = arith.constant 0 : index
    %60 = vector.load %arg12[%59, %c0_31, %c0_32] : memref<4x8x128xf32, #tpu.memory_space<vmem>>, vector<1x8x128xf32>
    %61 = vector.shape_cast %60 : vector<1x8x128xf32> to vector<8x128xf32>
    %62 = vector.shape_cast %58 : vector<8x128xf32> to vector<1x8x128xf32>
    tpu.vector_store %arg12[%59, %c0_31, %c0_32], %62 {strides = array<i32>} : memref<4x8x128xf32, #tpu.memory_space<vmem>>, vector<1x8x128xf32>,
    %c1_i32_33 = arith.constant 1 : i32
    %63 = arith.muli %15, %c1_i32_33 : i32
    %64 = arith.addi %13, %63 : i32
    %65 = arith.index_cast %64 : i32 to index
    %c0_34 = arith.constant 0 : index
    %c0_35 = arith.constant 0 : index
    %66 = vector.load %arg11[%65, %c0_34, %c0_35] : memref<4x8x512xf32, #tpu.memory_space<vmem>>, vector<1x8x512xf32>
    %67 = vector.shape_cast %66 : vector<1x8x512xf32> to vector<8x512xf32>
    %68 = arith.truncf %58 : vector<8x128xf32> to vector<8x128xbf16>
    %c0_36 = arith.constant 0 : index
    %c0_37 = arith.constant 0 : index
    %c0_38 = arith.constant 0 : index
    %69 = vector.load %arg4[%c0_36, %c0_37, %c0_38] : memref<1x128x512xbf16, #tpu.memory_space<vmem>>, vector<1x128x512xbf16>
    %70 = vector.shape_cast %69 : vector<1x128x512xbf16> to vector<128x512xbf16>
    %cst_39 = arith.constant dense<0.000000e+00> : vector<8x512xf32>
    %71 = tpu.matmul %68, %70, %cst_39 {dimension_numbers = #tpu.dot_dimension_numbers<[1], [0], [0], [1], [0, 0, 1, 1], [], []>} : vector<8x128xbf16>, vector<128x512xbf16>, vector<8x512xf32> -> vector<8x512xf32>
    %72 = arith.addf %67, %71 : vector<8x512xf32>
    %73 = vector.extract_strided_slice %72 {offsets = [0, 0], sizes = [8, 128], strides = [1, 1]} : vector<8x512xf32> to vector<8x128xf32>
    %cst_40 = arith.constant 5.000000e-01 : f32
    %74 = vector.broadcast %cst_40 : f32 to vector<8x128xf32>
    %75 = arith.mulf %74, %73 : vector<8x128xf32>
    %76 = math.tanh %75 : vector<8x128xf32>
    %cst_41 = arith.constant 5.000000e-01 : f32
    %77 = vector.broadcast %cst_41 : f32 to vector<8x128xf32>
    %78 = arith.mulf %77, %76 : vector<8x128xf32>
    %cst_42 = arith.constant 5.000000e-01 : f32
    %79 = vector.broadcast %cst_42 : f32 to vector<8x128xf32>
    %80 = arith.addf %78, %79 : vector<8x128xf32>
    %81 = vector.extract_strided_slice %72 {offsets = [0, 128], sizes = [8, 128], strides = [1, 1]} : vector<8x512xf32> to vector<8x128xf32>
    %cst_43 = arith.constant 5.000000e-01 : f32
    %82 = vector.broadcast %cst_43 : f32 to vector<8x128xf32>
    %83 = arith.mulf %82, %81 : vector<8x128xf32>
    %84 = math.tanh %83 : vector<8x128xf32>
    %cst_44 = arith.constant 5.000000e-01 : f32
    %85 = vector.broadcast %cst_44 : f32 to vector<8x128xf32>
    %86 = arith.mulf %85, %84 : vector<8x128xf32>
    %cst_45 = arith.constant 5.000000e-01 : f32
    %87 = vector.broadcast %cst_45 : f32 to vector<8x128xf32>
    %88 = arith.addf %86, %87 : vector<8x128xf32>
    %89 = vector.extract_strided_slice %72 {offsets = [0, 256], sizes = [8, 128], strides = [1, 1]} : vector<8x512xf32> to vector<8x128xf32>
    %90 = math.tanh %89 : vector<8x128xf32>
    %91 = vector.extract_strided_slice %72 {offsets = [0, 384], sizes = [8, 128], strides = [1, 1]} : vector<8x512xf32> to vector<8x128xf32>
    %cst_46 = arith.constant 5.000000e-01 : f32
    %92 = vector.broadcast %cst_46 : f32 to vector<8x128xf32>
    %93 = arith.mulf %92, %91 : vector<8x128xf32>
    %94 = math.tanh %93 : vector<8x128xf32>
    %cst_47 = arith.constant 5.000000e-01 : f32
    %95 = vector.broadcast %cst_47 : f32 to vector<8x128xf32>
    %96 = arith.mulf %95, %94 : vector<8x128xf32>
    %cst_48 = arith.constant 5.000000e-01 : f32
    %97 = vector.broadcast %cst_48 : f32 to vector<8x128xf32>
    %98 = arith.addf %96, %97 : vector<8x128xf32>
    %99 = arith.mulf %88, %56 : vector<8x128xf32>
    %100 = arith.mulf %80, %90 : vector<8x128xf32>
    %101 = arith.addf %99, %100 : vector<8x128xf32>
    %102 = math.tanh %101 : vector<8x128xf32>
    %103 = arith.mulf %98, %102 : vector<8x128xf32>
    %104 = arith.index_cast %64 : i32 to index
    %c0_49 = arith.constant 0 : index
    %c0_50 = arith.constant 0 : index
    %105 = vector.load %arg12[%104, %c0_49, %c0_50] : memref<4x8x128xf32, #tpu.memory_space<vmem>>, vector<1x8x128xf32>
    %106 = vector.shape_cast %105 : vector<1x8x128xf32> to vector<8x128xf32>
    %107 = vector.shape_cast %103 : vector<8x128xf32> to vector<1x8x128xf32>
    tpu.vector_store %arg12[%104, %c0_49, %c0_50], %107 {strides = array<i32>} : memref<4x8x128xf32, #tpu.memory_space<vmem>>, vector<1x8x128xf32>,
    %c2_i32_51 = arith.constant 2 : i32
    %108 = arith.muli %15, %c2_i32_51 : i32
    %109 = arith.addi %13, %108 : i32
    %110 = arith.index_cast %109 : i32 to index
    %c0_52 = arith.constant 0 : index
    %c0_53 = arith.constant 0 : index
    %111 = vector.load %arg11[%110, %c0_52, %c0_53] : memref<4x8x512xf32, #tpu.memory_space<vmem>>, vector<1x8x512xf32>
    %112 = vector.shape_cast %111 : vector<1x8x512xf32> to vector<8x512xf32>
    %113 = arith.truncf %103 : vector<8x128xf32> to vector<8x128xbf16>
    %c0_54 = arith.constant 0 : index
    %c0_55 = arith.constant 0 : index
    %c0_56 = arith.constant 0 : index
    %114 = vector.load %arg4[%c0_54, %c0_55, %c0_56] : memref<1x128x512xbf16, #tpu.memory_space<vmem>>, vector<1x128x512xbf16>
    %115 = vector.shape_cast %114 : vector<1x128x512xbf16> to vector<128x512xbf16>
    %cst_57 = arith.constant dense<0.000000e+00> : vector<8x512xf32>
    %116 = tpu.matmul %113, %115, %cst_57 {dimension_numbers = #tpu.dot_dimension_numbers<[1], [0], [0], [1], [0, 0, 1, 1], [], []>} : vector<8x128xbf16>, vector<128x512xbf16>, vector<8x512xf32> -> vector<8x512xf32>
    %117 = arith.addf %112, %116 : vector<8x512xf32>
    %118 = vector.extract_strided_slice %117 {offsets = [0, 0], sizes = [8, 128], strides = [1, 1]} : vector<8x512xf32> to vector<8x128xf32>
    %cst_58 = arith.constant 5.000000e-01 : f32
    %119 = vector.broadcast %cst_58 : f32 to vector<8x128xf32>
    %120 = arith.mulf %119, %118 : vector<8x128xf32>
    %121 = math.tanh %120 : vector<8x128xf32>
    %cst_59 = arith.constant 5.000000e-01 : f32
    %122 = vector.broadcast %cst_59 : f32 to vector<8x128xf32>
    %123 = arith.mulf %122, %121 : vector<8x128xf32>
    %cst_60 = arith.constant 5.000000e-01 : f32
    %124 = vector.broadcast %cst_60 : f32 to vector<8x128xf32>
    %125 = arith.addf %123, %124 : vector<8x128xf32>
    %126 = vector.extract_strided_slice %117 {offsets = [0, 128], sizes = [8, 128], strides = [1, 1]} : vector<8x512xf32> to vector<8x128xf32>
    %cst_61 = arith.constant 5.000000e-01 : f32
    %127 = vector.broadcast %cst_61 : f32 to vector<8x128xf32>
    %128 = arith.mulf %127, %126 : vector<8x128xf32>
    %129 = math.tanh %128 : vector<8x128xf32>
    %cst_62 = arith.constant 5.000000e-01 : f32
    %130 = vector.broadcast %cst_62 : f32 to vector<8x128xf32>
    %131 = arith.mulf %130, %129 : vector<8x128xf32>
    %cst_63 = arith.constant 5.000000e-01 : f32
    %132 = vector.broadcast %cst_63 : f32 to vector<8x128xf32>
    %133 = arith.addf %131, %132 : vector<8x128xf32>
    %134 = vector.extract_strided_slice %117 {offsets = [0, 256], sizes = [8, 128], strides = [1, 1]} : vector<8x512xf32> to vector<8x128xf32>
    %135 = math.tanh %134 : vector<8x128xf32>
    %136 = vector.extract_strided_slice %117 {offsets = [0, 384], sizes = [8, 128], strides = [1, 1]} : vector<8x512xf32> to vector<8x128xf32>
    %cst_64 = arith.constant 5.000000e-01 : f32
    %137 = vector.broadcast %cst_64 : f32 to vector<8x128xf32>
    %138 = arith.mulf %137, %136 : vector<8x128xf32>
    %139 = math.tanh %138 : vector<8x128xf32>
    %cst_65 = arith.constant 5.000000e-01 : f32
    %140 = vector.broadcast %cst_65 : f32 to vector<8x128xf32>
    %141 = arith.mulf %140, %139 : vector<8x128xf32>
    %cst_66 = arith.constant 5.000000e-01 : f32
    %142 = vector.broadcast %cst_66 : f32 to vector<8x128xf32>
    %143 = arith.addf %141, %142 : vector<8x128xf32>
    %144 = arith.mulf %133, %101 : vector<8x128xf32>
    %145 = arith.mulf %125, %135 : vector<8x128xf32>
    %146 = arith.addf %144, %145 : vector<8x128xf32>
    %147 = math.tanh %146 : vector<8x128xf32>
    %148 = arith.mulf %143, %147 : vector<8x128xf32>
    %149 = arith.index_cast %109 : i32 to index
    %c0_67 = arith.constant 0 : index
    %c0_68 = arith.constant 0 : index
    %150 = vector.load %arg12[%149, %c0_67, %c0_68] : memref<4x8x128xf32, #tpu.memory_space<vmem>>, vector<1x8x128xf32>
    %151 = vector.shape_cast %150 : vector<1x8x128xf32> to vector<8x128xf32>
    %152 = vector.shape_cast %148 : vector<8x128xf32> to vector<1x8x128xf32>
    tpu.vector_store %arg12[%149, %c0_67, %c0_68], %152 {strides = array<i32>} : memref<4x8x128xf32, #tpu.memory_space<vmem>>, vector<1x8x128xf32>,
    %c3_i32_69 = arith.constant 3 : i32
    %153 = arith.muli %15, %c3_i32_69 : i32
    %154 = arith.addi %13, %153 : i32
    %155 = arith.index_cast %154 : i32 to index
    %c0_70 = arith.constant 0 : index
    %c0_71 = arith.constant 0 : index
    %156 = vector.load %arg11[%155, %c0_70, %c0_71] : memref<4x8x512xf32, #tpu.memory_space<vmem>>, vector<1x8x512xf32>
    %157 = vector.shape_cast %156 : vector<1x8x512xf32> to vector<8x512xf32>
    %158 = arith.truncf %148 : vector<8x128xf32> to vector<8x128xbf16>
    %c0_72 = arith.constant 0 : index
    %c0_73 = arith.constant 0 : index
    %c0_74 = arith.constant 0 : index
    %159 = vector.load %arg4[%c0_72, %c0_73, %c0_74] : memref<1x128x512xbf16, #tpu.memory_space<vmem>>, vector<1x128x512xbf16>
    %160 = vector.shape_cast %159 : vector<1x128x512xbf16> to vector<128x512xbf16>
    %cst_75 = arith.constant dense<0.000000e+00> : vector<8x512xf32>
    %161 = tpu.matmul %158, %160, %cst_75 {dimension_numbers = #tpu.dot_dimension_numbers<[1], [0], [0], [1], [0, 0, 1, 1], [], []>} : vector<8x128xbf16>, vector<128x512xbf16>, vector<8x512xf32> -> vector<8x512xf32>
    %162 = arith.addf %157, %161 : vector<8x512xf32>
    %163 = vector.extract_strided_slice %162 {offsets = [0, 0], sizes = [8, 128], strides = [1, 1]} : vector<8x512xf32> to vector<8x128xf32>
    %cst_76 = arith.constant 5.000000e-01 : f32
    %164 = vector.broadcast %cst_76 : f32 to vector<8x128xf32>
    %165 = arith.mulf %164, %163 : vector<8x128xf32>
    %166 = math.tanh %165 : vector<8x128xf32>
    %cst_77 = arith.constant 5.000000e-01 : f32
    %167 = vector.broadcast %cst_77 : f32 to vector<8x128xf32>
    %168 = arith.mulf %167, %166 : vector<8x128xf32>
    %cst_78 = arith.constant 5.000000e-01 : f32
    %169 = vector.broadcast %cst_78 : f32 to vector<8x128xf32>
    %170 = arith.addf %168, %169 : vector<8x128xf32>
    %171 = vector.extract_strided_slice %162 {offsets = [0, 128], sizes = [8, 128], strides = [1, 1]} : vector<8x512xf32> to vector<8x128xf32>
    %cst_79 = arith.constant 5.000000e-01 : f32
    %172 = vector.broadcast %cst_79 : f32 to vector<8x128xf32>
    %173 = arith.mulf %172, %171 : vector<8x128xf32>
    %174 = math.tanh %173 : vector<8x128xf32>
    %cst_80 = arith.constant 5.000000e-01 : f32
    %175 = vector.broadcast %cst_80 : f32 to vector<8x128xf32>
    %176 = arith.mulf %175, %174 : vector<8x128xf32>
    %cst_81 = arith.constant 5.000000e-01 : f32
    %177 = vector.broadcast %cst_81 : f32 to vector<8x128xf32>
    %178 = arith.addf %176, %177 : vector<8x128xf32>
    %179 = vector.extract_strided_slice %162 {offsets = [0, 256], sizes = [8, 128], strides = [1, 1]} : vector<8x512xf32> to vector<8x128xf32>
    %180 = math.tanh %179 : vector<8x128xf32>
    %181 = vector.extract_strided_slice %162 {offsets = [0, 384], sizes = [8, 128], strides = [1, 1]} : vector<8x512xf32> to vector<8x128xf32>
    %cst_82 = arith.constant 5.000000e-01 : f32
    %182 = vector.broadcast %cst_82 : f32 to vector<8x128xf32>
    %183 = arith.mulf %182, %181 : vector<8x128xf32>
    %184 = math.tanh %183 : vector<8x128xf32>
    %cst_83 = arith.constant 5.000000e-01 : f32
    %185 = vector.broadcast %cst_83 : f32 to vector<8x128xf32>
    %186 = arith.mulf %185, %184 : vector<8x128xf32>
    %cst_84 = arith.constant 5.000000e-01 : f32
    %187 = vector.broadcast %cst_84 : f32 to vector<8x128xf32>
    %188 = arith.addf %186, %187 : vector<8x128xf32>
    %189 = arith.mulf %178, %146 : vector<8x128xf32>
    %190 = arith.mulf %170, %180 : vector<8x128xf32>
    %191 = arith.addf %189, %190 : vector<8x128xf32>
    %192 = math.tanh %191 : vector<8x128xf32>
    %193 = arith.mulf %188, %192 : vector<8x128xf32>
    %194 = arith.index_cast %154 : i32 to index
    %c0_85 = arith.constant 0 : index
    %c0_86 = arith.constant 0 : index
    %195 = vector.load %arg12[%194, %c0_85, %c0_86] : memref<4x8x128xf32, #tpu.memory_space<vmem>>, vector<1x8x128xf32>
    %196 = vector.shape_cast %195 : vector<1x8x128xf32> to vector<8x128xf32>
    %197 = vector.shape_cast %193 : vector<8x128xf32> to vector<1x8x128xf32>
    tpu.vector_store %arg12[%194, %c0_85, %c0_86], %197 {strides = array<i32>} : memref<4x8x128xf32, #tpu.memory_space<vmem>>, vector<1x8x128xf32>,
    %c4_i32 = arith.constant 4 : i32
    %c0_87 = arith.constant 0 : index
    %c0_88 = arith.constant 0 : index
    %198 = vector.load %arg9[%c0_87, %c0_88] : memref<8x128xf32, #tpu.memory_space<vmem>>, vector<8x128xf32>
    tpu.vector_store %arg9[%c0_87, %c0_88], %193 {strides = array<i32>} : memref<8x128xf32, #tpu.memory_space<vmem>>, vector<8x128xf32>,
    %c0_89 = arith.constant 0 : index
    %c0_90 = arith.constant 0 : index
    %199 = vector.load %arg10[%c0_89, %c0_90] : memref<8x128xf32, #tpu.memory_space<vmem>>, vector<8x128xf32>
    tpu.vector_store %arg10[%c0_89, %c0_90], %191 {strides = array<i32>} : memref<8x128xf32, #tpu.memory_space<vmem>>, vector<8x128xf32>,
    %c0_91 = arith.constant 0 : index
    %c0_92 = arith.constant 0 : index
    %c0_93 = arith.constant 0 : index
    %200 = vector.load %arg12[%c0_91, %c0_92, %c0_93] : memref<4x8x128xf32, #tpu.memory_space<vmem>>, vector<4x8x128xf32>
    %201 = arith.truncf %200 : vector<4x8x128xf32> to vector<4x8x128xbf16>
    %c0_94 = arith.constant 0 : index
    %c0_95 = arith.constant 0 : index
    %c0_96 = arith.constant 0 : index
    %202 = vector.load %arg6[%c0_94, %c0_95, %c0_96] : memref<4x8x128xbf16, #tpu.memory_space<vmem>>, vector<4x8x128xbf16>
    tpu.vector_store %arg6[%c0_94, %c0_95, %c0_96], %201 {strides = array<i32>} : memref<4x8x128xbf16, #tpu.memory_space<vmem>>, vector<4x8x128xbf16>,
    %203 = vector.extract_strided_slice %200 {offsets = [0, 0, 0], sizes = [4, 2, 128], strides = [1, 1, 1]} : vector<4x8x128xf32> to vector<4x2x128xf32>
    %c0_97 = arith.constant 0 : index
    %c0_98 = arith.constant 0 : index
    %204 = vector.load %arg7[%c0_97, %c0_98] : memref<1x128xf32, #tpu.memory_space<vmem>>, vector<1x128xf32>
    %cst_99 = arith.constant dense<0.000000e+00> : vector<128xf32>
    %205 = vector.multi_reduction <add>, %203, %cst_99 [0, 1] : vector<4x2x128xf32> to vector<128xf32>
    %206 = vector.shape_cast %205 : vector<128xf32> to vector<1x128xf32>
    %207 = arith.addf %204, %206 : vector<1x128xf32>
    %c0_100 = arith.constant 0 : index
    %c0_101 = arith.constant 0 : index
    %208 = vector.load %arg7[%c0_100, %c0_101] : memref<1x128xf32, #tpu.memory_space<vmem>>, vector<1x128xf32>
    tpu.vector_store %arg7[%c0_100, %c0_101], %207 {strides = array<i32>} : memref<1x128xf32, #tpu.memory_space<vmem>>, vector<1x128xf32>,
    %c0_102 = arith.constant 0 : index
    %c0_103 = arith.constant 0 : index
    %209 = vector.load %arg8[%c0_102, %c0_103] : memref<1x128xf32, #tpu.memory_space<vmem>>, vector<1x128xf32>
    %210 = arith.mulf %203, %203 : vector<4x2x128xf32>
    %cst_104 = arith.constant dense<0.000000e+00> : vector<128xf32>
    %211 = vector.multi_reduction <add>, %210, %cst_104 [0, 1] : vector<4x2x128xf32> to vector<128xf32>
    %212 = vector.shape_cast %211 : vector<128xf32> to vector<1x128xf32>
    %213 = arith.addf %209, %212 : vector<1x128xf32>
    %c0_105 = arith.constant 0 : index
    %c0_106 = arith.constant 0 : index
    %214 = vector.load %arg8[%c0_105, %c0_106] : memref<1x128xf32, #tpu.memory_space<vmem>>, vector<1x128xf32>
    tpu.vector_store %arg8[%c0_105, %c0_106], %213 {strides = array<i32>} : memref<1x128xf32, #tpu.memory_space<vmem>>, vector<1x128xf32>,
    return
  }
  func.func @transform_0(%arg0: i32, %arg1: i32) -> (i32, i32) {
    %c2_i32 = arith.constant 2 : i32
    %0 = arith.muli %c2_i32, %arg1 : i32
    %c1_i32 = arith.constant 1 : i32
    %1 = arith.subi %c1_i32, %0 : i32
    %2 = arith.muli %arg0, %1 : i32
    %3 = arith.addi %arg1, %2 : i32
    %c0_i32 = arith.constant 0 : i32
    %c0_i32_0 = arith.constant 0 : i32
    return %3, %c0_i32 : i32, i32
  }
  func.func @transform_1(%arg0: i32, %arg1: i32) -> (i32, i32, i32) {
    %c0_i32 = arith.constant 0 : i32
    %c0_i32_0 = arith.constant 0 : i32
    %c0_i32_1 = arith.constant 0 : i32
    return %arg0, %c0_i32, %c0_i32_0 : i32, i32, i32
  }
  func.func @transform_2(%arg0: i32, %arg1: i32) -> (i32, i32, i32) {
    %c0_i32 = arith.constant 0 : i32
    %c0_i32_0 = arith.constant 0 : i32
    %c0_i32_1 = arith.constant 0 : i32
    return %arg0, %c0_i32, %c0_i32_0 : i32, i32, i32
  }
  func.func @transform_3(%arg0: i32, %arg1: i32) -> (i32, i32, i32) {
    %c0_i32 = arith.constant 0 : i32
    %c0_i32_0 = arith.constant 0 : i32
    %c0_i32_1 = arith.constant 0 : i32
    return %arg0, %c0_i32, %c0_i32_0 : i32, i32, i32
  }
  func.func @transform_4(%arg0: i32, %arg1: i32) -> (i32, i32, i32) {
    %c2_i32 = arith.constant 2 : i32
    %0 = arith.muli %c2_i32, %arg1 : i32
    %c1_i32 = arith.constant 1 : i32
    %1 = arith.subi %c1_i32, %0 : i32
    %2 = arith.muli %arg0, %1 : i32
    %3 = arith.addi %arg1, %2 : i32
    %c0_i32 = arith.constant 0 : i32
    %c0_i32_0 = arith.constant 0 : i32
    return %3, %c0_i32, %arg0 : i32, i32, i32
  }
  func.func @transform_5(%arg0: i32, %arg1: i32) -> (i32, i32) {
    %c0_i32 = arith.constant 0 : i32
    %c0_i32_0 = arith.constant 0 : i32
    return %c0_i32, %arg0 : i32, i32
  }
  func.func @transform_6(%arg0: i32, %arg1: i32) -> (i32, i32) {
    %c0_i32 = arith.constant 0 : i32
    %c0_i32_0 = arith.constant 0 : i32
    return %c0_i32, %arg0 : i32, i32
  }
}

module attributes {stable_mosaic.version = 11 : i64} {
  func.func @_fc_kernel(%arg0: i32, %arg1: memref<64x256xbf16, #tpu.memory_space<vmem>>, %arg2: memref<256x128xbf16, #tpu.memory_space<vmem>>, %arg3: memref<1x128xf32, #tpu.memory_space<vmem>>, %arg4: memref<64x128xf32, #tpu.memory_space<vmem>>) attributes {dimension_semantics = [#tpu.dimension_semantics<parallel>], iteration_bounds = array<i64: 1>, scalar_prefetch = 0 : i64, scratch_operands = 0 : i64, tpu.core_type = #tpu.core_type<tc>, window_params = [{transform_indices = @transform_0, window_bounds = array<i64: 64, 256>}, {pipeline_mode = #tpu.pipeline_mode<synchronous>, transform_indices = @transform_1, window_bounds = array<i64: 256, 128>}, {pipeline_mode = #tpu.pipeline_mode<synchronous>, transform_indices = @transform_2, window_bounds = array<i64: 1, 128>}, {transform_indices = @transform_3, window_bounds = array<i64: 64, 128>}]} {
    %c0 = arith.constant 0 : index
    %c0_0 = arith.constant 0 : index
    %0 = vector.load %arg1[%c0, %c0_0] : memref<64x256xbf16, #tpu.memory_space<vmem>>, vector<64x256xbf16>
    %c0_1 = arith.constant 0 : index
    %c0_2 = arith.constant 0 : index
    %1 = vector.load %arg2[%c0_1, %c0_2] : memref<256x128xbf16, #tpu.memory_space<vmem>>, vector<256x128xbf16>
    %cst = arith.constant dense<0.000000e+00> : vector<64x128xf32>
    %2 = tpu.matmul %0, %1, %cst {dimension_numbers = #tpu.dot_dimension_numbers<[1], [0], [0], [1], [0, 0, 1, 1], [], []>} : vector<64x256xbf16>, vector<256x128xbf16>, vector<64x128xf32> -> vector<64x128xf32>
    %c0_3 = arith.constant 0 : index
    %c0_4 = arith.constant 0 : index
    %3 = vector.load %arg3[%c0_3, %c0_4] : memref<1x128xf32, #tpu.memory_space<vmem>>, vector<1x128xf32>
    %4 = vector.broadcast %3 : vector<1x128xf32> to vector<64x128xf32>
    %5 = arith.addf %2, %4 : vector<64x128xf32>
    %cst_5 = arith.constant dense<0xFF800000> : vector<64xf32>
    %6 = vector.multi_reduction <maximumf>, %5, %cst_5 [1] : vector<64x128xf32> to vector<64xf32>
    %7 = vector.shape_cast %6 : vector<64xf32> to vector<64x1xf32>
    %8 = vector.broadcast %7 : vector<64x1xf32> to vector<64x128xf32>
    %9 = arith.subf %5, %8 : vector<64x128xf32>
    %10 = math.exp %9 : vector<64x128xf32>
    %cst_6 = arith.constant dense<0.000000e+00> : vector<64xf32>
    %11 = vector.multi_reduction <add>, %10, %cst_6 [1] : vector<64x128xf32> to vector<64xf32>
    %12 = vector.shape_cast %11 : vector<64xf32> to vector<64x1xf32>
    %13 = math.log %12 : vector<64x1xf32>
    %14 = vector.broadcast %13 : vector<64x1xf32> to vector<64x128xf32>
    %15 = arith.subf %9, %14 : vector<64x128xf32>
    %c0_7 = arith.constant 0 : index
    %c0_8 = arith.constant 0 : index
    %16 = vector.load %arg4[%c0_7, %c0_8] : memref<64x128xf32, #tpu.memory_space<vmem>>, vector<64x128xf32>
    tpu.vector_store %arg4[%c0_7, %c0_8], %15 {strides = array<i32>} : memref<64x128xf32, #tpu.memory_space<vmem>>, vector<64x128xf32>,
    return
  }
  func.func @transform_0(%arg0: i32) -> (i32, i32) {
    %c0_i32 = arith.constant 0 : i32
    %c0_i32_0 = arith.constant 0 : i32
    return %arg0, %c0_i32 : i32, i32
  }
  func.func @transform_1(%arg0: i32) -> (i32, i32) {
    %c0_i32 = arith.constant 0 : i32
    %c0_i32_0 = arith.constant 0 : i32
    %c0_i32_1 = arith.constant 0 : i32
    return %c0_i32, %c0_i32_0 : i32, i32
  }
  func.func @transform_2(%arg0: i32) -> (i32, i32) {
    %c0_i32 = arith.constant 0 : i32
    %c0_i32_0 = arith.constant 0 : i32
    %c0_i32_1 = arith.constant 0 : i32
    return %c0_i32, %c0_i32_0 : i32, i32
  }
  func.func @transform_3(%arg0: i32) -> (i32, i32) {
    %c0_i32 = arith.constant 0 : i32
    %c0_i32_0 = arith.constant 0 : i32
    return %arg0, %c0_i32 : i32, i32
  }
}

</mosaic_0001>

<llo_original>
// kernel: blstm_forward.5
$region0: #{blstm_forward.5}
  #allocation0 [shape = 'u32[]', space=smem, size = 0x4, offset = 0x4, fixed_abs, tag = 'smem constant byte address 0x4 - core index']
  #allocation1 [shape = 'u32[144,128]{1,0:T(1,128)}', space=vmem, size = 0x12000, scoped, tag = 'internal scratch']
  %s0 = inlined_call_operand.vmem [shape: bf16[64,256], index: 0, kind: input, shape index: {}]
  %s1 = inlined_call_operand.vmem [shape: bf16[256,128], index: 1, kind: input, shape index: {}]
  %s2 = inlined_call_operand.vmem [shape: f32[1,128], index: 2, kind: input, shape index: {}]
  %s3 = inlined_call_operand.vmem [shape: f32[64,128], index: 3, kind: output, shape index: {}]
  %s4 = sld [smem:[#allocation0]]
  $region22: #{blstm_forward.5} parent=0
    _
  %s6 = ssub.s32 1, %s4
  %s7 = scalar_select 0, %s6, %s4
  // Predicated region
  $region2: #{blstm_forward.5} parent=0 // pred_check
    _
  $region3: #{blstm_forward.5} parent=0 // pred_check_branch
    %9 = sbr.rel (0) target = $region5
  $region4: #{blstm_forward.5} parent=0 // pred_region
    _
  $region5: #{blstm_forward.5} parent=0 // pred_fallthru
    _
  // Predicated region
  $region6: #{blstm_forward.5} parent=0 // pred_check
    _
  $region7: #{blstm_forward.5} parent=0 // pred_check_branch
    %11 = sbr.rel (0) target = $region9
  $region8: #{blstm_forward.5} parent=0 // pred_region
    _
  $region9: #{blstm_forward.5} parent=0 // pred_fallthru
    _
  // Predicated region
  $region10: #{blstm_forward.5} parent=0 // pred_check
    _
  $region11: #{blstm_forward.5} parent=0 // pred_check_branch
    %13 = sbr.rel (0) target = $region13
  $region12: #{blstm_forward.5} parent=0 // pred_region
    _
  $region13: #{blstm_forward.5} parent=0 // pred_fallthru
    _
  %v15 = vld [vmem:[%s0] sm:$0xff]
  %v16 = vld [vmem:[%s0 + $0x8] sm:$0xff]
  %v17 = vld [vmem:[%s0 + $0x10] sm:$0xff]
  %v18 = vld [vmem:[%s0 + $0x18] sm:$0xff]
  %v19 = vld [vmem:[%s0 + $0x20] sm:$0xff]
  %v20 = vld [vmem:[%s0 + $0x28] sm:$0xff]
  %v21 = vld [vmem:[%s0 + $0x30] sm:$0xff]
  %v22 = vld [vmem:[%s0 + $0x38] sm:$0xff]
  %v23 = vld [vmem:[%s1] sm:$0xf]
  %v24 = vld [vmem:[%s1 + $0x4] sm:$0xf]
  %v25 = vld [vmem:[%s1 + $0x8] sm:$0xf]
  %v26 = vld [vmem:[%s1 + $0xc] sm:$0xf]
  %v27 = vld [vmem:[%s1 + $0x10] sm:$0xf]
  %v28 = vld [vmem:[%s1 + $0x14] sm:$0xf]
  %v29 = vld [vmem:[%s1 + $0x18] sm:$0xf]
  %v30 = vld [vmem:[%s1 + $0x1c] sm:$0xf]
  %v31 = vld [vmem:[%s1 + $0x20] sm:$0xf]
  %v32 = vld [vmem:[%s1 + $0x24] sm:$0xf]
  %v33 = vld [vmem:[%s1 + $0x28] sm:$0xf]
  %v34 = vld [vmem:[%s1 + $0x2c] sm:$0xf]
  %v35 = vld [vmem:[%s1 + $0x30] sm:$0xf]
  %v36 = vld [vmem:[%s1 + $0x34] sm:$0xf]
  %v37 = vld [vmem:[%s1 + $0x38] sm:$0xf]
  %v38 = vld [vmem:[%s1 + $0x3c] sm:$0xf]
  %v39 = vld [vmem:[%s1 + $0x40] sm:$0xf]
  %v40 = vld [vmem:[%s1 + $0x44] sm:$0xf]
  %v41 = vld [vmem:[%s1 + $0x48] sm:$0xf]
  %v42 = vld [vmem:[%s1 + $0x4c] sm:$0xf]
  %v43 = vld [vmem:[%s1 + $0x50] sm:$0xf]
  %v44 = vld [vmem:[%s1 + $0x54] sm:$0xf]
  %v45 = vld [vmem:[%s1 + $0x58] sm:$0xf]
  %v46 = vld [vmem:[%s1 + $0x5c] sm:$0xf]
  %v47 = vld [vmem:[%s1 + $0x60] sm:$0xf]
  %v48 = vld [vmem:[%s1 + $0x64] sm:$0xf]
  %v49 = vld [vmem:[%s1 + $0x68] sm:$0xf]
  %v50 = vld [vmem:[%s1 + $0x6c] sm:$0xf]
  %v51 = vld [vmem:[%s1 + $0x70] sm:$0xf]
  %v52 = vld [vmem:[%s1 + $0x74] sm:$0xf]
  %v53 = vld [vmem:[%s1 + $0x78] sm:$0xf]
  %v54 = vld [vmem:[%s1 + $0x7c] sm:$0xf]
  %v55 = vld [vmem:[%s2] sm:$0x1]
  %v57 = vlaneseq
  %v58 = vshrl.u32 %v57, 7
  %v59 = vsub.s32 0, %v58
  %v60 = vrot.slane %v55, %v59
  %v70 = vunpack.c.l.b16 %v15
  %v71 = vunpack.c.h.b16 %v15
  %v72 = vunpack.c.l.b16 %v16
  %v73 = vunpack.c.h.b16 %v16
  %v74 = vunpack.c.l.b16 %v17
  %v75 = vunpack.c.h.b16 %v17
  %v76 = vunpack.c.l.b16 %v18
  %v77 = vunpack.c.h.b16 %v18
  %v78 = vunpack.c.l.b16 %v19
  %v79 = vunpack.c.h.b16 %v19
  %v80 = vunpack.c.l.b16 %v20
  %v81 = vunpack.c.h.b16 %v20
  %v82 = vunpack.c.l.b16 %v21
  %v83 = vunpack.c.h.b16 %v21
  %v84 = vunpack.c.l.b16 %v22
  %v85 = vunpack.c.h.b16 %v22
  %v86 = vpack.c.b16 %v72, %v70
  %v87 = vpack.c.b16 %v73, %v71
  %v88 = vpack.c.b16 %v76, %v74
  %v89 = vpack.c.b16 %v77, %v75
  %v90 = vpack.c.b16 %v80, %v78
  %v91 = vpack.c.b16 %v81, %v79
  %v92 = vpack.c.b16 %v84, %v82
  %v93 = vpack.c.b16 %v85, %v83
  %v134 = vunpack.c.l.b16 %v23
  %v135 = vunpack.c.l.b16 %v24
  %v136 = vunpack.c.l.b16 %v25
  %v137 = vunpack.c.l.b16 %v26
  %v138 = vunpack.c.l.b16 %v27
  %v139 = vunpack.c.l.b16 %v28
  %v140 = vunpack.c.l.b16 %v29
  %v141 = vunpack.c.l.b16 %v30
  %v142 = vunpack.c.l.b16 %v31
  %v143 = vunpack.c.l.b16 %v32
  %v144 = vunpack.c.l.b16 %v33
  %v145 = vunpack.c.l.b16 %v34
  %v146 = vunpack.c.l.b16 %v35
  %v147 = vunpack.c.l.b16 %v36
  %v148 = vunpack.c.l.b16 %v37
  %v149 = vunpack.c.l.b16 %v38
  %v150 = vunpack.c.l.b16 %v39
  %v151 = vunpack.c.l.b16 %v40
  %v152 = vunpack.c.l.b16 %v41
  %v153 = vunpack.c.l.b16 %v42
  %v154 = vunpack.c.l.b16 %v43
  %v155 = vunpack.c.l.b16 %v44
  %v156 = vunpack.c.l.b16 %v45
  %v157 = vunpack.c.l.b16 %v46
  %v158 = vunpack.c.l.b16 %v47
  %v159 = vunpack.c.l.b16 %v48
  %v160 = vunpack.c.l.b16 %v49
  %v161 = vunpack.c.l.b16 %v50
  %v162 = vunpack.c.l.b16 %v51
  %v163 = vunpack.c.l.b16 %v52
  %v164 = vunpack.c.l.b16 %v53
  %v165 = vunpack.c.l.b16 %v54
  %v166 = vpack.c.b16 %v135, %v134
  %v167 = vpack.c.b16 %v137, %v136
  %v168 = vpack.c.b16 %v139, %v138
  %v169 = vpack.c.b16 %v141, %v140
  %v170 = vpack.c.b16 %v143, %v142
  %v171 = vpack.c.b16 %v145, %v144
  %v172 = vpack.c.b16 %v147, %v146
  %v173 = vpack.c.b16 %v149, %v148
  %v174 = vpack.c.b16 %v151, %v150
  %v175 = vpack.c.b16 %v153, %v152
  %v176 = vpack.c.b16 %v155, %v154
  %v177 = vpack.c.b16 %v157, %v156
  %v178 = vpack.c.b16 %v159, %v158
  %v179 = vpack.c.b16 %v161, %v160
  %v180 = vpack.c.b16 %v163, %v162
  %v181 = vpack.c.b16 %v165, %v164
  %198 = vmatprep.subr.bf16.mxu0 0
  %199 = vmatpush1.bf16.msra.mxu0 %v166
  %200 = vmatprep.subr.bf16.mxu0 0
  %201 = vmatpush1.bf16.msra.mxu0 %v167
  %202 = vmatprep.subr.bf16.mxu0 0
  %203 = vmatpush1.bf16.msra.mxu0 %v168
  %204 = vmatprep.subr.bf16.mxu0 0
  %205 = vmatpush1.bf16.msra.mxu0 %v169
  %206 = vmatprep.subr.bf16.mxu0 0
  %207 = vmatpush1.bf16.msra.mxu0 %v170
  %208 = vmatprep.subr.bf16.mxu0 0
  %209 = vmatpush1.bf16.msra.mxu0 %v171
  %210 = vmatprep.subr.bf16.mxu0 0
  %211 = vmatpush1.bf16.msra.mxu0 %v172
  %212 = vmatprep.subr.bf16.mxu0 0
  %213 = vmatpush1.bf16.msra.mxu0 %v173
  %214 = vmatprep.subr.bf16.mxu0 0
  %215 = vmatpush1.bf16.msra.mxu0 %v174
  %216 = vmatprep.subr.bf16.mxu0 0
  %217 = vmatpush1.bf16.msra.mxu0 %v175
  %218 = vmatprep.subr.bf16.mxu0 0
  %219 = vmatpush1.bf16.msra.mxu0 %v176
  %220 = vmatprep.subr.bf16.mxu0 0
  %221 = vmatpush1.bf16.msra.mxu0 %v177
  %222 = vmatprep.subr.bf16.mxu0 0
  %223 = vmatpush1.bf16.msra.mxu0 %v178
  %224 = vmatprep.subr.bf16.mxu0 0
  %225 = vmatpush1.bf16.msra.mxu0 %v179
  %226 = vmatprep.subr.bf16.mxu0 0
  %227 = vmatpush1.bf16.msra.mxu0 %v180
  %228 = vmatprep.subr.bf16.mxu0 0
  %229 = vmatpush1.bf16.msra.mxu0 %v181
  %230 = vmatprep.mubr.bf16.mxu0 %v87
  %231 = vmatmul.mubr.bf16.gmra.mrb[0].mxu0 %v86
  %v232 = vpop.f32.mrb[0].mxu0
  %v233 = vadd.f32 %v60, %v232
  %v234 = vpop.f32.mrb[0].mxu0
  %v235 = vpop.f32.mrb[0].mxu0
  %v236 = vadd.f32 %v60, %v235
  %v237 = vpop.f32.mrb[0].mxu0
  %238 = vmatprep.mubr.bf16.mxu0 %v89
  %239 = vmatmul.mubr.bf16.gmra.mrb[0].mxu0 %v88
  %v240 = vpop.f32.mrb[0].mxu0
  %v241 = vadd.f32 %v60, %v240
  %v242 = vpop.f32.mrb[0].mxu0
  %v243 = vpop.f32.mrb[0].mxu0
  %v244 = vadd.f32 %v60, %v243
  %v245 = vpop.f32.mrb[0].mxu0
  %246 = vmatprep.mubr.bf16.mxu0 %v91
  %247 = vmatmul.mubr.bf16.gmra.mrb[0].mxu0 %v90
  %v248 = vpop.f32.mrb[0].mxu0
  %v249 = vadd.f32 %v60, %v248
  %v250 = vpop.f32.mrb[0].mxu0
  %v251 = vpop.f32.mrb[0].mxu0
  %v252 = vadd.f32 %v60, %v251
  %v253 = vpop.f32.mrb[0].mxu0
  %254 = vmatprep.mubr.bf16.mxu0 %v93
  %255 = vmatmul.mubr.bf16.gmra.mrb[0].mxu0 %v92
  %v256 = vpop.f32.mrb[0].mxu0
  %v257 = vadd.f32 %v60, %v256
  %v258 = vpop.f32.mrb[0].mxu0
  %v259 = vpop.f32.mrb[0].mxu0
  %v260 = vadd.f32 %v60, %v259
  %v261 = vpop.f32.mrb[0].mxu0
  %262 = vdwg.mxu0
  %263 = vmax.xlane.f32.xlu0 %v233
  %v264 = vpop.xlane.xlu0 %263
  %265 = vmax.xlane.f32.xlu0 %v236
  %v266 = vpop.xlane.xlu0 %265
  %267 = vmax.xlane.f32.xlu0 %v241
  %v268 = vpop.xlane.xlu0 %267
  %269 = vmax.xlane.f32.xlu0 %v244
  %v270 = vpop.xlane.xlu0 %269
  %271 = vmax.xlane.f32.xlu0 %v249
  %v272 = vpop.xlane.xlu0 %271
  %273 = vmax.xlane.f32.xlu0 %v252
  %v274 = vpop.xlane.xlu0 %273
  %275 = vmax.xlane.f32.xlu0 %v257
  %v276 = vpop.xlane.xlu0 %275
  %277 = vmax.xlane.f32.xlu0 %v260
  %v278 = vpop.xlane.xlu0 %277
  %v279 = vsub.f32 %v233, %v264
  %v280 = vsub.f32 %v236, %v266
  %v281 = vsub.f32 %v241, %v268
  %v282 = vsub.f32 %v244, %v270
  %v283 = vsub.f32 %v249, %v272
  %v284 = vsub.f32 %v252, %v274
  %v285 = vsub.f32 %v257, %v276
  %v286 = vsub.f32 %v260, %v278
  %v287 = vmul.f32 %v279, 1.442695
  %v288 = vpow.pop %v287
  %v289 = vmul.f32 %v280, 1.442695
  %v290 = vpow.pop %v289
  %v291 = vmul.f32 %v281, 1.442695
  %v292 = vpow.pop %v291
  %v293 = vmul.f32 %v282, 1.442695
  %v294 = vpow.pop %v293
  %v295 = vmul.f32 %v283, 1.442695
  %v296 = vpow.pop %v295
  %v297 = vmul.f32 %v284, 1.442695
  %v298 = vpow.pop %v297
  %v299 = vmul.f32 %v285, 1.442695
  %v300 = vpow.pop %v299
  %v301 = vmul.f32 %v286, 1.442695
  %v302 = vpow.pop %v301
  %303 = vadd.xlane.f32.xlu0 %v288
  %v304 = vpop.xlane.xlu0 %303
  %305 = vadd.xlane.f32.xlu0 %v290
  %v306 = vpop.xlane.xlu0 %305
  %307 = vadd.xlane.f32.xlu0 %v292
  %v308 = vpop.xlane.xlu0 %307
  %309 = vadd.xlane.f32.xlu0 %v294
  %v310 = vpop.xlane.xlu0 %309
  %311 = vadd.xlane.f32.xlu0 %v296
  %v312 = vpop.xlane.xlu0 %311
  %313 = vadd.xlane.f32.xlu0 %v298
  %v314 = vpop.xlane.xlu0 %313
  %315 = vadd.xlane.f32.xlu0 %v300
  %v316 = vpop.xlane.xlu0 %315
  %317 = vadd.xlane.f32.xlu0 %v302
  %v318 = vpop.xlane.xlu0 %317
  %v319 = vlog2.pop %v304
  %v320 = vmul.f32 %v319, 0.6931472
  %v321 = vlog2.pop %v306
  %v322 = vmul.f32 %v321, 0.6931472
  %v323 = vlog2.pop %v308
  %v324 = vmul.f32 %v323, 0.6931472
  %v325 = vlog2.pop %v310
  %v326 = vmul.f32 %v325, 0.6931472
  %v327 = vlog2.pop %v312
  %v328 = vmul.f32 %v327, 0.6931472
  %v329 = vlog2.pop %v314
  %v330 = vmul.f32 %v329, 0.6931472
  %v331 = vlog2.pop %v316
  %v332 = vmul.f32 %v331, 0.6931472
  %v333 = vlog2.pop %v318
  %v334 = vmul.f32 %v333, 0.6931472
  %v335 = vsub.f32 %v279, %v320
  %v336 = vsub.f32 %v280, %v322
  %v337 = vsub.f32 %v281, %v324
  %v338 = vsub.f32 %v282, %v326
  %v339 = vsub.f32 %v283, %v328
  %v340 = vsub.f32 %v284, %v330
  %v341 = vsub.f32 %v285, %v332
  %v342 = vsub.f32 %v286, %v334
  %343 = vst [vmem:[%s3] sm:$0xff] %v335
  %344 = vst [vmem:[%s3 + $0x8] sm:$0xff] %v336
  %345 = vst [vmem:[%s3 + $0x10] sm:$0xff] %v337
  %346 = vst [vmem:[%s3 + $0x18] sm:$0xff] %v338
  %347 = vst [vmem:[%s3 + $0x20] sm:$0xff] %v339
  %348 = vst [vmem:[%s3 + $0x28] sm:$0xff] %v340
  %349 = vst [vmem:[%s3 + $0x30] sm:$0xff] %v341
  %350 = vst [vmem:[%s3 + $0x38] sm:$0xff] %v342
  // Predicated region
  $region14: #{blstm_forward.5} parent=0 // pred_check
    _
  $region15: #{blstm_forward.5} parent=0 // pred_check_branch
    %352 = sbr.rel (0) target = $region17
  $region16: #{blstm_forward.5} parent=0 // pred_region
    _
  $region17: #{blstm_forward.5} parent=0 // pred_fallthru
    _
  // Predicated region
  $region18: #{blstm_forward.5} parent=0 // pred_check
    _
  $region19: #{blstm_forward.5} parent=0 // pred_check_branch
    %354 = sbr.rel (0) target = $region21
  $region20: #{blstm_forward.5} parent=0 // pred_region
    _
  $region21: #{blstm_forward.5} parent=0 // pred_fallthru
    _

// kernel: blstm_forward.3
$region0: #{blstm_forward.3}
  #allocation0 [shape = 'u32[]', space=smem, size = 0x4, offset = 0x4, fixed_abs, tag = 'smem constant byte address 0x4 - core index']
  #allocation1 [shape = 'u32[144,128]{1,0:T(1,128)}', space=vmem, size = 0x12000, scoped, tag = 'internal scratch']
  #allocation2 [shape = 'f32[8,128]{1,0:T(8,128)}', space=vmem, size = 0x1000, scoped, tag = 'scratch operand']
  #allocation3 [shape = 'f32[8,128]{1,0:T(8,128)}', space=vmem, size = 0x1000, scoped, tag = 'scratch operand']
  #allocation4 [shape = 'f32[4,8,512]{2,1,0:T(8,128)}', space=vmem, size = 0x10000, scoped, tag = 'scratch operand']
  #allocation5 [shape = 'f32[4,8,128]{2,1,0:T(8,128)}', space=vmem, size = 0x4000, scoped, tag = 'scratch operand']
  %s0 = inlined_call_operand.vmem [shape: bf16[64,6], index: 0, kind: input, shape index: {}]
  %s1 = inlined_call_operand.vmem [shape: bf16[2,6,512], index: 1, kind: input, shape index: {}]
  %s2 = inlined_call_operand.vmem [shape: bf16[2,128,512], index: 2, kind: input, shape index: {}]
  %s3 = inlined_call_operand.vmem [shape: f32[2,1,512], index: 3, kind: input, shape index: {}]
  %s4 = inlined_call_operand.vmem [shape: bf16[8,8,256], index: 4, kind: output, shape index: {0}]
  %s5 = inlined_call_operand.vmem [shape: f32[1,256], index: 5, kind: output, shape index: {1}]
  %s6 = inlined_call_operand.vmem [shape: f32[1,256], index: 6, kind: output, shape index: {2}]
  %7 = xla_tuple %s4, %s5, %s6
  %s8 = sld [smem:[#allocation0]]
  $region106: #{blstm_forward.3} parent=0
    _
  %s10 = ssub.s32 1, %s8
  %s11 = scalar_select 0, %s10, %s8
  $region1: #{blstm_forward.3} parent=0
    #allocation6 [shape = 'u8[16384]{0}', space=vmem, size = 0x4000, scoped, tag = 'output window, operand 0']
    loop: start=0, step=1, limit=6
    $region2: #{blstm_forward.3} parent=1 // loop_pre_header
      _
    $region3: #{blstm_forward.3} parent=1 // loop_header
      %s13 = sphi 0, %s17
      %p14 = scmp.ge.s32.totalorder %s13, 6
      %s20 = sphi 0, %s32
      %s21 = sphi 0, %s28
      %s22 = sphi 0, %s20
      %s23 = sphi 0, %s21
      %s24 = sphi 0, %s22
      %s25 = sphi 0, %s23
      %s43 = sphi 0, %s45
      %s46 = sphi 0, %s43
      %s47 = sphi 0, %s46
      %s63 = sphi 0, %s47
      %s69 = sphi 0, %s71
      %s72 = sphi 0, %s69
      %s73 = sphi 0, %s72
      %s89 = sphi 0, %s73
      %s95 = sphi 0, %s97
      %s98 = sphi 0, %s95
      %s99 = sphi 0, %s98
      %s115 = sphi 0, %s99
      %s121 = sphi 0, %s123
      %s124 = sphi 0, %s121
      %s125 = sphi 0, %s124
      %s141 = sphi 0, %s125
      %s157 = sphi 0, %s159
      %s160 = sphi 0, %s157
      %s161 = sphi 0, %s160
      %s177 = sphi 0, %s161
      %s183 = sphi 0, %s185
      %s186 = sphi 0, %s183
      %s187 = sphi 0, %s186
      %s203 = sphi 0, %s187
      %s209 = sphi 0, %s211
      %s212 = sphi 0, %s209
      %s213 = sphi 0, %s212
      %s229 = sphi 0, %s213
    $region4: #{blstm_forward.3} parent=1 // loop_header_branch
      %16 = sbr.rel (%p14) target = $region8
    $region5: #{blstm_forward.3} parent=1 // loop_body
      %s18 = ssub.s32 %s13, 1
      %s19 = ssub.s32 %s13, 2
      %s26 = sadd.s32 1, %s21
      %p27 = scmp.ge.s32.totalorder %s26, 2
      %s28 = scalar_select %p27, 0, %s26
      %s29 = sadd.s32 1, %s20
      %s30 = scalar_select %p27, %s29, %s20
      %p31 = scmp.ge.s32.totalorder %s30, 2
      %s32 = scalar_select %p31, 0, %s30
      %s33 = smul.u32 %s21, 2
      %s34 = ssub.s32 1, %s33
      %s35 = smul.u32 %s20, %s34
      %s36 = sadd.s32 %s21, %s35
      %s37 = smul.u32 %s28, 2
      %s38 = ssub.s32 1, %s37
      %s39 = smul.u32 %s32, %s38
      %s40 = sadd.s32 %s28, %s39
      %s41 = ssub.s32 %s36, %s40
      %p42 = scmp.eq.s32.totalorder %s41, 0
      %s44 = sadd.s32 %s43, 1
      %s45 = scalar_select %p42, %s43, %s44
      %p48 = pneg %p42
      %p49 = scmp.eq.s32.totalorder %s13, 3
      %p50 = por %p48, %p49
      %p51 = scmp.ne.s32.totalorder %s43, %s46
      %p52 = scmp.eq.s32.totalorder %s13, 0
      %p53 = por %p51, %p52
      %p54 = scmp.ne.s32.totalorder %s43, %s46
      %p55 = scmp.eq.s32.totalorder %s18, 3
      %p56 = por %p54, %p55
      %p57 = scmp.ne.s32.totalorder %s46, %s47
      %p58 = scmp.eq.s32.totalorder %s18, 0
      %p59 = por %p57, %p58
      %p60 = scmp.ne.s32.totalorder %s46, %s47
      %p61 = scmp.eq.s32.totalorder %s19, 3
      %p62 = por %p60, %p61
      %p64 = scmp.ne.s32.totalorder %s47, %s63
      %p65 = scmp.eq.s32.totalorder %s19, 0
      %p66 = por %p64, %p65
      %s67 = ssub.s32 %s20, %s32
      %p68 = scmp.eq.s32.totalorder %s67, 0
      %s70 = sadd.s32 %s69, 1
      %s71 = scalar_select %p68, %s69, %s70
      %p74 = pneg %p68
      %p75 = scmp.eq.s32.totalorder %s13, 3
      %p76 = por %p74, %p75
      %p77 = scmp.ne.s32.totalorder %s69, %s72
      %p78 = scmp.eq.s32.totalorder %s13, 0
      %p79 = por %p77, %p78
      %p80 = scmp.ne.s32.totalorder %s69, %s72
      %p81 = scmp.eq.s32.totalorder %s18, 3
      %p82 = por %p80, %p81
      %p83 = scmp.ne.s32.totalorder %s72, %s73
      %p84 = scmp.eq.s32.totalorder %s18, 0
      %p85 = por %p83, %p84
      %p86 = scmp.ne.s32.totalorder %s72, %s73
      %p87 = scmp.eq.s32.totalorder %s19, 3
      %p88 = por %p86, %p87
      %p90 = scmp.ne.s32.totalorder %s73, %s89
      %p91 = scmp.eq.s32.totalorder %s19, 0
      %p92 = por %p90, %p91
      %s93 = ssub.s32 %s20, %s32
      %p94 = scmp.eq.s32.totalorder %s93, 0
      %s96 = sadd.s32 %s95, 1
      %s97 = scalar_select %p94, %s95, %s96
      %p100 = pneg %p94
      %p101 = scmp.eq.s32.totalorder %s13, 3
      %p102 = por %p100, %p101
      %p103 = scmp.ne.s32.totalorder %s95, %s98
      %p104 = scmp.eq.s32.totalorder %s13, 0
      %p105 = por %p103, %p104
      %p106 = scmp.ne.s32.totalorder %s95, %s98
      %p107 = scmp.eq.s32.totalorder %s18, 3
      %p108 = por %p106, %p107
      %p109 = scmp.ne.s32.totalorder %s98, %s99
      %p110 = scmp.eq.s32.totalorder %s18, 0
      %p111 = por %p109, %p110
      %p112 = scmp.ne.s32.totalorder %s98, %s99
      %p113 = scmp.eq.s32.totalorder %s19, 3
      %p114 = por %p112, %p113
      %p116 = scmp.ne.s32.totalorder %s99, %s115
      %p117 = scmp.eq.s32.totalorder %s19, 0
      %p118 = por %p116, %p117
      %s119 = ssub.s32 %s20, %s32
      %p120 = scmp.eq.s32.totalorder %s119, 0
      %s122 = sadd.s32 %s121, 1
      %s123 = scalar_select %p120, %s121, %s122
      %p126 = pneg %p120
      %p127 = scmp.eq.s32.totalorder %s13, 3
      %p128 = por %p126, %p127
      %p129 = scmp.ne.s32.totalorder %s121, %s124
      %p130 = scmp.eq.s32.totalorder %s13, 0
      %p131 = por %p129, %p130
      %p132 = scmp.ne.s32.totalorder %s121, %s124
      %p133 = scmp.eq.s32.totalorder %s18, 3
      %p134 = por %p132, %p133
      %p135 = scmp.ne.s32.totalorder %s124, %s125
      %p136 = scmp.eq.s32.totalorder %s18, 0
      %p137 = por %p135, %p136
      %p138 = scmp.ne.s32.totalorder %s124, %s125
      %p139 = scmp.eq.s32.totalorder %s19, 3
      %p140 = por %p138, %p139
      %p142 = scmp.ne.s32.totalorder %s125, %s141
      %p143 = scmp.eq.s32.totalorder %s19, 0
      %p144 = por %p142, %p143
      %s145 = smul.u32 %s21, 2
      %s146 = ssub.s32 1, %s145
      %s147 = smul.u32 %s20, %s146
      %s148 = sadd.s32 %s21, %s147
      %s149 = smul.u32 %s28, 2
      %s150 = ssub.s32 1, %s149
      %s151 = smul.u32 %s32, %s150
      %s152 = sadd.s32 %s28, %s151
      %s153 = ssub.s32 %s148, %s152
      %s154 = ssub.s32 %s20, %s32
      %s155 = sor.u32 %s153, %s154
      %p156 = scmp.eq.s32.totalorder %s155, 0
      %s158 = sadd.s32 %s157, 1
      %s159 = scalar_select %p156, %s157, %s158
      %p162 = pneg %p156
      %p163 = scmp.eq.s32.totalorder %s13, 3
      %p164 = por %p162, %p163
      %p165 = scmp.ne.s32.totalorder %s157, %s160
      %p166 = scmp.eq.s32.totalorder %s13, 0
      %p167 = por %p165, %p166
      %p168 = scmp.ne.s32.totalorder %s157, %s160
      %p169 = scmp.eq.s32.totalorder %s18, 3
      %p170 = por %p168, %p169
      %p171 = scmp.ne.s32.totalorder %s160, %s161
      %p172 = scmp.eq.s32.totalorder %s18, 0
      %p173 = por %p171, %p172
      %p174 = scmp.ne.s32.totalorder %s160, %s161
      %p175 = scmp.eq.s32.totalorder %s19, 3
      %p176 = por %p174, %p175
      %p178 = scmp.ne.s32.totalorder %s161, %s177
      %p179 = scmp.eq.s32.totalorder %s19, 0
      %p180 = por %p178, %p179
      %s181 = ssub.s32 %s20, %s32
      %p182 = scmp.eq.s32.totalorder %s181, 0
      %s184 = sadd.s32 %s183, 1
      %s185 = scalar_select %p182, %s183, %s184
      %p188 = pneg %p182
      %p189 = scmp.eq.s32.totalorder %s13, 3
      %p190 = por %p188, %p189
      %p191 = scmp.ne.s32.totalorder %s183, %s186
      %p192 = scmp.eq.s32.totalorder %s13, 0
      %p193 = por %p191, %p192
      %p194 = scmp.ne.s32.totalorder %s183, %s186
      %p195 = scmp.eq.s32.totalorder %s18, 3
      %p196 = por %p194, %p195
      %p197 = scmp.ne.s32.totalorder %s186, %s187
      %p198 = scmp.eq.s32.totalorder %s18, 0
      %p199 = por %p197, %p198
      %p200 = scmp.ne.s32.totalorder %s186, %s187
      %p201 = scmp.eq.s32.totalorder %s19, 3
      %p202 = por %p200, %p201
      %p204 = scmp.ne.s32.totalorder %s187, %s203
      %p205 = scmp.eq.s32.totalorder %s19, 0
      %p206 = por %p204, %p205
      %s207 = ssub.s32 %s20, %s32
      %p208 = scmp.eq.s32.totalorder %s207, 0
      %s210 = sadd.s32 %s209, 1
      %s211 = scalar_select %p208, %s209, %s210
      %p214 = pneg %p208
      %p215 = scmp.eq.s32.totalorder %s13, 3
      %p216 = por %p214, %p215
      %p217 = scmp.ne.s32.totalorder %s209, %s212
      %p218 = scmp.eq.s32.totalorder %s13, 0
      %p219 = por %p217, %p218
      %p220 = scmp.ne.s32.totalorder %s209, %s212
      %p221 = scmp.eq.s32.totalorder %s18, 3
      %p222 = por %p220, %p221
      %p223 = scmp.ne.s32.totalorder %s212, %s213
      %p224 = scmp.eq.s32.totalorder %s18, 0
      %p225 = por %p223, %p224
      %p226 = scmp.ne.s32.totalorder %s212, %s213
      %p227 = scmp.eq.s32.totalorder %s19, 3
      %p228 = por %p226, %p227
      %p230 = scmp.ne.s32.totalorder %s213, %s229
      %p231 = scmp.eq.s32.totalorder %s19, 0
      %p232 = por %p230, %p231
      %p233 = scmp.le.s32.totalorder 1, %s13
      %p234 = scmp.lt.s32.totalorder %s13, 5
      %p235 = pnand %p233, %p234
      %p236 = pneg %p235
      // Predicated region
      $region9: #{blstm_forward.3} parent=5 // pred_check
        _
      $region10: #{blstm_forward.3} parent=5 // pred_check_branch
        %238 = sbr.rel (%p235) target = $region12
      $region11: #{blstm_forward.3} parent=5 // pred_region
        %s239 = ssub.s32 %s13, 1
        // Predicated region
        $region13: #{blstm_forward.3} parent=11 // pred_check
          %p240 = pneg %p85
        $region14: #{blstm_forward.3} parent=11 // pred_check_branch
          %242 = sbr.rel (%p240) target = $region16
        $region15: #{blstm_forward.3} parent=11 // pred_region
          %p243 = scmp.lt.s32.totalorder %s22, 1
          %s244 = scalar_select %p243, %s22, 1
          %s245 = smul.addr %s244, 4
          %s246 = smul.addr %s245, 4
          %s247 = scalar_lea.vmem %s1, %s246
        $region16: #{blstm_forward.3} parent=11 // pred_fallthru
          _
        // Predicated region
        $region17: #{blstm_forward.3} parent=11 // pred_check
          %p248 = pneg %p111
        $region18: #{blstm_forward.3} parent=11 // pred_check_branch
          %250 = sbr.rel (%p248) target = $region20
        $region19: #{blstm_forward.3} parent=11 // pred_region
          %p251 = scmp.lt.s32.totalorder %s22, 1
          %s252 = scalar_select %p251, %s22, 1
          %s253 = smul.addr %s252, 64
          %s254 = smul.addr %s253, 4
          %s255 = scalar_lea.vmem %s2, %s254
        $region20: #{blstm_forward.3} parent=11 // pred_fallthru
          _
        // Predicated region
        $region21: #{blstm_forward.3} parent=11 // pred_check
          %p256 = pneg %p137
        $region22: #{blstm_forward.3} parent=11 // pred_check_branch
          %258 = sbr.rel (%p256) target = $region24
        $region23: #{blstm_forward.3} parent=11 // pred_region
          %p259 = scmp.lt.s32.totalorder %s22, 1
          %s260 = scalar_select %p259, %s22, 1
          %s261 = smul.addr %s260, 4
          %s262 = scalar_lea.vmem %s3, %s261
        $region24: #{blstm_forward.3} parent=11 // pred_fallthru
          _
      $region12: #{blstm_forward.3} parent=5 // pred_fallthru
        _
      %p263 = scmp.lt.s32.totalorder %s13, 4
      // Predicated region
      $region25: #{blstm_forward.3} parent=5 // pred_check
        %p264 = pneg %p263
      $region26: #{blstm_forward.3} parent=5 // pred_check_branch
        %266 = sbr.rel (%p264) target = $region28
      $region27: #{blstm_forward.3} parent=5 // pred_region
        // Predicated region
        $region29: #{blstm_forward.3} parent=27 // pred_check
          %p267 = pneg %p53
        $region30: #{blstm_forward.3} parent=27 // pred_check_branch
          %269 = sbr.rel (%p267) target = $region32
        $region31: #{blstm_forward.3} parent=27 // pred_region
          %s270 = smul.u32 %s21, 2
          %s271 = ssub.s32 1, %s270
          %s272 = smul.u32 %s20, %s271
          %s273 = sadd.s32 %s21, %s272
          %s274 = smul.u32 4, %s273
          %p275 = scmp.lt.s32.totalorder %s274, 7
          %s276 = scalar_select %p275, %s274, 7
          %s277 = smul.addr %s276, 4
          %s278 = scalar_lea.vmem %s0, %s277
          %s279 = smul.u32 %s21, 2
          %s280 = ssub.s32 1, %s279
          %s281 = smul.u32 %s20, %s280
          %s282 = sadd.s32 %s21, %s281
          %s283 = smul.u32 4, %s282
        $region32: #{blstm_forward.3} parent=27 // pred_fallthru
          _
      $region28: #{blstm_forward.3} parent=5 // pred_fallthru
        _
      %p284 = scmp.le.s32.totalorder 1, %s13
      %p285 = scmp.lt.s32.totalorder %s13, 5
      %p286 = pnand %p284, %p285
      %p287 = pneg %p286
      // Predicated region
      $region33: #{blstm_forward.3} parent=5 // pred_check
        _
      $region34: #{blstm_forward.3} parent=5 // pred_check_branch
        %289 = sbr.rel (%p286) target = $region36
      $region35: #{blstm_forward.3} parent=5 // pred_region
        %s290 = ssub.s32 %s13, 1
        %s291 = smul.u32 %s23, 2
        %s292 = ssub.s32 1, %s291
        %s293 = smul.u32 %s22, %s292
        %s294 = sadd.s32 %s23, %s293
        %s295 = smul.u32 4, %s294
        %p296 = scmp.lt.s32.totalorder %s295, 7
        %s297 = scalar_select %p296, %s295, 7
        %s298 = smul.addr %s297, 4
        %s299 = scalar_lea.vmem %s0, %s298
        %p300 = pneg %p59
        %p301 = pneg %p56
        %p302 = scmp.lt.s32.totalorder %s22, 1
        %s303 = scalar_select %p302, %s22, 1
        %s304 = smul.addr %s303, 4
        %s305 = smul.addr %s304, 4
        %s306 = scalar_lea.vmem %s1, %s305
        %p307 = pneg %p85
        %p308 = pneg %p82
        %p309 = scmp.lt.s32.totalorder %s22, 1
        %s310 = scalar_select %p309, %s22, 1
        %s311 = smul.addr %s310, 64
        %s312 = smul.addr %s311, 4
        %s313 = scalar_lea.vmem %s2, %s312
        %p314 = pneg %p111
        %p315 = pneg %p108
        %p316 = scmp.lt.s32.totalorder %s22, 1
        %s317 = scalar_select %p316, %s22, 1
        %s318 = smul.addr %s317, 4
        %s319 = scalar_lea.vmem %s3, %s318
        %p320 = pneg %p137
        %p321 = pneg %p134
        %p322 = pneg %p173
        %p323 = pneg %p170
        %s324 = sand.u32 %s160, 1
        %s325 = sand.u32 %s160, 1
        %s326 = smul.addr %s325, 16
        %s327 = scalar_lea.vmem [#allocation6], %s326
        %p328 = pneg %p199
        %p329 = pneg %p196
        %p330 = scmp.lt.s32.totalorder %s22, 1
        %s331 = scalar_select %p330, %s22, 1
        %s332 = scalar_lea.vmem %s5, %s331
        %p333 = pneg %p225
        %p334 = pneg %p222
        %p335 = scmp.lt.s32.totalorder %s22, 1
        %s336 = scalar_select %p335, %s22, 1
        %s337 = scalar_lea.vmem %s6, %s336
        %s338 = smul.u32 %s23, 2
        %s339 = ssub.s32 1, %s338
        %s340 = smul.u32 %s22, %s339
        %s341 = sadd.s32 %s23, %s340
        %s342 = smul.u32 4, %s341
        %p343 = scmp.lt.s32.totalorder %s342, 7
        %s344 = scalar_select %p343, %s342, 7
        %s345 = smul.addr %s344, 4
        %s346 = scalar_lea.vmem %s0, %s345
        %s347 = smul.u32 %s23, 2
        %s348 = ssub.s32 1, %s347
        %s349 = smul.u32 %s22, %s348
        %s350 = sadd.s32 %s23, %s349
        %s351 = smul.u32 4, %s350
        %p352 = scmp.lt.s32.totalorder %s22, 1
        %s353 = scalar_select %p352, %s22, 1
        %s354 = smul.addr %s353, 4
        %s355 = smul.addr %s354, 4
        %s356 = scalar_lea.vmem %s1, %s355
        %p357 = scmp.lt.s32.totalorder %s22, 1
        %s358 = scalar_select %p357, %s22, 1
        %s359 = smul.addr %s358, 64
        %s360 = smul.addr %s359, 4
        %s361 = scalar_lea.vmem %s2, %s360
        %p362 = scmp.lt.s32.totalorder %s22, 1
        %s363 = scalar_select %p362, %s22, 1
        %s364 = smul.addr %s363, 4
        %s365 = scalar_lea.vmem %s3, %s364
        %s366 = smul.u32 %s23, 2
        %s367 = ssub.s32 1, %s366
        %s368 = smul.u32 %s22, %s367
        %s369 = sadd.s32 %s23, %s368
        %s370 = smul.u32 4, %s369
        %p371 = scmp.lt.s32.totalorder %s22, 1
        %s372 = scalar_select %p371, %s22, 1
        %s373 = scalar_lea.vmem %s5, %s372
        %p374 = scmp.lt.s32.totalorder %s22, 1
        %s375 = scalar_select %p374, %s22, 1
        %s376 = scalar_lea.vmem %s6, %s375
        %p378 = scmp.eq.s32.totalorder %s23, 0
        // Predicated region
        $region37: #{blstm_forward.3} parent=35 // pred_check
          %p379 = pneg %p378
        $region38: #{blstm_forward.3} parent=35 // pred_check_branch
          %381 = sbr.rel (%p379) target = $region40
        $region39: #{blstm_forward.3} parent=35 // pred_region
          %382 = vst [vmem:[#allocation2] sm:$0xff] 0.0
          %383 = vst [vmem:[#allocation3] sm:$0xff] 0.0
          %384 = vst [vmem:[%s373] sm:$0x1] 0.0
          %385 = vst [vmem:[%s376] sm:$0x1] 0.0
        $region40: #{blstm_forward.3} parent=35 // pred_fallthru
          _
        %v386 = vld [vmem:[%s346] sm:$0xf]
        %v387 = vld [vmem:[%s346 + $0x4] sm:$0xf]
        %v388 = vld [vmem:[%s346 + $0x8] sm:$0xf]
        %v389 = vld [vmem:[%s346 + $0xc] sm:$0xf]
        %v390 = vld [vmem:[%s356] sm:$0x77]
        %v391 = vld [vmem:[%s356 + $0x8] sm:$0x77]
        %v392 = vld [vmem:[%s365] sm:$0xf]
        %v394 = vlaneseq
        %v395 = vshrl.u32 %v394, 7
        %v396 = vsub.s32 0, %v395
        %v397 = vrot.slane %v392, %v396
        %v398 = vlaneseq
        %v399 = vshrl.u32 %v398, 7
        %v400 = vsub.s32 1, %v399
        %v401 = vrot.slane %v392, %v400
        %v402 = vlaneseq
        %v403 = vshrl.u32 %v402, 7
        %v404 = vsub.s32 2, %v403
        %v405 = vrot.slane %v392, %v404
        %v406 = vlaneseq
        %v407 = vshrl.u32 %v406, 7
        %v408 = vsub.s32 3, %v407
        %v409 = vrot.slane %v392, %v408
        %v418 = vunpack.c.l.b16 %v386
        %v419 = vunpack.c.l.b16 %v387
        %v420 = vunpack.c.l.b16 %v388
        %v421 = vunpack.c.l.b16 %v389
        %v422 = vpack.c.b16 %v419, %v418
        %v423 = vpack.c.b16 %v421, %v420
        %v426 = vunpack.c.l.b16 %v390
        %v427 = vunpack.c.h.b16 %v390
        %v428 = vunpack.c.l.b16 %v391
        %v429 = vunpack.c.h.b16 %v391
        %v430 = vpack.c.b16 %v426, %v426
        %v431 = vpack.c.b16 %v427, %v427
        %v432 = vpack.c.b16 %v428, %v428
        %v433 = vpack.c.b16 %v429, %v429
        %vm434 = vcmask 48128
        %v436 = vsel %vm434, %v422, 0
        %v439 = vsel %vm434, %v423, 0
        %vm441 = vcmask 1042432
        %v443 = vsel %vm441, %v430, 0
        %v446 = vsel %vm441, %v431, 0
        %v449 = vsel %vm441, %v432, 0
        %v452 = vsel %vm441, %v433, 0
        %454 = vmatprep.subr.bf16.mxu0 %v446
        %455 = vmatpush1.bf16.msra.mxu0 %v443
        %456 = vmatprep.subr.bf16.mxu0 0
        %457 = vmatpush1.bf16.msra.mxu0 0
        %458 = vmatprep.subr.bf16.mxu0 0
        %459 = vmatpush1.bf16.msra.mxu0 0
        %460 = vmatprep.subr.bf16.mxu0 0
        %461 = vmatpush1.bf16.msra.mxu0 0
        %462 = vmatprep.subr.bf16.mxu0 0
        %463 = vmatpush1.bf16.msra.mxu0 0
        %464 = vmatprep.subr.bf16.mxu0 0
        %465 = vmatpush1.bf16.msra.mxu0 0
        %466 = vmatprep.subr.bf16.mxu0 0
        %467 = vmatpush1.bf16.msra.mxu0 0
        %468 = vmatprep.subr.bf16.mxu0 0
        %469 = vmatpush1.bf16.msra.mxu0 0
        %470 = vmatprep.subr.bf16.mxu0 0
        %471 = vmatpush1.bf16.msra.mxu0 0
        %472 = vmatprep.subr.bf16.mxu0 0
        %473 = vmatpush1.bf16.msra.mxu0 0
        %474 = vmatprep.subr.bf16.mxu0 0
        %475 = vmatpush1.bf16.msra.mxu0 0
        %476 = vmatprep.subr.bf16.mxu0 0
        %477 = vmatpush1.bf16.msra.mxu0 0
        %478 = vmatprep.subr.bf16.mxu0 0
        %479 = vmatpush1.bf16.msra.mxu0 0
        %480 = vmatprep.subr.bf16.mxu0 0
        %481 = vmatpush1.bf16.msra.mxu0 0
        %482 = vmatprep.subr.bf16.mxu0 0
        %483 = vmatpush1.bf16.msra.mxu0 0
        %484 = vmatprep.subr.bf16.mxu0 0
        %485 = vmatpush1.bf16.msra.mxu0 0
        %486 = vmatprep.mubr.bf16.mxu0 0
        %487 = vmatmul.mubr.bf16.gmra.mrb[0].mxu0 %v436
        %v488 = vpop.f32.mrb[0].mxu0
        %v489 = vadd.f32 %v397, %v488
        %v490 = vpop.f32.mrb[0].mxu0
        %v491 = vadd.f32 %v401, %v490
        %v492 = vpop.f32.mrb[0].mxu0
        %v493 = vadd.f32 %v397, %v492
        %v494 = vpop.f32.mrb[0].mxu0
        %v495 = vadd.f32 %v401, %v494
        %496 = vmatprep.mubr.bf16.mxu0 0
        %497 = vmatmul.mubr.bf16.gmra.mrb[0].mxu0 %v439
        %v498 = vpop.f32.mrb[0].mxu0
        %v499 = vadd.f32 %v397, %v498
        %v500 = vpop.f32.mrb[0].mxu0
        %v501 = vadd.f32 %v401, %v500
        %v502 = vpop.f32.mrb[0].mxu0
        %v503 = vadd.f32 %v397, %v502
        %v504 = vpop.f32.mrb[0].mxu0
        %v505 = vadd.f32 %v401, %v504
        %506 = vdwg.mxu0
        %507 = vmatprep.subr.bf16.mxu0 %v452
        %508 = vmatpush1.bf16.msra.mxu0 %v449
        %509 = vmatprep.subr.bf16.mxu0 0
        %510 = vmatpush1.bf16.msra.mxu0 0
        %511 = vmatprep.subr.bf16.mxu0 0
        %512 = vmatpush1.bf16.msra.mxu0 0
        %513 = vmatprep.subr.bf16.mxu0 0
        %514 = vmatpush1.bf16.msra.mxu0 0
        %515 = vmatprep.subr.bf16.mxu0 0
        %516 = vmatpush1.bf16.msra.mxu0 0
        %517 = vmatprep.subr.bf16.mxu0 0
        %518 = vmatpush1.bf16.msra.mxu0 0
        %519 = vmatprep.subr.bf16.mxu0 0
        %520 = vmatpush1.bf16.msra.mxu0 0
        %521 = vmatprep.subr.bf16.mxu0 0
        %522 = vmatpush1.bf16.msra.mxu0 0
        %523 = vmatprep.subr.bf16.mxu0 0
        %524 = vmatpush1.bf16.msra.mxu0 0
        %525 = vmatprep.subr.bf16.mxu0 0
        %526 = vmatpush1.bf16.msra.mxu0 0
        %527 = vmatprep.subr.bf16.mxu0 0
        %528 = vmatpush1.bf16.msra.mxu0 0
        %529 = vmatprep.subr.bf16.mxu0 0
        %530 = vmatpush1.bf16.msra.mxu0 0
        %531 = vmatprep.subr.bf16.mxu0 0
        %532 = vmatpush1.bf16.msra.mxu0 0
        %533 = vmatprep.subr.bf16.mxu0 0
        %534 = vmatpush1.bf16.msra.mxu0 0
        %535 = vmatprep.subr.bf16.mxu0 0
        %536 = vmatpush1.bf16.msra.mxu0 0
        %537 = vmatprep.subr.bf16.mxu0 0
        %538 = vmatpush1.bf16.msra.mxu0 0
        %539 = vmatprep.mubr.bf16.mxu0 0
        %540 = vmatmul.mubr.bf16.gmra.mrb[0].mxu0 %v436
        %v541 = vpop.f32.mrb[0].mxu0
        %v542 = vadd.f32 %v405, %v541
        %v543 = vpop.f32.mrb[0].mxu0
        %v544 = vadd.f32 %v409, %v543
        %v545 = vpop.f32.mrb[0].mxu0
        %v546 = vadd.f32 %v405, %v545
        %v547 = vpop.f32.mrb[0].mxu0
        %v548 = vadd.f32 %v409, %v547
        %549 = vmatprep.mubr.bf16.mxu0 0
        %550 = vmatmul.mubr.bf16.gmra.mrb[0].mxu0 %v439
        %v551 = vpop.f32.mrb[0].mxu0
        %v552 = vadd.f32 %v405, %v551
        %v553 = vpop.f32.mrb[0].mxu0
        %v554 = vadd.f32 %v409, %v553
        %v555 = vpop.f32.mrb[0].mxu0
        %v556 = vadd.f32 %v405, %v555
        %v557 = vpop.f32.mrb[0].mxu0
        %v558 = vadd.f32 %v409, %v557
        %559 = vdwg.mxu0
        %560 = vst [vmem:[#allocation4] sm:$0xff] %v489
        %561 = vst [vmem:[#allocation4 + $0x8] sm:$0xff] %v491
        %562 = vst [vmem:[#allocation4 + $0x10] sm:$0xff] %v542
        %563 = vst [vmem:[#allocation4 + $0x18] sm:$0xff] %v544
        %564 = vst [vmem:[#allocation4 + $0x20] sm:$0xff] %v493
        %565 = vst [vmem:[#allocation4 + $0x28] sm:$0xff] %v495
        %566 = vst [vmem:[#allocation4 + $0x30] sm:$0xff] %v546
        %567 = vst [vmem:[#allocation4 + $0x38] sm:$0xff] %v548
        %568 = vst [vmem:[#allocation4 + $0x40] sm:$0xff] %v499
        %569 = vst [vmem:[#allocation4 + $0x48] sm:$0xff] %v501
        %570 = vst [vmem:[#allocation4 + $0x50] sm:$0xff] %v552
        %571 = vst [vmem:[#allocation4 + $0x58] sm:$0xff] %v554
        %572 = vst [vmem:[#allocation4 + $0x60] sm:$0xff] %v503
        %573 = vst [vmem:[#allocation4 + $0x68] sm:$0xff] %v505
        %574 = vst [vmem:[#allocation4 + $0x70] sm:$0xff] %v556
        %575 = vst [vmem:[#allocation4 + $0x78] sm:$0xff] %v558
        %s576 = smul.u32 %s22, 3
        %s577 = smul.u32 %s22, 2
        %s578 = ssub.s32 1, %s577
        %v579 = vld [vmem:[#allocation2] sm:$0xff]
        %v580 = vld [vmem:[#allocation3] sm:$0xff]
        %s581 = smul.u32 %s576, 4
        %s582 = smul.addr %s581, 8
        %s583 = scalar_lea.vmem [#allocation4], %s582
        %v584 = vld [vmem:[%s583] sm:$0xff]
        %v585 = vld [vmem:[%s583 + $0x8] sm:$0xff]
        %v586 = vld [vmem:[%s583 + $0x10] sm:$0xff]
        %v587 = vld [vmem:[%s583 + $0x18] sm:$0xff]
        %v588 = vpack.c.bf16 %v579, %v579
        %v589 = vld [vmem:[%s361] sm:$0xff]
        %v590 = vld [vmem:[%s361 + $0x8] sm:$0xff]
        %v591 = vld [vmem:[%s361 + $0x10] sm:$0xff]
        %v592 = vld [vmem:[%s361 + $0x18] sm:$0xff]
        %v593 = vld [vmem:[%s361 + $0x20] sm:$0xff]
        %v594 = vld [vmem:[%s361 + $0x28] sm:$0xff]
        %v595 = vld [vmem:[%s361 + $0x30] sm:$0xff]
        %v596 = vld [vmem:[%s361 + $0x38] sm:$0xff]
        %v597 = vld [vmem:[%s361 + $0x40] sm:$0xff]
        %v598 = vld [vmem:[%s361 + $0x48] sm:$0xff]
        %v599 = vld [vmem:[%s361 + $0x50] sm:$0xff]
        %v600 = vld [vmem:[%s361 + $0x58] sm:$0xff]
        %v601 = vld [vmem:[%s361 + $0x60] sm:$0xff]
        %v602 = vld [vmem:[%s361 + $0x68] sm:$0xff]
        %v603 = vld [vmem:[%s361 + $0x70] sm:$0xff]
        %v604 = vld [vmem:[%s361 + $0x78] sm:$0xff]
        %v605 = vld [vmem:[%s361 + $0x80] sm:$0xff]
        %v606 = vld [vmem:[%s361 + $0x88] sm:$0xff]
        %v607 = vld [vmem:[%s361 + $0x90] sm:$0xff]
        %v608 = vld [vmem:[%s361 + $0x98] sm:$0xff]
        %v609 = vld [vmem:[%s361 + $0xa0] sm:$0xff]
        %v610 = vld [vmem:[%s361 + $0xa8] sm:$0xff]
        %v611 = vld [vmem:[%s361 + $0xb0] sm:$0xff]
        %v612 = vld [vmem:[%s361 + $0xb8] sm:$0xff]
        %v613 = vld [vmem:[%s361 + $0xc0] sm:$0xff]
        %v614 = vld [vmem:[%s361 + $0xc8] sm:$0xff]
        %v615 = vld [vmem:[%s361 + $0xd0] sm:$0xff]
        %v616 = vld [vmem:[%s361 + $0xd8] sm:$0xff]
        %v617 = vld [vmem:[%s361 + $0xe0] sm:$0xff]
        %v618 = vld [vmem:[%s361 + $0xe8] sm:$0xff]
        %v619 = vld [vmem:[%s361 + $0xf0] sm:$0xff]
        %v620 = vld [vmem:[%s361 + $0xf8] sm:$0xff]
        %v653 = vunpack.c.l.b16 %v589
        %v654 = vunpack.c.h.b16 %v589
        %v655 = vunpack.c.l.b16 %v590
        %v656 = vunpack.c.h.b16 %v590
        %v657 = vunpack.c.l.b16 %v591
        %v658 = vunpack.c.h.b16 %v591
        %v659 = vunpack.c.l.b16 %v592
        %v660 = vunpack.c.h.b16 %v592
        %v661 = vunpack.c.l.b16 %v593
        %v662 = vunpack.c.h.b16 %v593
        %v663 = vunpack.c.l.b16 %v594
        %v664 = vunpack.c.h.b16 %v594
        %v665 = vunpack.c.l.b16 %v595
        %v666 = vunpack.c.h.b16 %v595
        %v667 = vunpack.c.l.b16 %v596
        %v668 = vunpack.c.h.b16 %v596
        %v669 = vunpack.c.l.b16 %v597
        %v670 = vunpack.c.h.b16 %v597
        %v671 = vunpack.c.l.b16 %v598
        %v672 = vunpack.c.h.b16 %v598
        %v673 = vunpack.c.l.b16 %v599
        %v674 = vunpack.c.h.b16 %v599
        %v675 = vunpack.c.l.b16 %v600
        %v676 = vunpack.c.h.b16 %v600
        %v677 = vunpack.c.l.b16 %v601
        %v678 = vunpack.c.h.b16 %v601
        %v679 = vunpack.c.l.b16 %v602
        %v680 = vunpack.c.h.b16 %v602
        %v681 = vunpack.c.l.b16 %v603
        %v682 = vunpack.c.h.b16 %v603
        %v683 = vunpack.c.l.b16 %v604
        %v684 = vunpack.c.h.b16 %v604
        %v685 = vunpack.c.l.b16 %v605
        %v686 = vunpack.c.h.b16 %v605
        %v687 = vunpack.c.l.b16 %v606
        %v688 = vunpack.c.h.b16 %v606
        %v689 = vunpack.c.l.b16 %v607
        %v690 = vunpack.c.h.b16 %v607
        %v691 = vunpack.c.l.b16 %v608
        %v692 = vunpack.c.h.b16 %v608
        %v693 = vunpack.c.l.b16 %v609
        %v694 = vunpack.c.h.b16 %v609
        %v695 = vunpack.c.l.b16 %v610
        %v696 = vunpack.c.h.b16 %v610
        %v697 = vunpack.c.l.b16 %v611
        %v698 = vunpack.c.h.b16 %v611
        %v699 = vunpack.c.l.b16 %v612
        %v700 = vunpack.c.h.b16 %v612
        %v701 = vunpack.c.l.b16 %v613
        %v702 = vunpack.c.h.b16 %v613
        %v703 = vunpack.c.l.b16 %v614
        %v704 = vunpack.c.h.b16 %v614
        %v705 = vunpack.c.l.b16 %v615
        %v706 = vunpack.c.h.b16 %v615
        %v707 = vunpack.c.l.b16 %v616
        %v708 = vunpack.c.h.b16 %v616
        %v709 = vunpack.c.l.b16 %v617
        %v710 = vunpack.c.h.b16 %v617
        %v711 = vunpack.c.l.b16 %v618
        %v712 = vunpack.c.h.b16 %v618
        %v713 = vunpack.c.l.b16 %v619
        %v714 = vunpack.c.h.b16 %v619
        %v715 = vunpack.c.l.b16 %v620
        %v716 = vunpack.c.h.b16 %v620
        %v717 = vpack.c.b16 %v657, %v653
        %v718 = vpack.c.b16 %v658, %v654
        %v719 = vpack.c.b16 %v659, %v655
        %v720 = vpack.c.b16 %v660, %v656
        %v721 = vpack.c.b16 %v665, %v661
        %v722 = vpack.c.b16 %v666, %v662
        %v723 = vpack.c.b16 %v667, %v663
        %v724 = vpack.c.b16 %v668, %v664
        %v725 = vpack.c.b16 %v673, %v669
        %v726 = vpack.c.b16 %v674, %v670
        %v727 = vpack.c.b16 %v675, %v671
        %v728 = vpack.c.b16 %v676, %v672
        %v729 = vpack.c.b16 %v681, %v677
        %v730 = vpack.c.b16 %v682, %v678
        %v731 = vpack.c.b16 %v683, %v679
        %v732 = vpack.c.b16 %v684, %v680
        %v733 = vpack.c.b16 %v689, %v685
        %v734 = vpack.c.b16 %v690, %v686
        %v735 = vpack.c.b16 %v691, %v687
        %v736 = vpack.c.b16 %v692, %v688
        %v737 = vpack.c.b16 %v697, %v693
        %v738 = vpack.c.b16 %v698, %v694
        %v739 = vpack.c.b16 %v699, %v695
        %v740 = vpack.c.b16 %v700, %v696
        %v741 = vpack.c.b16 %v705, %v701
        %v742 = vpack.c.b16 %v706, %v702
        %v743 = vpack.c.b16 %v707, %v703
        %v744 = vpack.c.b16 %v708, %v704
        %v745 = vpack.c.b16 %v713, %v709
        %v746 = vpack.c.b16 %v714, %v710
        %v747 = vpack.c.b16 %v715, %v711
        %v748 = vpack.c.b16 %v716, %v712
        %781 = vmatprep.subr.bf16.mxu0 %v718
        %782 = vmatpush1.bf16.msra.mxu0 %v717
        %783 = vmatprep.subr.bf16.mxu0 %v722
        %784 = vmatpush1.bf16.msra.mxu0 %v721
        %785 = vmatprep.subr.bf16.mxu0 %v726
        %786 = vmatpush1.bf16.msra.mxu0 %v725
        %787 = vmatprep.subr.bf16.mxu0 %v730
        %788 = vmatpush1.bf16.msra.mxu0 %v729
        %789 = vmatprep.subr.bf16.mxu0 %v734
        %790 = vmatpush1.bf16.msra.mxu0 %v733
        %791 = vmatprep.subr.bf16.mxu0 %v738
        %792 = vmatpush1.bf16.msra.mxu0 %v737
        %793 = vmatprep.subr.bf16.mxu0 %v742
        %794 = vmatpush1.bf16.msra.mxu0 %v741
        %795 = vmatprep.subr.bf16.mxu0 %v746
        %796 = vmatpush1.bf16.msra.mxu0 %v745
        %797 = vmatprep.subr.bf16.mxu0 0
        %798 = vmatpush1.bf16.msra.mxu0 0
        %799 = vmatprep.subr.bf16.mxu0 0
        %800 = vmatpush1.bf16.msra.mxu0 0
        %801 = vmatprep.subr.bf16.mxu0 0
        %802 = vmatpush1.bf16.msra.mxu0 0
        %803 = vmatprep.subr.bf16.mxu0 0
        %804 = vmatpush1.bf16.msra.mxu0 0
        %805 = vmatprep.subr.bf16.mxu0 0
        %806 = vmatpush1.bf16.msra.mxu0 0
        %807 = vmatprep.subr.bf16.mxu0 0
        %808 = vmatpush1.bf16.msra.mxu0 0
        %809 = vmatprep.subr.bf16.mxu0 0
        %810 = vmatpush1.bf16.msra.mxu0 0
        %811 = vmatprep.subr.bf16.mxu0 0
        %812 = vmatpush1.bf16.msra.mxu0 0
        %813 = vmatprep.mubr.bf16.mxu0 0
        %814 = vmatmul.mubr.bf16.gmra.mrb[0].mxu0 %v588
        %v815 = vpop.f32.mrb[0].mxu0
        %v816 = vadd.f32 0.0, %v815
        %v817 = vpop.f32.mrb[0].mxu0
        %v818 = vadd.f32 0.0, %v817
        %v819 = vpop.f32.mrb[0].mxu0
        %v820 = vpop.f32.mrb[0].mxu0
        %821 = vdwg.mxu0
        %822 = vmatprep.subr.bf16.mxu0 %v720
        %823 = vmatpush1.bf16.msra.mxu0 %v719
        %824 = vmatprep.subr.bf16.mxu0 %v724
        %825 = vmatpush1.bf16.msra.mxu0 %v723
        %826 = vmatprep.subr.bf16.mxu0 %v728
        %827 = vmatpush1.bf16.msra.mxu0 %v727
        %828 = vmatprep.subr.bf16.mxu0 %v732
        %829 = vmatpush1.bf16.msra.mxu0 %v731
        %830 = vmatprep.subr.bf16.mxu0 %v736
        %831 = vmatpush1.bf16.msra.mxu0 %v735
        %832 = vmatprep.subr.bf16.mxu0 %v740
        %833 = vmatpush1.bf16.msra.mxu0 %v739
        %834 = vmatprep.subr.bf16.mxu0 %v744
        %835 = vmatpush1.bf16.msra.mxu0 %v743
        %836 = vmatprep.subr.bf16.mxu0 %v748
        %837 = vmatpush1.bf16.msra.mxu0 %v747
        %838 = vmatprep.subr.bf16.mxu0 0
        %839 = vmatpush1.bf16.msra.mxu0 0
        %840 = vmatprep.subr.bf16.mxu0 0
        %841 = vmatpush1.bf16.msra.mxu0 0
        %842 = vmatprep.subr.bf16.mxu0 0
        %843 = vmatpush1.bf16.msra.mxu0 0
        %844 = vmatprep.subr.bf16.mxu0 0
        %845 = vmatpush1.bf16.msra.mxu0 0
        %846 = vmatprep.subr.bf16.mxu0 0
        %847 = vmatpush1.bf16.msra.mxu0 0
        %848 = vmatprep.subr.bf16.mxu0 0
        %849 = vmatpush1.bf16.msra.mxu0 0
        %850 = vmatprep.subr.bf16.mxu0 0
        %851 = vmatpush1.bf16.msra.mxu0 0
        %852 = vmatprep.subr.bf16.mxu0 0
        %853 = vmatpush1.bf16.msra.mxu0 0
        %854 = vmatprep.mubr.bf16.mxu0 0
        %855 = vmatmul.mubr.bf16.gmra.mrb[0].mxu0 %v588
        %v856 = vpop.f32.mrb[0].mxu0
        %v857 = vadd.f32 0.0, %v856
        %v858 = vpop.f32.mrb[0].mxu0
        %v859 = vadd.f32 0.0, %v858
        %v860 = vpop.f32.mrb[0].mxu0
        %v861 = vpop.f32.mrb[0].mxu0
        %862 = vdwg.mxu0
        %v863 = vadd.f32 %v584, %v816
        %v864 = vadd.f32 %v585, %v818
        %v865 = vadd.f32 %v586, %v857
        %v866 = vadd.f32 %v587, %v859
        %v867 = vmul.f32 %v863, 0.5
        %v868 = vtanh.pop %v867
        %v869 = vmul.f32 %v868, 0.5
        %v870 = vadd.f32 %v869, 0.5
        %v871 = vmul.f32 %v864, 0.5
        %v872 = vtanh.pop %v871
        %v873 = vmul.f32 %v872, 0.5
        %v874 = vadd.f32 %v873, 0.5
        %v875 = vtanh.pop %v865
        %v876 = vmul.f32 %v866, 0.5
        %v877 = vtanh.pop %v876
        %v878 = vmul.f32 %v877, 0.5
        %v879 = vadd.f32 %v878, 0.5
        %v880 = vmul.f32 %v874, %v580
        %v881 = vmul.f32 %v870, %v875
        %v882 = vadd.f32 %v880, %v881
        %v883 = vtanh.pop %v882
        %v884 = vmul.f32 %v879, %v883
        %s885 = smul.u32 %s576, 8
        %s886 = scalar_lea.vmem [#allocation5], %s885
        %887 = vst [vmem:[%s886] sm:$0xff] %v884
        %s888 = sadd.s32 %s576, %s578
        %s889 = smul.u32 %s888, 4
        %s890 = smul.addr %s889, 8
        %s891 = scalar_lea.vmem [#allocation4], %s890
        %v892 = vld [vmem:[%s891] sm:$0xff]
        %v893 = vld [vmem:[%s891 + $0x8] sm:$0xff]
        %v894 = vld [vmem:[%s891 + $0x10] sm:$0xff]
        %v895 = vld [vmem:[%s891 + $0x18] sm:$0xff]
        %v896 = vpack.c.bf16 %v884, %v884
        %v897 = vld [vmem:[%s361] sm:$0xff]
        %v898 = vld [vmem:[%s361 + $0x8] sm:$0xff]
        %v899 = vld [vmem:[%s361 + $0x10] sm:$0xff]
        %v900 = vld [vmem:[%s361 + $0x18] sm:$0xff]
        %v901 = vld [vmem:[%s361 + $0x20] sm:$0xff]
        %v902 = vld [vmem:[%s361 + $0x28] sm:$0xff]
        %v903 = vld [vmem:[%s361 + $0x30] sm:$0xff]
        %v904 = vld [vmem:[%s361 + $0x38] sm:$0xff]
        %v905 = vld [vmem:[%s361 + $0x40] sm:$0xff]
        %v906 = vld [vmem:[%s361 + $0x48] sm:$0xff]
        %v907 = vld [vmem:[%s361 + $0x50] sm:$0xff]
        %v908 = vld [vmem:[%s361 + $0x58] sm:$0xff]
        %v909 = vld [vmem:[%s361 + $0x60] sm:$0xff]
        %v910 = vld [vmem:[%s361 + $0x68] sm:$0xff]
        %v911 = vld [vmem:[%s361 + $0x70] sm:$0xff]
        %v912 = vld [vmem:[%s361 + $0x78] sm:$0xff]
        %v913 = vld [vmem:[%s361 + $0x80] sm:$0xff]
        %v914 = vld [vmem:[%s361 + $0x88] sm:$0xff]
        %v915 = vld [vmem:[%s361 + $0x90] sm:$0xff]
        %v916 = vld [vmem:[%s361 + $0x98] sm:$0xff]
        %v917 = vld [vmem:[%s361 + $0xa0] sm:$0xff]
        %v918 = vld [vmem:[%s361 + $0xa8] sm:$0xff]
        %v919 = vld [vmem:[%s361 + $0xb0] sm:$0xff]
        %v920 = vld [vmem:[%s361 + $0xb8] sm:$0xff]
        %v921 = vld [vmem:[%s361 + $0xc0] sm:$0xff]
        %v922 = vld [vmem:[%s361 + $0xc8] sm:$0xff]
        %v923 = vld [vmem:[%s361 + $0xd0] sm:$0xff]
        %v924 = vld [vmem:[%s361 + $0xd8] sm:$0xff]
        %v925 = vld [vmem:[%s361 + $0xe0] sm:$0xff]
        %v926 = vld [vmem:[%s361 + $0xe8] sm:$0xff]
        %v927 = vld [vmem:[%s361 + $0xf0] sm:$0xff]
        %v928 = vld [vmem:[%s361 + $0xf8] sm:$0xff]
        %v961 = vunpack.c.l.b16 %v897
        %v962 = vunpack.c.h.b16 %v897
        %v963 = vunpack.c.l.b16 %v898
        %v964 = vunpack.c.h.b16 %v898
        %v965 = vunpack.c.l.b16 %v899
        %v966 = vunpack.c.h.b16 %v899
        %v967 = vunpack.c.l.b16 %v900
        %v968 = vunpack.c.h.b16 %v900
        %v969 = vunpack.c.l.b16 %v901
        %v970 = vunpack.c.h.b16 %v901
        %v971 = vunpack.c.l.b16 %v902
        %v972 = vunpack.c.h.b16 %v902
        %v973 = vunpack.c.l.b16 %v903
        %v974 = vunpack.c.h.b16 %v903
        %v975 = vunpack.c.l.b16 %v904
        %v976 = vunpack.c.h.b16 %v904
        %v977 = vunpack.c.l.b16 %v905
        %v978 = vunpack.c.h.b16 %v905
        %v979 = vunpack.c.l.b16 %v906
        %v980 = vunpack.c.h.b16 %v906
        %v981 = vunpack.c.l.b16 %v907
        %v982 = vunpack.c.h.b16 %v907
        %v983 = vunpack.c.l.b16 %v908
        %v984 = vunpack.c.h.b16 %v908
        %v985 = vunpack.c.l.b16 %v909
        %v986 = vunpack.c.h.b16 %v909
        %v987 = vunpack.c.l.b16 %v910
        %v988 = vunpack.c.h.b16 %v910
        %v989 = vunpack.c.l.b16 %v911
        %v990 = vunpack.c.h.b16 %v911
        %v991 = vunpack.c.l.b16 %v912
        %v992 = vunpack.c.h.b16 %v912
        %v993 = vunpack.c.l.b16 %v913
        %v994 = vunpack.c.h.b16 %v913
        %v995 = vunpack.c.l.b16 %v914
        %v996 = vunpack.c.h.b16 %v914
        %v997 = vunpack.c.l.b16 %v915
        %v998 = vunpack.c.h.b16 %v915
        %v999 = vunpack.c.l.b16 %v916
        %v1000 = vunpack.c.h.b16 %v916
        %v1001 = vunpack.c.l.b16 %v917
        %v1002 = vunpack.c.h.b16 %v917
        %v1003 = vunpack.c.l.b16 %v918
        %v1004 = vunpack.c.h.b16 %v918
        %v1005 = vunpack.c.l.b16 %v919
        %v1006 = vunpack.c.h.b16 %v919
        %v1007 = vunpack.c.l.b16 %v920
        %v1008 = vunpack.c.h.b16 %v920
        %v1009 = vunpack.c.l.b16 %v921
        %v1010 = vunpack.c.h.b16 %v921
        %v1011 = vunpack.c.l.b16 %v922
        %v1012 = vunpack.c.h.b16 %v922
        %v1013 = vunpack.c.l.b16 %v923
        %v1014 = vunpack.c.h.b16 %v923
        %v1015 = vunpack.c.l.b16 %v924
        %v1016 = vunpack.c.h.b16 %v924
        %v1017 = vunpack.c.l.b16 %v925
        %v1018 = vunpack.c.h.b16 %v925
        %v1019 = vunpack.c.l.b16 %v926
        %v1020 = vunpack.c.h.b16 %v926
        %v1021 = vunpack.c.l.b16 %v927
        %v1022 = vunpack.c.h.b16 %v927
        %v1023 = vunpack.c.l.b16 %v928
        %v1024 = vunpack.c.h.b16 %v928
        %v1025 = vpack.c.b16 %v965, %v961
        %v1026 = vpack.c.b16 %v966, %v962
        %v1027 = vpack.c.b16 %v967, %v963
        %v1028 = vpack.c.b16 %v968, %v964
        %v1029 = vpack.c.b16 %v973, %v969
        %v1030 = vpack.c.b16 %v974, %v970
        %v1031 = vpack.c.b16 %v975, %v971
        %v1032 = vpack.c.b16 %v976, %v972
        %v1033 = vpack.c.b16 %v981, %v977
        %v1034 = vpack.c.b16 %v982, %v978
        %v1035 = vpack.c.b16 %v983, %v979
        %v1036 = vpack.c.b16 %v984, %v980
        %v1037 = vpack.c.b16 %v989, %v985
        %v1038 = vpack.c.b16 %v990, %v986
        %v1039 = vpack.c.b16 %v991, %v987
        %v1040 = vpack.c.b16 %v992, %v988
        %v1041 = vpack.c.b16 %v997, %v993
        %v1042 = vpack.c.b16 %v998, %v994
        %v1043 = vpack.c.b16 %v999, %v995
        %v1044 = vpack.c.b16 %v1000, %v996
        %v1045 = vpack.c.b16 %v1005, %v1001
        %v1046 = vpack.c.b16 %v1006, %v1002
        %v1047 = vpack.c.b16 %v1007, %v1003
        %v1048 = vpack.c.b16 %v1008, %v1004
        %v1049 = vpack.c.b16 %v1013, %v1009
        %v1050 = vpack.c.b16 %v1014, %v1010
        %v1051 = vpack.c.b16 %v1015, %v1011
        %v1052 = vpack.c.b16 %v1016, %v1012
        %v1053 = vpack.c.b16 %v1021, %v1017
        %v1054 = vpack.c.b16 %v1022, %v1018
        %v1055 = vpack.c.b16 %v1023, %v1019
        %v1056 = vpack.c.b16 %v1024, %v1020
        %1089 = vmatprep.subr.bf16.mxu0 %v1026
        %1090 = vmatpush1.bf16.msra.mxu0 %v1025
        %1091 = vmatprep.subr.bf16.mxu0 %v1030
        %1092 = vmatpush1.bf16.msra.mxu0 %v1029
        %1093 = vmatprep.subr.bf16.mxu0 %v1034
        %1094 = vmatpush1.bf16.msra.mxu0 %v1033
        %1095 = vmatprep.subr.bf16.mxu0 %v1038
        %1096 = vmatpush1.bf16.msra.mxu0 %v1037
        %1097 = vmatprep.subr.bf16.mxu0 %v1042
        %1098 = vmatpush1.bf16.msra.mxu0 %v1041
        %1099 = vmatprep.subr.bf16.mxu0 %v1046
        %1100 = vmatpush1.bf16.msra.mxu0 %v1045
        %1101 = vmatprep.subr.bf16.mxu0 %v1050
        %1102 = vmatpush1.bf16.msra.mxu0 %v1049
        %1103 = vmatprep.subr.bf16.mxu0 %v1054
        %1104 = vmatpush1.bf16.msra.mxu0 %v1053
        %1105 = vmatprep.subr.bf16.mxu0 0
        %1106 = vmatpush1.bf16.msra.mxu0 0
        %1107 = vmatprep.subr.bf16.mxu0 0
        %1108 = vmatpush1.bf16.msra.mxu0 0
        %1109 = vmatprep.subr.bf16.mxu0 0
        %1110 = vmatpush1.bf16.msra.mxu0 0
        %1111 = vmatprep.subr.bf16.mxu0 0
        %1112 = vmatpush1.bf16.msra.mxu0 0
        %1113 = vmatprep.subr.bf16.mxu0 0
        %1114 = vmatpush1.bf16.msra.mxu0 0
        %1115 = vmatprep.subr.bf16.mxu0 0
        %1116 = vmatpush1.bf16.msra.mxu0 0
        %1117 = vmatprep.subr.bf16.mxu0 0
        %1118 = vmatpush1.bf16.msra.mxu0 0
        %1119 = vmatprep.subr.bf16.mxu0 0
        %1120 = vmatpush1.bf16.msra.mxu0 0
        %1121 = vmatprep.mubr.bf16.mxu0 0
        %1122 = vmatmul.mubr.bf16.gmra.mrb[0].mxu0 %v896
        %v1123 = vpop.f32.mrb[0].mxu0
        %v1124 = vadd.f32 0.0, %v1123
        %v1125 = vpop.f32.mrb[0].mxu0
        %v1126 = vadd.f32 0.0, %v1125
        %v1127 = vpop.f32.mrb[0].mxu0
        %v1128 = vpop.f32.mrb[0].mxu0
        %1129 = vdwg.mxu0
        %1130 = vmatprep.subr.bf16.mxu0 %v1028
        %1131 = vmatpush1.bf16.msra.mxu0 %v1027
        %1132 = vmatprep.subr.bf16.mxu0 %v1032
        %1133 = vmatpush1.bf16.msra.mxu0 %v1031
        %1134 = vmatprep.subr.bf16.mxu0 %v1036
        %1135 = vmatpush1.bf16.msra.mxu0 %v1035
        %1136 = vmatprep.subr.bf16.mxu0 %v1040
        %1137 = vmatpush1.bf16.msra.mxu0 %v1039
        %1138 = vmatprep.subr.bf16.mxu0 %v1044
        %1139 = vmatpush1.bf16.msra.mxu0 %v1043
        %1140 = vmatprep.subr.bf16.mxu0 %v1048
        %1141 = vmatpush1.bf16.msra.mxu0 %v1047
        %1142 = vmatprep.subr.bf16.mxu0 %v1052
        %1143 = vmatpush1.bf16.msra.mxu0 %v1051
        %1144 = vmatprep.subr.bf16.mxu0 %v1056
        %1145 = vmatpush1.bf16.msra.mxu0 %v1055
        %1146 = vmatprep.subr.bf16.mxu0 0
        %1147 = vmatpush1.bf16.msra.mxu0 0
        %1148 = vmatprep.subr.bf16.mxu0 0
        %1149 = vmatpush1.bf16.msra.mxu0 0
        %1150 = vmatprep.subr.bf16.mxu0 0
        %1151 = vmatpush1.bf16.msra.mxu0 0
        %1152 = vmatprep.subr.bf16.mxu0 0
        %1153 = vmatpush1.bf16.msra.mxu0 0
        %1154 = vmatprep.subr.bf16.mxu0 0
        %1155 = vmatpush1.bf16.msra.mxu0 0
        %1156 = vmatprep.subr.bf16.mxu0 0
        %1157 = vmatpush1.bf16.msra.mxu0 0
        %1158 = vmatprep.subr.bf16.mxu0 0
        %1159 = vmatpush1.bf16.msra.mxu0 0
        %1160 = vmatprep.subr.bf16.mxu0 0
        %1161 = vmatpush1.bf16.msra.mxu0 0
        %1162 = vmatprep.mubr.bf16.mxu0 0
        %1163 = vmatmul.mubr.bf16.gmra.mrb[0].mxu0 %v896
        %v1164 = vpop.f32.mrb[0].mxu0
        %v1165 = vadd.f32 0.0, %v1164
        %v1166 = vpop.f32.mrb[0].mxu0
        %v1167 = vadd.f32 0.0, %v1166
        %v1168 = vpop.f32.mrb[0].mxu0
        %v1169 = vpop.f32.mrb[0].mxu0
        %1170 = vdwg.mxu0
        %v1171 = vadd.f32 %v892, %v1124
        %v1172 = vadd.f32 %v893, %v1126
        %v1173 = vadd.f32 %v894, %v1165
        %v1174 = vadd.f32 %v895, %v1167
        %v1175 = vmul.f32 %v1171, 0.5
        %v1176 = vtanh.pop %v1175
        %v1177 = vmul.f32 %v1176, 0.5
        %v1178 = vadd.f32 %v1177, 0.5
        %v1179 = vmul.f32 %v1172, 0.5
        %v1180 = vtanh.pop %v1179
        %v1181 = vmul.f32 %v1180, 0.5
        %v1182 = vadd.f32 %v1181, 0.5
        %v1183 = vtanh.pop %v1173
        %v1184 = vmul.f32 %v1174, 0.5
        %v1185 = vtanh.pop %v1184
        %v1186 = vmul.f32 %v1185, 0.5
        %v1187 = vadd.f32 %v1186, 0.5
        %v1188 = vmul.f32 %v1182, %v882
        %v1189 = vmul.f32 %v1178, %v1183
        %v1190 = vadd.f32 %v1188, %v1189
        %v1191 = vtanh.pop %v1190
        %v1192 = vmul.f32 %v1187, %v1191
        %s1193 = smul.u32 %s888, 8
        %s1194 = scalar_lea.vmem [#allocation5], %s1193
        %1195 = vst [vmem:[%s1194] sm:$0xff] %v1192
        %s1196 = smul.u32 %s578, 2
        %s1197 = sadd.s32 %s576, %s1196
        %s1198 = smul.u32 %s1197, 4
        %s1199 = smul.addr %s1198, 8
        %s1200 = scalar_lea.vmem [#allocation4], %s1199
        %v1201 = vld [vmem:[%s1200] sm:$0xff]
        %v1202 = vld [vmem:[%s1200 + $0x8] sm:$0xff]
        %v1203 = vld [vmem:[%s1200 + $0x10] sm:$0xff]
        %v1204 = vld [vmem:[%s1200 + $0x18] sm:$0xff]
        %v1205 = vpack.c.bf16 %v1192, %v1192
        %v1206 = vld [vmem:[%s361] sm:$0xff]
        %v1207 = vld [vmem:[%s361 + $0x8] sm:$0xff]
        %v1208 = vld [vmem:[%s361 + $0x10] sm:$0xff]
        %v1209 = vld [vmem:[%s361 + $0x18] sm:$0xff]
        %v1210 = vld [vmem:[%s361 + $0x20] sm:$0xff]
        %v1211 = vld [vmem:[%s361 + $0x28] sm:$0xff]
        %v1212 = vld [vmem:[%s361 + $0x30] sm:$0xff]
        %v1213 = vld [vmem:[%s361 + $0x38] sm:$0xff]
        %v1214 = vld [vmem:[%s361 + $0x40] sm:$0xff]
        %v1215 = vld [vmem:[%s361 + $0x48] sm:$0xff]
        %v1216 = vld [vmem:[%s361 + $0x50] sm:$0xff]
        %v1217 = vld [vmem:[%s361 + $0x58] sm:$0xff]
        %v1218 = vld [vmem:[%s361 + $0x60] sm:$0xff]
        %v1219 = vld [vmem:[%s361 + $0x68] sm:$0xff]
        %v1220 = vld [vmem:[%s361 + $0x70] sm:$0xff]
        %v1221 = vld [vmem:[%s361 + $0x78] sm:$0xff]
        %v1222 = vld [vmem:[%s361 + $0x80] sm:$0xff]
        %v1223 = vld [vmem:[%s361 + $0x88] sm:$0xff]
        %v1224 = vld [vmem:[%s361 + $0x90] sm:$0xff]
        %v1225 = vld [vmem:[%s361 + $0x98] sm:$0xff]
        %v1226 = vld [vmem:[%s361 + $0xa0] sm:$0xff]
        %v1227 = vld [vmem:[%s361 + $0xa8] sm:$0xff]
        %v1228 = vld [vmem:[%s361 + $0xb0] sm:$0xff]
        %v1229 = vld [vmem:[%s361 + $0xb8] sm:$0xff]
        %v1230 = vld [vmem:[%s361 + $0xc0] sm:$0xff]
        %v1231 = vld [vmem:[%s361 + $0xc8] sm:$0xff]
        %v1232 = vld [vmem:[%s361 + $0xd0] sm:$0xff]
        %v1233 = vld [vmem:[%s361 + $0xd8] sm:$0xff]
        %v1234 = vld [vmem:[%s361 + $0xe0] sm:$0xff]
        %v1235 = vld [vmem:[%s361 + $0xe8] sm:$0xff]
        %v1236 = vld [vmem:[%s361 + $0xf0] sm:$0xff]
        %v1237 = vld [vmem:[%s361 + $0xf8] sm:$0xff]
        %v1270 = vunpack.c.l.b16 %v1206
        %v1271 = vunpack.c.h.b16 %v1206
        %v1272 = vunpack.c.l.b16 %v1207
        %v1273 = vunpack.c.h.b16 %v1207
        %v1274 = vunpack.c.l.b16 %v1208
        %v1275 = vunpack.c.h.b16 %v1208
        %v1276 = vunpack.c.l.b16 %v1209
        %v1277 = vunpack.c.h.b16 %v1209
        %v1278 = vunpack.c.l.b16 %v1210
        %v1279 = vunpack.c.h.b16 %v1210
        %v1280 = vunpack.c.l.b16 %v1211
        %v1281 = vunpack.c.h.b16 %v1211
        %v1282 = vunpack.c.l.b16 %v1212
        %v1283 = vunpack.c.h.b16 %v1212
        %v1284 = vunpack.c.l.b16 %v1213
        %v1285 = vunpack.c.h.b16 %v1213
        %v1286 = vunpack.c.l.b16 %v1214
        %v1287 = vunpack.c.h.b16 %v1214
        %v1288 = vunpack.c.l.b16 %v1215
        %v1289 = vunpack.c.h.b16 %v1215
        %v1290 = vunpack.c.l.b16 %v1216
        %v1291 = vunpack.c.h.b16 %v1216
        %v1292 = vunpack.c.l.b16 %v1217
        %v1293 = vunpack.c.h.b16 %v1217
        %v1294 = vunpack.c.l.b16 %v1218
        %v1295 = vunpack.c.h.b16 %v1218
        %v1296 = vunpack.c.l.b16 %v1219
        %v1297 = vunpack.c.h.b16 %v1219
        %v1298 = vunpack.c.l.b16 %v1220
        %v1299 = vunpack.c.h.b16 %v1220
        %v1300 = vunpack.c.l.b16 %v1221
        %v1301 = vunpack.c.h.b16 %v1221
        %v1302 = vunpack.c.l.b16 %v1222
        %v1303 = vunpack.c.h.b16 %v1222
        %v1304 = vunpack.c.l.b16 %v1223
        %v1305 = vunpack.c.h.b16 %v1223
        %v1306 = vunpack.c.l.b16 %v1224
        %v1307 = vunpack.c.h.b16 %v1224
        %v1308 = vunpack.c.l.b16 %v1225
        %v1309 = vunpack.c.h.b16 %v1225
        %v1310 = vunpack.c.l.b16 %v1226
        %v1311 = vunpack.c.h.b16 %v1226
        %v1312 = vunpack.c.l.b16 %v1227
        %v1313 = vunpack.c.h.b16 %v1227
        %v1314 = vunpack.c.l.b16 %v1228
        %v1315 = vunpack.c.h.b16 %v1228
        %v1316 = vunpack.c.l.b16 %v1229
        %v1317 = vunpack.c.h.b16 %v1229
        %v1318 = vunpack.c.l.b16 %v1230
        %v1319 = vunpack.c.h.b16 %v1230
        %v1320 = vunpack.c.l.b16 %v1231
        %v1321 = vunpack.c.h.b16 %v1231
        %v1322 = vunpack.c.l.b16 %v1232
        %v1323 = vunpack.c.h.b16 %v1232
        %v1324 = vunpack.c.l.b16 %v1233
        %v1325 = vunpack.c.h.b16 %v1233
        %v1326 = vunpack.c.l.b16 %v1234
        %v1327 = vunpack.c.h.b16 %v1234
        %v1328 = vunpack.c.l.b16 %v1235
        %v1329 = vunpack.c.h.b16 %v1235
        %v1330 = vunpack.c.l.b16 %v1236
        %v1331 = vunpack.c.h.b16 %v1236
        %v1332 = vunpack.c.l.b16 %v1237
        %v1333 = vunpack.c.h.b16 %v1237
        %v1334 = vpack.c.b16 %v1274, %v1270
        %v1335 = vpack.c.b16 %v1275, %v1271
        %v1336 = vpack.c.b16 %v1276, %v1272
        %v1337 = vpack.c.b16 %v1277, %v1273
        %v1338 = vpack.c.b16 %v1282, %v1278
        %v1339 = vpack.c.b16 %v1283, %v1279
        %v1340 = vpack.c.b16 %v1284, %v1280
        %v1341 = vpack.c.b16 %v1285, %v1281
        %v1342 = vpack.c.b16 %v1290, %v1286
        %v1343 = vpack.c.b16 %v1291, %v1287
        %v1344 = vpack.c.b16 %v1292, %v1288
        %v1345 = vpack.c.b16 %v1293, %v1289
        %v1346 = vpack.c.b16 %v1298, %v1294
        %v1347 = vpack.c.b16 %v1299, %v1295
        %v1348 = vpack.c.b16 %v1300, %v1296
        %v1349 = vpack.c.b16 %v1301, %v1297
        %v1350 = vpack.c.b16 %v1306, %v1302
        %v1351 = vpack.c.b16 %v1307, %v1303
        %v1352 = vpack.c.b16 %v1308, %v1304
        %v1353 = vpack.c.b16 %v1309, %v1305
        %v1354 = vpack.c.b16 %v1314, %v1310
        %v1355 = vpack.c.b16 %v1315, %v1311
        %v1356 = vpack.c.b16 %v1316, %v1312
        %v1357 = vpack.c.b16 %v1317, %v1313
        %v1358 = vpack.c.b16 %v1322, %v1318
        %v1359 = vpack.c.b16 %v1323, %v1319
        %v1360 = vpack.c.b16 %v1324, %v1320
        %v1361 = vpack.c.b16 %v1325, %v1321
        %v1362 = vpack.c.b16 %v1330, %v1326
        %v1363 = vpack.c.b16 %v1331, %v1327
        %v1364 = vpack.c.b16 %v1332, %v1328
        %v1365 = vpack.c.b16 %v1333, %v1329
        %1398 = vmatprep.subr.bf16.mxu0 %v1335
        %1399 = vmatpush1.bf16.msra.mxu0 %v1334
        %1400 = vmatprep.subr.bf16.mxu0 %v1339
        %1401 = vmatpush1.bf16.msra.mxu0 %v1338
        %1402 = vmatprep.subr.bf16.mxu0 %v1343
        %1403 = vmatpush1.bf16.msra.mxu0 %v1342
        %1404 = vmatprep.subr.bf16.mxu0 %v1347
        %1405 = vmatpush1.bf16.msra.mxu0 %v1346
        %1406 = vmatprep.subr.bf16.mxu0 %v1351
        %1407 = vmatpush1.bf16.msra.mxu0 %v1350
        %1408 = vmatprep.subr.bf16.mxu0 %v1355
        %1409 = vmatpush1.bf16.msra.mxu0 %v1354
        %1410 = vmatprep.subr.bf16.mxu0 %v1359
        %1411 = vmatpush1.bf16.msra.mxu0 %v1358
        %1412 = vmatprep.subr.bf16.mxu0 %v1363
        %1413 = vmatpush1.bf16.msra.mxu0 %v1362
        %1414 = vmatprep.subr.bf16.mxu0 0
        %1415 = vmatpush1.bf16.msra.mxu0 0
        %1416 = vmatprep.subr.bf16.mxu0 0
        %1417 = vmatpush1.bf16.msra.mxu0 0
        %1418 = vmatprep.subr.bf16.mxu0 0
        %1419 = vmatpush1.bf16.msra.mxu0 0
        %1420 = vmatprep.subr.bf16.mxu0 0
        %1421 = vmatpush1.bf16.msra.mxu0 0
        %1422 = vmatprep.subr.bf16.mxu0 0
        %1423 = vmatpush1.bf16.msra.mxu0 0
        %1424 = vmatprep.subr.bf16.mxu0 0
        %1425 = vmatpush1.bf16.msra.mxu0 0
        %1426 = vmatprep.subr.bf16.mxu0 0
        %1427 = vmatpush1.bf16.msra.mxu0 0
        %1428 = vmatprep.subr.bf16.mxu0 0
        %1429 = vmatpush1.bf16.msra.mxu0 0
        %1430 = vmatprep.mubr.bf16.mxu0 0
        %1431 = vmatmul.mubr.bf16.gmra.mrb[0].mxu0 %v1205
        %v1432 = vpop.f32.mrb[0].mxu0
        %v1433 = vadd.f32 0.0, %v1432
        %v1434 = vpop.f32.mrb[0].mxu0
        %v1435 = vadd.f32 0.0, %v1434
        %v1436 = vpop.f32.mrb[0].mxu0
        %v1437 = vpop.f32.mrb[0].mxu0
        %1438 = vdwg.mxu0
        %1439 = vmatprep.subr.bf16.mxu0 %v1337
        %1440 = vmatpush1.bf16.msra.mxu0 %v1336
        %1441 = vmatprep.subr.bf16.mxu0 %v1341
        %1442 = vmatpush1.bf16.msra.mxu0 %v1340
        %1443 = vmatprep.subr.bf16.mxu0 %v1345
        %1444 = vmatpush1.bf16.msra.mxu0 %v1344
        %1445 = vmatprep.subr.bf16.mxu0 %v1349
        %1446 = vmatpush1.bf16.msra.mxu0 %v1348
        %1447 = vmatprep.subr.bf16.mxu0 %v1353
        %1448 = vmatpush1.bf16.msra.mxu0 %v1352
        %1449 = vmatprep.subr.bf16.mxu0 %v1357
        %1450 = vmatpush1.bf16.msra.mxu0 %v1356
        %1451 = vmatprep.subr.bf16.mxu0 %v1361
        %1452 = vmatpush1.bf16.msra.mxu0 %v1360
        %1453 = vmatprep.subr.bf16.mxu0 %v1365
        %1454 = vmatpush1.bf16.msra.mxu0 %v1364
        %1455 = vmatprep.subr.bf16.mxu0 0
        %1456 = vmatpush1.bf16.msra.mxu0 0
        %1457 = vmatprep.subr.bf16.mxu0 0
        %1458 = vmatpush1.bf16.msra.mxu0 0
        %1459 = vmatprep.subr.bf16.mxu0 0
        %1460 = vmatpush1.bf16.msra.mxu0 0
        %1461 = vmatprep.subr.bf16.mxu0 0
        %1462 = vmatpush1.bf16.msra.mxu0 0
        %1463 = vmatprep.subr.bf16.mxu0 0
        %1464 = vmatpush1.bf16.msra.mxu0 0
        %1465 = vmatprep.subr.bf16.mxu0 0
        %1466 = vmatpush1.bf16.msra.mxu0 0
        %1467 = vmatprep.subr.bf16.mxu0 0
        %1468 = vmatpush1.bf16.msra.mxu0 0
        %1469 = vmatprep.subr.bf16.mxu0 0
        %1470 = vmatpush1.bf16.msra.mxu0 0
        %1471 = vmatprep.mubr.bf16.mxu0 0
        %1472 = vmatmul.mubr.bf16.gmra.mrb[0].mxu0 %v1205
        %v1473 = vpop.f32.mrb[0].mxu0
        %v1474 = vadd.f32 0.0, %v1473
        %v1475 = vpop.f32.mrb[0].mxu0
        %v1476 = vadd.f32 0.0, %v1475
        %v1477 = vpop.f32.mrb[0].mxu0
        %v1478 = vpop.f32.mrb[0].mxu0
        %1479 = vdwg.mxu0
        %v1480 = vadd.f32 %v1201, %v1433
        %v1481 = vadd.f32 %v1202, %v1435
        %v1482 = vadd.f32 %v1203, %v1474
        %v1483 = vadd.f32 %v1204, %v1476
        %v1484 = vmul.f32 %v1480, 0.5
        %v1485 = vtanh.pop %v1484
        %v1486 = vmul.f32 %v1485, 0.5
        %v1487 = vadd.f32 %v1486, 0.5
        %v1488 = vmul.f32 %v1481, 0.5
        %v1489 = vtanh.pop %v1488
        %v1490 = vmul.f32 %v1489, 0.5
        %v1491 = vadd.f32 %v1490, 0.5
        %v1492 = vtanh.pop %v1482
        %v1493 = vmul.f32 %v1483, 0.5
        %v1494 = vtanh.pop %v1493
        %v1495 = vmul.f32 %v1494, 0.5
        %v1496 = vadd.f32 %v1495, 0.5
        %v1497 = vmul.f32 %v1491, %v1190
        %v1498 = vmul.f32 %v1487, %v1492
        %v1499 = vadd.f32 %v1497, %v1498
        %v1500 = vtanh.pop %v1499
        %v1501 = vmul.f32 %v1496, %v1500
        %s1502 = smul.u32 %s1197, 8
        %s1503 = scalar_lea.vmem [#allocation5], %s1502
        %1504 = vst [vmem:[%s1503] sm:$0xff] %v1501
        %s1505 = smul.u32 %s578, 3
        %s1506 = sadd.s32 %s576, %s1505
        %s1507 = smul.u32 %s1506, 4
        %s1508 = smul.addr %s1507, 8
        %s1509 = scalar_lea.vmem [#allocation4], %s1508
        %v1510 = vld [vmem:[%s1509] sm:$0xff]
        %v1511 = vld [vmem:[%s1509 + $0x8] sm:$0xff]
        %v1512 = vld [vmem:[%s1509 + $0x10] sm:$0xff]
        %v1513 = vld [vmem:[%s1509 + $0x18] sm:$0xff]
        %v1514 = vpack.c.bf16 %v1501, %v1501
        %v1515 = vld [vmem:[%s361] sm:$0xff]
        %v1516 = vld [vmem:[%s361 + $0x8] sm:$0xff]
        %v1517 = vld [vmem:[%s361 + $0x10] sm:$0xff]
        %v1518 = vld [vmem:[%s361 + $0x18] sm:$0xff]
        %v1519 = vld [vmem:[%s361 + $0x20] sm:$0xff]
        %v1520 = vld [vmem:[%s361 + $0x28] sm:$0xff]
        %v1521 = vld [vmem:[%s361 + $0x30] sm:$0xff]
        %v1522 = vld [vmem:[%s361 + $0x38] sm:$0xff]
        %v1523 = vld [vmem:[%s361 + $0x40] sm:$0xff]
        %v1524 = vld [vmem:[%s361 + $0x48] sm:$0xff]
        %v1525 = vld [vmem:[%s361 + $0x50] sm:$0xff]
        %v1526 = vld [vmem:[%s361 + $0x58] sm:$0xff]
        %v1527 = vld [vmem:[%s361 + $0x60] sm:$0xff]
        %v1528 = vld [vmem:[%s361 + $0x68] sm:$0xff]
        %v1529 = vld [vmem:[%s361 + $0x70] sm:$0xff]
        %v1530 = vld [vmem:[%s361 + $0x78] sm:$0xff]
        %v1531 = vld [vmem:[%s361 + $0x80] sm:$0xff]
        %v1532 = vld [vmem:[%s361 + $0x88] sm:$0xff]
        %v1533 = vld [vmem:[%s361 + $0x90] sm:$0xff]
        %v1534 = vld [vmem:[%s361 + $0x98] sm:$0xff]
        %v1535 = vld [vmem:[%s361 + $0xa0] sm:$0xff]
        %v1536 = vld [vmem:[%s361 + $0xa8] sm:$0xff]
        %v1537 = vld [vmem:[%s361 + $0xb0] sm:$0xff]
        %v1538 = vld [vmem:[%s361 + $0xb8] sm:$0xff]
        %v1539 = vld [vmem:[%s361 + $0xc0] sm:$0xff]
        %v1540 = vld [vmem:[%s361 + $0xc8] sm:$0xff]
        %v1541 = vld [vmem:[%s361 + $0xd0] sm:$0xff]
        %v1542 = vld [vmem:[%s361 + $0xd8] sm:$0xff]
        %v1543 = vld [vmem:[%s361 + $0xe0] sm:$0xff]
        %v1544 = vld [vmem:[%s361 + $0xe8] sm:$0xff]
        %v1545 = vld [vmem:[%s361 + $0xf0] sm:$0xff]
        %v1546 = vld [vmem:[%s361 + $0xf8] sm:$0xff]
        %v1579 = vunpack.c.l.b16 %v1515
        %v1580 = vunpack.c.h.b16 %v1515
        %v1581 = vunpack.c.l.b16 %v1516
        %v1582 = vunpack.c.h.b16 %v1516
        %v1583 = vunpack.c.l.b16 %v1517
        %v1584 = vunpack.c.h.b16 %v1517
        %v1585 = vunpack.c.l.b16 %v1518
        %v1586 = vunpack.c.h.b16 %v1518
        %v1587 = vunpack.c.l.b16 %v1519
        %v1588 = vunpack.c.h.b16 %v1519
        %v1589 = vunpack.c.l.b16 %v1520
        %v1590 = vunpack.c.h.b16 %v1520
        %v1591 = vunpack.c.l.b16 %v1521
        %v1592 = vunpack.c.h.b16 %v1521
        %v1593 = vunpack.c.l.b16 %v1522
        %v1594 = vunpack.c.h.b16 %v1522
        %v1595 = vunpack.c.l.b16 %v1523
        %v1596 = vunpack.c.h.b16 %v1523
        %v1597 = vunpack.c.l.b16 %v1524
        %v1598 = vunpack.c.h.b16 %v1524
        %v1599 = vunpack.c.l.b16 %v1525
        %v1600 = vunpack.c.h.b16 %v1525
        %v1601 = vunpack.c.l.b16 %v1526
        %v1602 = vunpack.c.h.b16 %v1526
        %v1603 = vunpack.c.l.b16 %v1527
        %v1604 = vunpack.c.h.b16 %v1527
        %v1605 = vunpack.c.l.b16 %v1528
        %v1606 = vunpack.c.h.b16 %v1528
        %v1607 = vunpack.c.l.b16 %v1529
        %v1608 = vunpack.c.h.b16 %v1529
        %v1609 = vunpack.c.l.b16 %v1530
        %v1610 = vunpack.c.h.b16 %v1530
        %v1611 = vunpack.c.l.b16 %v1531
        %v1612 = vunpack.c.h.b16 %v1531
        %v1613 = vunpack.c.l.b16 %v1532
        %v1614 = vunpack.c.h.b16 %v1532
        %v1615 = vunpack.c.l.b16 %v1533
        %v1616 = vunpack.c.h.b16 %v1533
        %v1617 = vunpack.c.l.b16 %v1534
        %v1618 = vunpack.c.h.b16 %v1534
        %v1619 = vunpack.c.l.b16 %v1535
        %v1620 = vunpack.c.h.b16 %v1535
        %v1621 = vunpack.c.l.b16 %v1536
        %v1622 = vunpack.c.h.b16 %v1536
        %v1623 = vunpack.c.l.b16 %v1537
        %v1624 = vunpack.c.h.b16 %v1537
        %v1625 = vunpack.c.l.b16 %v1538
        %v1626 = vunpack.c.h.b16 %v1538
        %v1627 = vunpack.c.l.b16 %v1539
        %v1628 = vunpack.c.h.b16 %v1539
        %v1629 = vunpack.c.l.b16 %v1540
        %v1630 = vunpack.c.h.b16 %v1540
        %v1631 = vunpack.c.l.b16 %v1541
        %v1632 = vunpack.c.h.b16 %v1541
        %v1633 = vunpack.c.l.b16 %v1542
        %v1634 = vunpack.c.h.b16 %v1542
        %v1635 = vunpack.c.l.b16 %v1543
        %v1636 = vunpack.c.h.b16 %v1543
        %v1637 = vunpack.c.l.b16 %v1544
        %v1638 = vunpack.c.h.b16 %v1544
        %v1639 = vunpack.c.l.b16 %v1545
        %v1640 = vunpack.c.h.b16 %v1545
        %v1641 = vunpack.c.l.b16 %v1546
        %v1642 = vunpack.c.h.b16 %v1546
        %v1643 = vpack.c.b16 %v1583, %v1579
        %v1644 = vpack.c.b16 %v1584, %v1580
        %v1645 = vpack.c.b16 %v1585, %v1581
        %v1646 = vpack.c.b16 %v1586, %v1582
        %v1647 = vpack.c.b16 %v1591, %v1587
        %v1648 = vpack.c.b16 %v1592, %v1588
        %v1649 = vpack.c.b16 %v1593, %v1589
        %v1650 = vpack.c.b16 %v1594, %v1590
        %v1651 = vpack.c.b16 %v1599, %v1595
        %v1652 = vpack.c.b16 %v1600, %v1596
        %v1653 = vpack.c.b16 %v1601, %v1597
        %v1654 = vpack.c.b16 %v1602, %v1598
        %v1655 = vpack.c.b16 %v1607, %v1603
        %v1656 = vpack.c.b16 %v1608, %v1604
        %v1657 = vpack.c.b16 %v1609, %v1605
        %v1658 = vpack.c.b16 %v1610, %v1606
        %v1659 = vpack.c.b16 %v1615, %v1611
        %v1660 = vpack.c.b16 %v1616, %v1612
        %v1661 = vpack.c.b16 %v1617, %v1613
        %v1662 = vpack.c.b16 %v1618, %v1614
        %v1663 = vpack.c.b16 %v1623, %v1619
        %v1664 = vpack.c.b16 %v1624, %v1620
        %v1665 = vpack.c.b16 %v1625, %v1621
        %v1666 = vpack.c.b16 %v1626, %v1622
        %v1667 = vpack.c.b16 %v1631, %v1627
        %v1668 = vpack.c.b16 %v1632, %v1628
        %v1669 = vpack.c.b16 %v1633, %v1629
        %v1670 = vpack.c.b16 %v1634, %v1630
        %v1671 = vpack.c.b16 %v1639, %v1635
        %v1672 = vpack.c.b16 %v1640, %v1636
        %v1673 = vpack.c.b16 %v1641, %v1637
        %v1674 = vpack.c.b16 %v1642, %v1638
        %1707 = vmatprep.subr.bf16.mxu0 %v1644
        %1708 = vmatpush1.bf16.msra.mxu0 %v1643
        %1709 = vmatprep.subr.bf16.mxu0 %v1648
        %1710 = vmatpush1.bf16.msra.mxu0 %v1647
        %1711 = vmatprep.subr.bf16.mxu0 %v1652
        %1712 = vmatpush1.bf16.msra.mxu0 %v1651
        %1713 = vmatprep.subr.bf16.mxu0 %v1656
        %1714 = vmatpush1.bf16.msra.mxu0 %v1655
        %1715 = vmatprep.subr.bf16.mxu0 %v1660
        %1716 = vmatpush1.bf16.msra.mxu0 %v1659
        %1717 = vmatprep.subr.bf16.mxu0 %v1664
        %1718 = vmatpush1.bf16.msra.mxu0 %v1663
        %1719 = vmatprep.subr.bf16.mxu0 %v1668
        %1720 = vmatpush1.bf16.msra.mxu0 %v1667
        %1721 = vmatprep.subr.bf16.mxu0 %v1672
        %1722 = vmatpush1.bf16.msra.mxu0 %v1671
        %1723 = vmatprep.subr.bf16.mxu0 0
        %1724 = vmatpush1.bf16.msra.mxu0 0
        %1725 = vmatprep.subr.bf16.mxu0 0
        %1726 = vmatpush1.bf16.msra.mxu0 0
        %1727 = vmatprep.subr.bf16.mxu0 0
        %1728 = vmatpush1.bf16.msra.mxu0 0
        %1729 = vmatprep.subr.bf16.mxu0 0
        %1730 = vmatpush1.bf16.msra.mxu0 0
        %1731 = vmatprep.subr.bf16.mxu0 0
        %1732 = vmatpush1.bf16.msra.mxu0 0
        %1733 = vmatprep.subr.bf16.mxu0 0
        %1734 = vmatpush1.bf16.msra.mxu0 0
        %1735 = vmatprep.subr.bf16.mxu0 0
        %1736 = vmatpush1.bf16.msra.mxu0 0
        %1737 = vmatprep.subr.bf16.mxu0 0
        %1738 = vmatpush1.bf16.msra.mxu0 0
        %1739 = vmatprep.mubr.bf16.mxu0 0
        %1740 = vmatmul.mubr.bf16.gmra.mrb[0].mxu0 %v1514
        %v1741 = vpop.f32.mrb[0].mxu0
        %v1742 = vadd.f32 0.0, %v1741
        %v1743 = vpop.f32.mrb[0].mxu0
        %v1744 = vadd.f32 0.0, %v1743
        %v1745 = vpop.f32.mrb[0].mxu0
        %v1746 = vpop.f32.mrb[0].mxu0
        %1747 = vdwg.mxu0
        %1748 = vmatprep.subr.bf16.mxu0 %v1646
        %1749 = vmatpush1.bf16.msra.mxu0 %v1645
        %1750 = vmatprep.subr.bf16.mxu0 %v1650
        %1751 = vmatpush1.bf16.msra.mxu0 %v1649
        %1752 = vmatprep.subr.bf16.mxu0 %v1654
        %1753 = vmatpush1.bf16.msra.mxu0 %v1653
        %1754 = vmatprep.subr.bf16.mxu0 %v1658
        %1755 = vmatpush1.bf16.msra.mxu0 %v1657
        %1756 = vmatprep.subr.bf16.mxu0 %v1662
        %1757 = vmatpush1.bf16.msra.mxu0 %v1661
        %1758 = vmatprep.subr.bf16.mxu0 %v1666
        %1759 = vmatpush1.bf16.msra.mxu0 %v1665
        %1760 = vmatprep.subr.bf16.mxu0 %v1670
        %1761 = vmatpush1.bf16.msra.mxu0 %v1669
        %1762 = vmatprep.subr.bf16.mxu0 %v1674
        %1763 = vmatpush1.bf16.msra.mxu0 %v1673
        %1764 = vmatprep.subr.bf16.mxu0 0
        %1765 = vmatpush1.bf16.msra.mxu0 0
        %1766 = vmatprep.subr.bf16.mxu0 0
        %1767 = vmatpush1.bf16.msra.mxu0 0
        %1768 = vmatprep.subr.bf16.mxu0 0
        %1769 = vmatpush1.bf16.msra.mxu0 0
        %1770 = vmatprep.subr.bf16.mxu0 0
        %1771 = vmatpush1.bf16.msra.mxu0 0
        %1772 = vmatprep.subr.bf16.mxu0 0
        %1773 = vmatpush1.bf16.msra.mxu0 0
        %1774 = vmatprep.subr.bf16.mxu0 0
        %1775 = vmatpush1.bf16.msra.mxu0 0
        %1776 = vmatprep.subr.bf16.mxu0 0
        %1777 = vmatpush1.bf16.msra.mxu0 0
        %1778 = vmatprep.subr.bf16.mxu0 0
        %1779 = vmatpush1.bf16.msra.mxu0 0
        %1780 = vmatprep.mubr.bf16.mxu0 0
        %1781 = vmatmul.mubr.bf16.gmra.mrb[0].mxu0 %v1514
        %v1782 = vpop.f32.mrb[0].mxu0
        %v1783 = vadd.f32 0.0, %v1782
        %v1784 = vpop.f32.mrb[0].mxu0
        %v1785 = vadd.f32 0.0, %v1784
        %v1786 = vpop.f32.mrb[0].mxu0
        %v1787 = vpop.f32.mrb[0].mxu0
        %1788 = vdwg.mxu0
        %v1789 = vadd.f32 %v1510, %v1742
        %v1790 = vadd.f32 %v1511, %v1744
        %v1791 = vadd.f32 %v1512, %v1783
        %v1792 = vadd.f32 %v1513, %v1785
        %v1793 = vmul.f32 %v1789, 0.5
        %v1794 = vtanh.pop %v1793
        %v1795 = vmul.f32 %v1794, 0.5
        %v1796 = vadd.f32 %v1795, 0.5
        %v1797 = vmul.f32 %v1790, 0.5
        %v1798 = vtanh.pop %v1797
        %v1799 = vmul.f32 %v1798, 0.5
        %v1800 = vadd.f32 %v1799, 0.5
        %v1801 = vtanh.pop %v1791
        %v1802 = vmul.f32 %v1792, 0.5
        %v1803 = vtanh.pop %v1802
        %v1804 = vmul.f32 %v1803, 0.5
        %v1805 = vadd.f32 %v1804, 0.5
        %v1806 = vmul.f32 %v1800, %v1499
        %v1807 = vmul.f32 %v1796, %v1801
        %v1808 = vadd.f32 %v1806, %v1807
        %v1809 = vtanh.pop %v1808
        %v1810 = vmul.f32 %v1805, %v1809
        %s1811 = smul.u32 %s1506, 8
        %s1812 = scalar_lea.vmem [#allocation5], %s1811
        %1813 = vst [vmem:[%s1812] sm:$0xff] %v1810
        %1814 = vst [vmem:[#allocation2] sm:$0xff] %v1810
        %1815 = vst [vmem:[#allocation3] sm:$0xff] %v1808
        %v1816 = vld [vmem:[#allocation5] sm:$0xff]
        %v1817 = vld [vmem:[#allocation5 + $0x8] sm:$0xff]
        %v1818 = vld [vmem:[#allocation5 + $0x10] sm:$0xff]
        %v1819 = vld [vmem:[#allocation5 + $0x18] sm:$0xff]
        %v1820 = vpack.c.bf16 %v1816, %v1816
        %v1821 = vpack.c.bf16 %v1817, %v1817
        %v1822 = vpack.c.bf16 %v1818, %v1818
        %v1823 = vpack.c.bf16 %v1819, %v1819
        %1824 = vst [vmem:[%s327] sm:$0xf] %v1820
        %1825 = vst [vmem:[%s327 + $0x4] sm:$0xf] %v1821
        %1826 = vst [vmem:[%s327 + $0x8] sm:$0xf] %v1822
        %1827 = vst [vmem:[%s327 + $0xc] sm:$0xf] %v1823
        %v1828 = vld [vmem:[%s373] sm:$0x1]
        %vm1829 = vcmask 1041408
        %v1830 = vsel %vm1829, %v1816, 0.0
        %v1831 = vsel %vm1829, %v1817, 0.0
        %v1832 = vadd.f32 %v1830, %v1831
        %v1833 = vsel %vm1829, %v1818, 0.0
        %v1834 = vadd.f32 %v1832, %v1833
        %v1835 = vsel %vm1829, %v1819, 0.0
        %v1836 = vadd.f32 %v1834, %v1835
        %v1837 = vrot.slane %v1836, 4
        %v1838 = vadd.f32 %v1836, %v1837
        %v1839 = vrot.slane %v1838, 2
        %v1840 = vadd.f32 %v1838, %v1839
        %v1841 = vrot.slane %v1840, 1
        %v1842 = vadd.f32 %v1840, %v1841
        %v1843 = vadd.f32 %v1828, %v1842
        %1844 = vst [vmem:[%s373] sm:$0x1] %v1843
        %v1845 = vld [vmem:[%s376] sm:$0x1]
        %v1846 = vmul.f32 %v1816, %v1816
        %v1847 = vmul.f32 %v1817, %v1817
        %v1848 = vmul.f32 %v1818, %v1818
        %v1849 = vmul.f32 %v1819, %v1819
        %v1850 = vsel %vm1829, %v1846, 0.0
        %v1851 = vsel %vm1829, %v1847, 0.0
        %v1852 = vadd.f32 %v1850, %v1851
        %v1853 = vsel %vm1829, %v1848, 0.0
        %v1854 = vadd.f32 %v1852, %v1853
        %v1855 = vsel %vm1829, %v1849, 0.0
        %v1856 = vadd.f32 %v1854, %v1855
        %v1857 = vrot.slane %v1856, 4
        %v1858 = vadd.f32 %v1856, %v1857
        %v1859 = vrot.slane %v1858, 2
        %v1860 = vadd.f32 %v1858, %v1859
        %v1861 = vrot.slane %v1860, 1
        %v1862 = vadd.f32 %v1860, %v1861
        %v1863 = vadd.f32 %v1845, %v1862
        %1864 = vst [vmem:[%s376] sm:$0x1] %v1863
        %s1865 = sand.u32 %s160, 1
        %s1866 = sand.u32 %s160, 1
        %s1867 = smul.addr %s1866, 16
        %s1868 = scalar_lea.vmem [#allocation6], %s1867
        %p1869 = scmp.lt.s32.totalorder %s22, 1
        %s1870 = scalar_select %p1869, %s22, 1
        %s1871 = scalar_lea.vmem %s5, %s1870
        %p1872 = scmp.lt.s32.totalorder %s22, 1
        %s1873 = scalar_select %p1872, %s22, 1
        %s1874 = scalar_lea.vmem %s6, %s1873
        // Predicated region
        $region41: #{blstm_forward.3} parent=35 // pred_check
          %p1875 = pneg %p170
        $region42: #{blstm_forward.3} parent=35 // pred_check_branch
          %1877 = sbr.rel (%p1875) target = $region44
        $region43: #{blstm_forward.3} parent=35 // pred_region
          %s1878 = smul.u32 %s23, 2
          %s1879 = ssub.s32 1, %s1878
          %s1880 = smul.u32 %s22, %s1879
          %s1881 = sadd.s32 %s23, %s1880
          %s1882 = smul.u32 4, %s1881
          %s1883 = smul.addr %s1882, 2
          %s1884 = sadd.s32 %s22, %s1883
          %s1885 = smul.addr %s1884, 4
          %s1886 = scalar_lea.vmem %s4, %s1885
          // Predicated region
          $region45: #{blstm_forward.3} parent=43 // pred_check
            _
          $region46: #{blstm_forward.3} parent=43 // pred_check_branch
            %1888 = sbr.rel (0) target = $region48
          $region47: #{blstm_forward.3} parent=43 // pred_region
            // Predicated region
            $region49: #{blstm_forward.3} parent=47 // pred_check
              _
            $region50: #{blstm_forward.3} parent=47 // pred_check_branch
              %1890 = sbr.rel target = $region52
            $region51: #{blstm_forward.3} parent=47 // pred_region
              // Predicated region
              $region64: #{blstm_forward.3} parent=51 // pred_check
                _
              $region65: #{blstm_forward.3} parent=51 // pred_check_branch
                %1911 = sbr.rel (0) target = $region67
              $region66: #{blstm_forward.3} parent=51 // pred_region
                loop: start=0, step=1, limit=1
                $region68: #{blstm_forward.3} parent=66 // loop_pre_header
                  _
                $region69: #{blstm_forward.3} parent=66 // loop_header
                  %s1913 = sphi 0, %s1917
                  %p1914 = scmp.ge.s32.totalorder %s1913, 1
                  %s1918 = sphi %s1868, %s1868
                  %s1919 = sphi %s1886, %s1886
                $region70: #{blstm_forward.3} parent=66 // loop_header_branch
                  %1916 = sbr.rel (%p1914) target = $region74
                $region71: #{blstm_forward.3} parent=66 // loop_body
                  _
                $region72: #{blstm_forward.3} parent=66 // loop_footer
                  %s1917 = sadd.s32 1, %s1913
                $region73: #{blstm_forward.3} parent=66 // loop_footer_branch
                  %1912 = sbr.rel target = $region69
                $region74: #{blstm_forward.3} parent=66 // loop_exit
                  _
                loop: start=0, step=1, limit=1
                $region75: #{blstm_forward.3} parent=66 // loop_pre_header
                  _
                $region76: #{blstm_forward.3} parent=66 // loop_header
                  %s1922 = sphi 0, %s1926
                  %p1923 = scmp.ge.s32.totalorder %s1922, 1
                  %s1927 = sphi %s1868, %s1868
                  %s1928 = sphi %s1886, %s1886
                $region77: #{blstm_forward.3} parent=66 // loop_header_branch
                  %1925 = sbr.rel (%p1923) target = $region81
                $region78: #{blstm_forward.3} parent=66 // loop_body
                  %v1929 = vld [vmem:[%s1927] sm:$0xf]
                  %1930 = vst [vmem:[%s1928] sm:$0xf] %v1929
                  %v1931 = vld [vmem:[%s1927 + $0x4] sm:$0xf]
                  %1932 = vst [vmem:[%s1928 + $0x8] sm:$0xf] %v1931
                  %v1933 = vld [vmem:[%s1927 + $0x8] sm:$0xf]
                  %1934 = vst [vmem:[%s1928 + $0x10] sm:$0xf] %v1933
                  %v1935 = vld [vmem:[%s1927 + $0xc] sm:$0xf]
                  %1936 = vst [vmem:[%s1928 + $0x18] sm:$0xf] %v1935
                $region79: #{blstm_forward.3} parent=66 // loop_footer
                  %s1926 = sadd.s32 1, %s1922
                $region80: #{blstm_forward.3} parent=66 // loop_footer_branch
                  %1921 = sbr.rel target = $region76
                $region81: #{blstm_forward.3} parent=66 // loop_exit
                  _
              $region67: #{blstm_forward.3} parent=51 // pred_fallthru
                _
            $region52: #{blstm_forward.3} parent=47 // pred_fallthru
              _
            // Predicated region
            $region53: #{blstm_forward.3} parent=47 // pred_check
              _
            $region54: #{blstm_forward.3} parent=47 // pred_check_branch
              %1892 = sbr.rel (0) target = $region56
            $region55: #{blstm_forward.3} parent=47 // pred_region
              loop: start=0, step=1, limit=1
              $region57: #{blstm_forward.3} parent=55 // loop_pre_header
                _
              $region58: #{blstm_forward.3} parent=55 // loop_header
                %s1895 = sphi 0, %s1899
                %p1896 = scmp.ge.s32.totalorder %s1895, 1
                %s1900 = sphi %s1868, %s1868
                %s1901 = sphi %s1886, %s1886
              $region59: #{blstm_forward.3} parent=55 // loop_header_branch
                %1898 = sbr.rel (%p1896) target = $region63
              $region60: #{blstm_forward.3} parent=55 // loop_body
                %v1902 = vld [vmem:[%s1900] sm:$0xf]
                %1903 = vst [vmem:[%s1901] sm:$0xf] %v1902
                %v1904 = vld [vmem:[%s1900 + $0x4] sm:$0xf]
                %1905 = vst [vmem:[%s1901 + $0x8] sm:$0xf] %v1904
                %v1906 = vld [vmem:[%s1900 + $0x8] sm:$0xf]
                %1907 = vst [vmem:[%s1901 + $0x10] sm:$0xf] %v1906
                %v1908 = vld [vmem:[%s1900 + $0xc] sm:$0xf]
                %1909 = vst [vmem:[%s1901 + $0x18] sm:$0xf] %v1908
              $region61: #{blstm_forward.3} parent=55 // loop_footer
                %s1899 = sadd.s32 1, %s1895
              $region62: #{blstm_forward.3} parent=55 // loop_footer_branch
                %1894 = sbr.rel target = $region58
              $region63: #{blstm_forward.3} parent=55 // loop_exit
                _
            $region56: #{blstm_forward.3} parent=47 // pred_fallthru
              _
          $region48: #{blstm_forward.3} parent=43 // pred_fallthru
            _
          %1937 = vnop
        $region44: #{blstm_forward.3} parent=35 // pred_fallthru
          _
        // Predicated region
        $region82: #{blstm_forward.3} parent=35 // pred_check
          %p1938 = pneg %p196
        $region83: #{blstm_forward.3} parent=35 // pred_check_branch
          %1940 = sbr.rel (%p1938) target = $region85
        $region84: #{blstm_forward.3} parent=35 // pred_region
          _
        $region85: #{blstm_forward.3} parent=35 // pred_fallthru
          _
        // Predicated region
        $region86: #{blstm_forward.3} parent=35 // pred_check
          %p1941 = pneg %p222
        $region87: #{blstm_forward.3} parent=35 // pred_check_branch
          %1943 = sbr.rel (%p1941) target = $region89
        $region88: #{blstm_forward.3} parent=35 // pred_region
          _
        $region89: #{blstm_forward.3} parent=35 // pred_fallthru
          _
      $region36: #{blstm_forward.3} parent=5 // pred_fallthru
        _
      %p1944 = scmp.le.s32.totalorder 2, %s13
      // Predicated region
      $region90: #{blstm_forward.3} parent=5 // pred_check
        %p1945 = pneg %p1944
      $region91: #{blstm_forward.3} parent=5 // pred_check_branch
        %1947 = sbr.rel (%p1945) target = $region93
      $region92: #{blstm_forward.3} parent=5 // pred_region
        %s1948 = ssub.s32 %s13, 2
        // Predicated region
        $region94: #{blstm_forward.3} parent=92 // pred_check
          %p1949 = pneg %p176
        $region95: #{blstm_forward.3} parent=92 // pred_check_branch
          %1951 = sbr.rel (%p1949) target = $region97
        $region96: #{blstm_forward.3} parent=92 // pred_region
          %s1952 = sand.u32 %s161, 1
          %s1953 = sand.u32 %s161, 1
          %s1954 = smul.addr %s1953, 16
          %s1955 = scalar_lea.vmem [#allocation6], %s1954
        $region97: #{blstm_forward.3} parent=92 // pred_fallthru
          _
        // Predicated region
        $region98: #{blstm_forward.3} parent=92 // pred_check
          %p1956 = pneg %p202
        $region99: #{blstm_forward.3} parent=92 // pred_check_branch
          %1958 = sbr.rel (%p1956) target = $region101
        $region100: #{blstm_forward.3} parent=92 // pred_region
          %p1959 = scmp.lt.s32.totalorder %s24, 1
          %s1960 = scalar_select %p1959, %s24, 1
          %s1961 = scalar_lea.vmem %s5, %s1960
        $region101: #{blstm_forward.3} parent=92 // pred_fallthru
          _
        // Predicated region
        $region102: #{blstm_forward.3} parent=92 // pred_check
          %p1962 = pneg %p228
        $region103: #{blstm_forward.3} parent=92 // pred_check_branch
          %1964 = sbr.rel (%p1962) target = $region105
        $region104: #{blstm_forward.3} parent=92 // pred_region
          %p1965 = scmp.lt.s32.totalorder %s24, 1
          %s1966 = scalar_select %p1965, %s24, 1
          %s1967 = scalar_lea.vmem %s6, %s1966
        $region105: #{blstm_forward.3} parent=92 // pred_fallthru
          _
      $region93: #{blstm_forward.3} parent=5 // pred_fallthru
        _
    $region6: #{blstm_forward.3} parent=1 // loop_footer
      %s17 = sadd.s32 1, %s13
    $region7: #{blstm_forward.3} parent=1 // loop_footer_branch
      %12 = sbr.rel target = $region3
    $region8: #{blstm_forward.3} parent=1 // loop_exit
      _

// kernel: blstm_forward.4
$region0: #{blstm_forward.4}
  #allocation0 [shape = 'u32[]', space=smem, size = 0x4, offset = 0x4, fixed_abs, tag = 'smem constant byte address 0x4 - core index']
  #allocation1 [shape = 'u32[144,128]{1,0:T(1,128)}', space=vmem, size = 0x12000, scoped, tag = 'internal scratch']
  #allocation2 [shape = 'f32[8,128]{1,0:T(8,128)}', space=vmem, size = 0x1000, scoped, tag = 'scratch operand']
  #allocation3 [shape = 'f32[8,128]{1,0:T(8,128)}', space=vmem, size = 0x1000, scoped, tag = 'scratch operand']
  #allocation4 [shape = 'f32[4,8,512]{2,1,0:T(8,128)}', space=vmem, size = 0x10000, scoped, tag = 'scratch operand']
  #allocation5 [shape = 'f32[4,8,128]{2,1,0:T(8,128)}', space=vmem, size = 0x4000, scoped, tag = 'scratch operand']
  %s0 = inlined_call_operand.vmem [shape: bf16[64,256], index: 0, kind: input, shape index: {}]
  %s1 = inlined_call_operand.vmem [shape: bf16[2,256,512], index: 1, kind: input, shape index: {}]
  %s2 = inlined_call_operand.vmem [shape: bf16[2,128,512], index: 2, kind: input, shape index: {}]
  %s3 = inlined_call_operand.vmem [shape: f32[2,1,512], index: 3, kind: input, shape index: {}]
  %s4 = inlined_call_operand.vmem [shape: bf16[8,8,256], index: 4, kind: output, shape index: {0}]
  %s5 = inlined_call_operand.vmem [shape: f32[1,256], index: 5, kind: output, shape index: {1}]
  %s6 = inlined_call_operand.vmem [shape: f32[1,256], index: 6, kind: output, shape index: {2}]
  %7 = xla_tuple %s4, %s5, %s6
  %s8 = sld [smem:[#allocation0]]
  $region106: #{blstm_forward.4} parent=0
    _
  %s10 = ssub.s32 1, %s8
  %s11 = scalar_select 0, %s10, %s8
  $region1: #{blstm_forward.4} parent=0
    #allocation6 [shape = 'u8[16384]{0}', space=vmem, size = 0x4000, scoped, tag = 'output window, operand 0']
    loop: start=0, step=1, limit=6
    $region2: #{blstm_forward.4} parent=1 // loop_pre_header
      _
    $region3: #{blstm_forward.4} parent=1 // loop_header
      %s13 = sphi 0, %s17
      %p14 = scmp.ge.s32.totalorder %s13, 6
      %s20 = sphi 0, %s32
      %s21 = sphi 0, %s28
      %s22 = sphi 0, %s20
      %s23 = sphi 0, %s21
      %s24 = sphi 0, %s22
      %s25 = sphi 0, %s23
      %s43 = sphi 0, %s45
      %s46 = sphi 0, %s43
      %s47 = sphi 0, %s46
      %s63 = sphi 0, %s47
      %s69 = sphi 0, %s71
      %s72 = sphi 0, %s69
      %s73 = sphi 0, %s72
      %s89 = sphi 0, %s73
      %s95 = sphi 0, %s97
      %s98 = sphi 0, %s95
      %s99 = sphi 0, %s98
      %s115 = sphi 0, %s99
      %s121 = sphi 0, %s123
      %s124 = sphi 0, %s121
      %s125 = sphi 0, %s124
      %s141 = sphi 0, %s125
      %s157 = sphi 0, %s159
      %s160 = sphi 0, %s157
      %s161 = sphi 0, %s160
      %s177 = sphi 0, %s161
      %s183 = sphi 0, %s185
      %s186 = sphi 0, %s183
      %s187 = sphi 0, %s186
      %s203 = sphi 0, %s187
      %s209 = sphi 0, %s211
      %s212 = sphi 0, %s209
      %s213 = sphi 0, %s212
      %s229 = sphi 0, %s213
    $region4: #{blstm_forward.4} parent=1 // loop_header_branch
      %16 = sbr.rel (%p14) target = $region8
    $region5: #{blstm_forward.4} parent=1 // loop_body
      %s18 = ssub.s32 %s13, 1
      %s19 = ssub.s32 %s13, 2
      %s26 = sadd.s32 1, %s21
      %p27 = scmp.ge.s32.totalorder %s26, 2
      %s28 = scalar_select %p27, 0, %s26
      %s29 = sadd.s32 1, %s20
      %s30 = scalar_select %p27, %s29, %s20
      %p31 = scmp.ge.s32.totalorder %s30, 2
      %s32 = scalar_select %p31, 0, %s30
      %s33 = smul.u32 %s21, 2
      %s34 = ssub.s32 1, %s33
      %s35 = smul.u32 %s20, %s34
      %s36 = sadd.s32 %s21, %s35
      %s37 = smul.u32 %s28, 2
      %s38 = ssub.s32 1, %s37
      %s39 = smul.u32 %s32, %s38
      %s40 = sadd.s32 %s28, %s39
      %s41 = ssub.s32 %s36, %s40
      %p42 = scmp.eq.s32.totalorder %s41, 0
      %s44 = sadd.s32 %s43, 1
      %s45 = scalar_select %p42, %s43, %s44
      %p48 = pneg %p42
      %p49 = scmp.eq.s32.totalorder %s13, 3
      %p50 = por %p48, %p49
      %p51 = scmp.ne.s32.totalorder %s43, %s46
      %p52 = scmp.eq.s32.totalorder %s13, 0
      %p53 = por %p51, %p52
      %p54 = scmp.ne.s32.totalorder %s43, %s46
      %p55 = scmp.eq.s32.totalorder %s18, 3
      %p56 = por %p54, %p55
      %p57 = scmp.ne.s32.totalorder %s46, %s47
      %p58 = scmp.eq.s32.totalorder %s18, 0
      %p59 = por %p57, %p58
      %p60 = scmp.ne.s32.totalorder %s46, %s47
      %p61 = scmp.eq.s32.totalorder %s19, 3
      %p62 = por %p60, %p61
      %p64 = scmp.ne.s32.totalorder %s47, %s63
      %p65 = scmp.eq.s32.totalorder %s19, 0
      %p66 = por %p64, %p65
      %s67 = ssub.s32 %s20, %s32
      %p68 = scmp.eq.s32.totalorder %s67, 0
      %s70 = sadd.s32 %s69, 1
      %s71 = scalar_select %p68, %s69, %s70
      %p74 = pneg %p68
      %p75 = scmp.eq.s32.totalorder %s13, 3
      %p76 = por %p74, %p75
      %p77 = scmp.ne.s32.totalorder %s69, %s72
      %p78 = scmp.eq.s32.totalorder %s13, 0
      %p79 = por %p77, %p78
      %p80 = scmp.ne.s32.totalorder %s69, %s72
      %p81 = scmp.eq.s32.totalorder %s18, 3
      %p82 = por %p80, %p81
      %p83 = scmp.ne.s32.totalorder %s72, %s73
      %p84 = scmp.eq.s32.totalorder %s18, 0
      %p85 = por %p83, %p84
      %p86 = scmp.ne.s32.totalorder %s72, %s73
      %p87 = scmp.eq.s32.totalorder %s19, 3
      %p88 = por %p86, %p87
      %p90 = scmp.ne.s32.totalorder %s73, %s89
      %p91 = scmp.eq.s32.totalorder %s19, 0
      %p92 = por %p90, %p91
      %s93 = ssub.s32 %s20, %s32
      %p94 = scmp.eq.s32.totalorder %s93, 0
      %s96 = sadd.s32 %s95, 1
      %s97 = scalar_select %p94, %s95, %s96
      %p100 = pneg %p94
      %p101 = scmp.eq.s32.totalorder %s13, 3
      %p102 = por %p100, %p101
      %p103 = scmp.ne.s32.totalorder %s95, %s98
      %p104 = scmp.eq.s32.totalorder %s13, 0
      %p105 = por %p103, %p104
      %p106 = scmp.ne.s32.totalorder %s95, %s98
      %p107 = scmp.eq.s32.totalorder %s18, 3
      %p108 = por %p106, %p107
      %p109 = scmp.ne.s32.totalorder %s98, %s99
      %p110 = scmp.eq.s32.totalorder %s18, 0
      %p111 = por %p109, %p110
      %p112 = scmp.ne.s32.totalorder %s98, %s99
      %p113 = scmp.eq.s32.totalorder %s19, 3
      %p114 = por %p112, %p113
      %p116 = scmp.ne.s32.totalorder %s99, %s115
      %p117 = scmp.eq.s32.totalorder %s19, 0
      %p118 = por %p116, %p117
      %s119 = ssub.s32 %s20, %s32
      %p120 = scmp.eq.s32.totalorder %s119, 0
      %s122 = sadd.s32 %s121, 1
      %s123 = scalar_select %p120, %s121, %s122
      %p126 = pneg %p120
      %p127 = scmp.eq.s32.totalorder %s13, 3
      %p128 = por %p126, %p127
      %p129 = scmp.ne.s32.totalorder %s121, %s124
      %p130 = scmp.eq.s32.totalorder %s13, 0
      %p131 = por %p129, %p130
      %p132 = scmp.ne.s32.totalorder %s121, %s124
      %p133 = scmp.eq.s32.totalorder %s18, 3
      %p134 = por %p132, %p133
      %p135 = scmp.ne.s32.totalorder %s124, %s125
      %p136 = scmp.eq.s32.totalorder %s18, 0
      %p137 = por %p135, %p136
      %p138 = scmp.ne.s32.totalorder %s124, %s125
      %p139 = scmp.eq.s32.totalorder %s19, 3
      %p140 = por %p138, %p139
      %p142 = scmp.ne.s32.totalorder %s125, %s141
      %p143 = scmp.eq.s32.totalorder %s19, 0
      %p144 = por %p142, %p143
      %s145 = smul.u32 %s21, 2
      %s146 = ssub.s32 1, %s145
      %s147 = smul.u32 %s20, %s146
      %s148 = sadd.s32 %s21, %s147
      %s149 = smul.u32 %s28, 2
      %s150 = ssub.s32 1, %s149
      %s151 = smul.u32 %s32, %s150
      %s152 = sadd.s32 %s28, %s151
      %s153 = ssub.s32 %s148, %s152
      %s154 = ssub.s32 %s20, %s32
      %s155 = sor.u32 %s153, %s154
      %p156 = scmp.eq.s32.totalorder %s155, 0
      %s158 = sadd.s32 %s157, 1
      %s159 = scalar_select %p156, %s157, %s158
      %p162 = pneg %p156
      %p163 = scmp.eq.s32.totalorder %s13, 3
      %p164 = por %p162, %p163
      %p165 = scmp.ne.s32.totalorder %s157, %s160
      %p166 = scmp.eq.s32.totalorder %s13, 0
      %p167 = por %p165, %p166
      %p168 = scmp.ne.s32.totalorder %s157, %s160
      %p169 = scmp.eq.s32.totalorder %s18, 3
      %p170 = por %p168, %p169
      %p171 = scmp.ne.s32.totalorder %s160, %s161
      %p172 = scmp.eq.s32.totalorder %s18, 0
      %p173 = por %p171, %p172
      %p174 = scmp.ne.s32.totalorder %s160, %s161
      %p175 = scmp.eq.s32.totalorder %s19, 3
      %p176 = por %p174, %p175
      %p178 = scmp.ne.s32.totalorder %s161, %s177
      %p179 = scmp.eq.s32.totalorder %s19, 0
      %p180 = por %p178, %p179
      %s181 = ssub.s32 %s20, %s32
      %p182 = scmp.eq.s32.totalorder %s181, 0
      %s184 = sadd.s32 %s183, 1
      %s185 = scalar_select %p182, %s183, %s184
      %p188 = pneg %p182
      %p189 = scmp.eq.s32.totalorder %s13, 3
      %p190 = por %p188, %p189
      %p191 = scmp.ne.s32.totalorder %s183, %s186
      %p192 = scmp.eq.s32.totalorder %s13, 0
      %p193 = por %p191, %p192
      %p194 = scmp.ne.s32.totalorder %s183, %s186
      %p195 = scmp.eq.s32.totalorder %s18, 3
      %p196 = por %p194, %p195
      %p197 = scmp.ne.s32.totalorder %s186, %s187
      %p198 = scmp.eq.s32.totalorder %s18, 0
      %p199 = por %p197, %p198
      %p200 = scmp.ne.s32.totalorder %s186, %s187
      %p201 = scmp.eq.s32.totalorder %s19, 3
      %p202 = por %p200, %p201
      %p204 = scmp.ne.s32.totalorder %s187, %s203
      %p205 = scmp.eq.s32.totalorder %s19, 0
      %p206 = por %p204, %p205
      %s207 = ssub.s32 %s20, %s32
      %p208 = scmp.eq.s32.totalorder %s207, 0
      %s210 = sadd.s32 %s209, 1
      %s211 = scalar_select %p208, %s209, %s210
      %p214 = pneg %p208
      %p215 = scmp.eq.s32.totalorder %s13, 3
      %p216 = por %p214, %p215
      %p217 = scmp.ne.s32.totalorder %s209, %s212
      %p218 = scmp.eq.s32.totalorder %s13, 0
      %p219 = por %p217, %p218
      %p220 = scmp.ne.s32.totalorder %s209, %s212
      %p221 = scmp.eq.s32.totalorder %s18, 3
      %p222 = por %p220, %p221
      %p223 = scmp.ne.s32.totalorder %s212, %s213
      %p224 = scmp.eq.s32.totalorder %s18, 0
      %p225 = por %p223, %p224
      %p226 = scmp.ne.s32.totalorder %s212, %s213
      %p227 = scmp.eq.s32.totalorder %s19, 3
      %p228 = por %p226, %p227
      %p230 = scmp.ne.s32.totalorder %s213, %s229
      %p231 = scmp.eq.s32.totalorder %s19, 0
      %p232 = por %p230, %p231
      %p233 = scmp.le.s32.totalorder 1, %s13
      %p234 = scmp.lt.s32.totalorder %s13, 5
      %p235 = pnand %p233, %p234
      %p236 = pneg %p235
      // Predicated region
      $region9: #{blstm_forward.4} parent=5 // pred_check
        _
      $region10: #{blstm_forward.4} parent=5 // pred_check_branch
        %238 = sbr.rel (%p235) target = $region12
      $region11: #{blstm_forward.4} parent=5 // pred_region
        %s239 = ssub.s32 %s13, 1
        // Predicated region
        $region13: #{blstm_forward.4} parent=11 // pred_check
          %p240 = pneg %p85
        $region14: #{blstm_forward.4} parent=11 // pred_check_branch
          %242 = sbr.rel (%p240) target = $region16
        $region15: #{blstm_forward.4} parent=11 // pred_region
          %p243 = scmp.lt.s32.totalorder %s22, 1
          %s244 = scalar_select %p243, %s22, 1
          %s245 = smul.addr %s244, 128
          %s246 = smul.addr %s245, 4
          %s247 = scalar_lea.vmem %s1, %s246
        $region16: #{blstm_forward.4} parent=11 // pred_fallthru
          _
        // Predicated region
        $region17: #{blstm_forward.4} parent=11 // pred_check
          %p248 = pneg %p111
        $region18: #{blstm_forward.4} parent=11 // pred_check_branch
          %250 = sbr.rel (%p248) target = $region20
        $region19: #{blstm_forward.4} parent=11 // pred_region
          %p251 = scmp.lt.s32.totalorder %s22, 1
          %s252 = scalar_select %p251, %s22, 1
          %s253 = smul.addr %s252, 64
          %s254 = smul.addr %s253, 4
          %s255 = scalar_lea.vmem %s2, %s254
        $region20: #{blstm_forward.4} parent=11 // pred_fallthru
          _
        // Predicated region
        $region21: #{blstm_forward.4} parent=11 // pred_check
          %p256 = pneg %p137
        $region22: #{blstm_forward.4} parent=11 // pred_check_branch
          %258 = sbr.rel (%p256) target = $region24
        $region23: #{blstm_forward.4} parent=11 // pred_region
          %p259 = scmp.lt.s32.totalorder %s22, 1
          %s260 = scalar_select %p259, %s22, 1
          %s261 = smul.addr %s260, 4
          %s262 = scalar_lea.vmem %s3, %s261
        $region24: #{blstm_forward.4} parent=11 // pred_fallthru
          _
      $region12: #{blstm_forward.4} parent=5 // pred_fallthru
        _
      %p263 = scmp.lt.s32.totalorder %s13, 4
      // Predicated region
      $region25: #{blstm_forward.4} parent=5 // pred_check
        %p264 = pneg %p263
      $region26: #{blstm_forward.4} parent=5 // pred_check_branch
        %266 = sbr.rel (%p264) target = $region28
      $region27: #{blstm_forward.4} parent=5 // pred_region
        // Predicated region
        $region29: #{blstm_forward.4} parent=27 // pred_check
          %p267 = pneg %p53
        $region30: #{blstm_forward.4} parent=27 // pred_check_branch
          %269 = sbr.rel (%p267) target = $region32
        $region31: #{blstm_forward.4} parent=27 // pred_region
          %s270 = smul.u32 %s21, 2
          %s271 = ssub.s32 1, %s270
          %s272 = smul.u32 %s20, %s271
          %s273 = sadd.s32 %s21, %s272
          %s274 = smul.u32 4, %s273
          %p275 = scmp.lt.s32.totalorder %s274, 7
          %s276 = scalar_select %p275, %s274, 7
          %s277 = smul.addr %s276, 2
          %s278 = smul.addr %s277, 4
          %s279 = scalar_lea.vmem %s0, %s278
          %s280 = smul.u32 %s21, 2
          %s281 = ssub.s32 1, %s280
          %s282 = smul.u32 %s20, %s281
          %s283 = sadd.s32 %s21, %s282
          %s284 = smul.u32 4, %s283
        $region32: #{blstm_forward.4} parent=27 // pred_fallthru
          _
      $region28: #{blstm_forward.4} parent=5 // pred_fallthru
        _
      %p285 = scmp.le.s32.totalorder 1, %s13
      %p286 = scmp.lt.s32.totalorder %s13, 5
      %p287 = pnand %p285, %p286
      %p288 = pneg %p287
      // Predicated region
      $region33: #{blstm_forward.4} parent=5 // pred_check
        _
      $region34: #{blstm_forward.4} parent=5 // pred_check_branch
        %290 = sbr.rel (%p287) target = $region36
      $region35: #{blstm_forward.4} parent=5 // pred_region
        %s291 = ssub.s32 %s13, 1
        %s292 = smul.u32 %s23, 2
        %s293 = ssub.s32 1, %s292
        %s294 = smul.u32 %s22, %s293
        %s295 = sadd.s32 %s23, %s294
        %s296 = smul.u32 4, %s295
        %p297 = scmp.lt.s32.totalorder %s296, 7
        %s298 = scalar_select %p297, %s296, 7
        %s299 = smul.addr %s298, 2
        %s300 = smul.addr %s299, 4
        %s301 = scalar_lea.vmem %s0, %s300
        %p302 = pneg %p59
        %p303 = pneg %p56
        %p304 = scmp.lt.s32.totalorder %s22, 1
        %s305 = scalar_select %p304, %s22, 1
        %s306 = smul.addr %s305, 128
        %s307 = smul.addr %s306, 4
        %s308 = scalar_lea.vmem %s1, %s307
        %p309 = pneg %p85
        %p310 = pneg %p82
        %p311 = scmp.lt.s32.totalorder %s22, 1
        %s312 = scalar_select %p311, %s22, 1
        %s313 = smul.addr %s312, 64
        %s314 = smul.addr %s313, 4
        %s315 = scalar_lea.vmem %s2, %s314
        %p316 = pneg %p111
        %p317 = pneg %p108
        %p318 = scmp.lt.s32.totalorder %s22, 1
        %s319 = scalar_select %p318, %s22, 1
        %s320 = smul.addr %s319, 4
        %s321 = scalar_lea.vmem %s3, %s320
        %p322 = pneg %p137
        %p323 = pneg %p134
        %p324 = pneg %p173
        %p325 = pneg %p170
        %s326 = sand.u32 %s160, 1
        %s327 = sand.u32 %s160, 1
        %s328 = smul.addr %s327, 16
        %s329 = scalar_lea.vmem [#allocation6], %s328
        %p330 = pneg %p199
        %p331 = pneg %p196
        %p332 = scmp.lt.s32.totalorder %s22, 1
        %s333 = scalar_select %p332, %s22, 1
        %s334 = scalar_lea.vmem %s5, %s333
        %p335 = pneg %p225
        %p336 = pneg %p222
        %p337 = scmp.lt.s32.totalorder %s22, 1
        %s338 = scalar_select %p337, %s22, 1
        %s339 = scalar_lea.vmem %s6, %s338
        %s340 = smul.u32 %s23, 2
        %s341 = ssub.s32 1, %s340
        %s342 = smul.u32 %s22, %s341
        %s343 = sadd.s32 %s23, %s342
        %s344 = smul.u32 4, %s343
        %p345 = scmp.lt.s32.totalorder %s344, 7
        %s346 = scalar_select %p345, %s344, 7
        %s347 = smul.addr %s346, 2
        %s348 = smul.addr %s347, 4
        %s349 = scalar_lea.vmem %s0, %s348
        %s350 = smul.u32 %s23, 2
        %s351 = ssub.s32 1, %s350
        %s352 = smul.u32 %s22, %s351
        %s353 = sadd.s32 %s23, %s352
        %s354 = smul.u32 4, %s353
        %p355 = scmp.lt.s32.totalorder %s22, 1
        %s356 = scalar_select %p355, %s22, 1
        %s357 = smul.addr %s356, 128
        %s358 = smul.addr %s357, 4
        %s359 = scalar_lea.vmem %s1, %s358
        %p360 = scmp.lt.s32.totalorder %s22, 1
        %s361 = scalar_select %p360, %s22, 1
        %s362 = smul.addr %s361, 64
        %s363 = smul.addr %s362, 4
        %s364 = scalar_lea.vmem %s2, %s363
        %p365 = scmp.lt.s32.totalorder %s22, 1
        %s366 = scalar_select %p365, %s22, 1
        %s367 = smul.addr %s366, 4
        %s368 = scalar_lea.vmem %s3, %s367
        %s369 = smul.u32 %s23, 2
        %s370 = ssub.s32 1, %s369
        %s371 = smul.u32 %s22, %s370
        %s372 = sadd.s32 %s23, %s371
        %s373 = smul.u32 4, %s372
        %p374 = scmp.lt.s32.totalorder %s22, 1
        %s375 = scalar_select %p374, %s22, 1
        %s376 = scalar_lea.vmem %s5, %s375
        %p377 = scmp.lt.s32.totalorder %s22, 1
        %s378 = scalar_select %p377, %s22, 1
        %s379 = scalar_lea.vmem %s6, %s378
        %p381 = scmp.eq.s32.totalorder %s23, 0
        // Predicated region
        $region37: #{blstm_forward.4} parent=35 // pred_check
          %p382 = pneg %p381
        $region38: #{blstm_forward.4} parent=35 // pred_check_branch
          %384 = sbr.rel (%p382) target = $region40
        $region39: #{blstm_forward.4} parent=35 // pred_region
          %385 = vst [vmem:[#allocation2] sm:$0xff] 0.0
          %386 = vst [vmem:[#allocation3] sm:$0xff] 0.0
          %387 = vst [vmem:[%s376] sm:$0x1] 0.0
          %388 = vst [vmem:[%s379] sm:$0x1] 0.0
        $region40: #{blstm_forward.4} parent=35 // pred_fallthru
          _
        %v389 = vld [vmem:[%s349] sm:$0xff]
        %v390 = vld [vmem:[%s349 + $0x8] sm:$0xff]
        %v391 = vld [vmem:[%s349 + $0x10] sm:$0xff]
        %v392 = vld [vmem:[%s349 + $0x18] sm:$0xff]
        %v393 = vld [vmem:[%s359] sm:$0xff]
        %v394 = vld [vmem:[%s359 + $0x8] sm:$0xff]
        %v395 = vld [vmem:[%s359 + $0x10] sm:$0xff]
        %v396 = vld [vmem:[%s359 + $0x18] sm:$0xff]
        %v397 = vld [vmem:[%s359 + $0x20] sm:$0xff]
        %v398 = vld [vmem:[%s359 + $0x28] sm:$0xff]
        %v399 = vld [vmem:[%s359 + $0x30] sm:$0xff]
        %v400 = vld [vmem:[%s359 + $0x38] sm:$0xff]
        %v401 = vld [vmem:[%s359 + $0x40] sm:$0xff]
        %v402 = vld [vmem:[%s359 + $0x48] sm:$0xff]
        %v403 = vld [vmem:[%s359 + $0x50] sm:$0xff]
        %v404 = vld [vmem:[%s359 + $0x58] sm:$0xff]
        %v405 = vld [vmem:[%s359 + $0x60] sm:$0xff]
        %v406 = vld [vmem:[%s359 + $0x68] sm:$0xff]
        %v407 = vld [vmem:[%s359 + $0x70] sm:$0xff]
        %v408 = vld [vmem:[%s359 + $0x78] sm:$0xff]
        %v409 = vld [vmem:[%s359 + $0x80] sm:$0xff]
        %v410 = vld [vmem:[%s359 + $0x88] sm:$0xff]
        %v411 = vld [vmem:[%s359 + $0x90] sm:$0xff]
        %v412 = vld [vmem:[%s359 + $0x98] sm:$0xff]
        %v413 = vld [vmem:[%s359 + $0xa0] sm:$0xff]
        %v414 = vld [vmem:[%s359 + $0xa8] sm:$0xff]
        %v415 = vld [vmem:[%s359 + $0xb0] sm:$0xff]
        %v416 = vld [vmem:[%s359 + $0xb8] sm:$0xff]
        %v417 = vld [vmem:[%s359 + $0xc0] sm:$0xff]
        %v418 = vld [vmem:[%s359 + $0xc8] sm:$0xff]
        %v419 = vld [vmem:[%s359 + $0xd0] sm:$0xff]
        %v420 = vld [vmem:[%s359 + $0xd8] sm:$0xff]
        %v421 = vld [vmem:[%s359 + $0xe0] sm:$0xff]
        %v422 = vld [vmem:[%s359 + $0xe8] sm:$0xff]
        %v423 = vld [vmem:[%s359 + $0xf0] sm:$0xff]
        %v424 = vld [vmem:[%s359 + $0xf8] sm:$0xff]
        %v425 = vld [vmem:[%s359 + $0x100] sm:$0xff]
        %v426 = vld [vmem:[%s359 + $0x108] sm:$0xff]
        %v427 = vld [vmem:[%s359 + $0x110] sm:$0xff]
        %v428 = vld [vmem:[%s359 + $0x118] sm:$0xff]
        %v429 = vld [vmem:[%s359 + $0x120] sm:$0xff]
        %v430 = vld [vmem:[%s359 + $0x128] sm:$0xff]
        %v431 = vld [vmem:[%s359 + $0x130] sm:$0xff]
        %v432 = vld [vmem:[%s359 + $0x138] sm:$0xff]
        %v433 = vld [vmem:[%s359 + $0x140] sm:$0xff]
        %v434 = vld [vmem:[%s359 + $0x148] sm:$0xff]
        %v435 = vld [vmem:[%s359 + $0x150] sm:$0xff]
        %v436 = vld [vmem:[%s359 + $0x158] sm:$0xff]
        %v437 = vld [vmem:[%s359 + $0x160] sm:$0xff]
        %v438 = vld [vmem:[%s359 + $0x168] sm:$0xff]
        %v439 = vld [vmem:[%s359 + $0x170] sm:$0xff]
        %v440 = vld [vmem:[%s359 + $0x178] sm:$0xff]
        %v441 = vld [vmem:[%s359 + $0x180] sm:$0xff]
        %v442 = vld [vmem:[%s359 + $0x188] sm:$0xff]
        %v443 = vld [vmem:[%s359 + $0x190] sm:$0xff]
        %v444 = vld [vmem:[%s359 + $0x198] sm:$0xff]
        %v445 = vld [vmem:[%s359 + $0x1a0] sm:$0xff]
        %v446 = vld [vmem:[%s359 + $0x1a8] sm:$0xff]
        %v447 = vld [vmem:[%s359 + $0x1b0] sm:$0xff]
        %v448 = vld [vmem:[%s359 + $0x1b8] sm:$0xff]
        %v449 = vld [vmem:[%s359 + $0x1c0] sm:$0xff]
        %v450 = vld [vmem:[%s359 + $0x1c8] sm:$0xff]
        %v451 = vld [vmem:[%s359 + $0x1d0] sm:$0xff]
        %v452 = vld [vmem:[%s359 + $0x1d8] sm:$0xff]
        %v453 = vld [vmem:[%s359 + $0x1e0] sm:$0xff]
        %v454 = vld [vmem:[%s359 + $0x1e8] sm:$0xff]
        %v455 = vld [vmem:[%s359 + $0x1f0] sm:$0xff]
        %v456 = vld [vmem:[%s359 + $0x1f8] sm:$0xff]
        %v457 = vld [vmem:[%s368] sm:$0xf]
        %v459 = vlaneseq
        %v460 = vshrl.u32 %v459, 7
        %v461 = vsub.s32 0, %v460
        %v462 = vrot.slane %v457, %v461
        %v463 = vlaneseq
        %v464 = vshrl.u32 %v463, 7
        %v465 = vsub.s32 1, %v464
        %v466 = vrot.slane %v457, %v465
        %v467 = vlaneseq
        %v468 = vshrl.u32 %v467, 7
        %v469 = vsub.s32 2, %v468
        %v470 = vrot.slane %v457, %v469
        %v471 = vlaneseq
        %v472 = vshrl.u32 %v471, 7
        %v473 = vsub.s32 3, %v472
        %v474 = vrot.slane %v457, %v473
        %v483 = vunpack.c.l.b16 %v389
        %v484 = vunpack.c.h.b16 %v389
        %v485 = vunpack.c.l.b16 %v390
        %v486 = vunpack.c.h.b16 %v390
        %v487 = vunpack.c.l.b16 %v391
        %v488 = vunpack.c.h.b16 %v391
        %v489 = vunpack.c.l.b16 %v392
        %v490 = vunpack.c.h.b16 %v392
        %v491 = vpack.c.b16 %v485, %v483
        %v492 = vpack.c.b16 %v486, %v484
        %v493 = vpack.c.b16 %v489, %v487
        %v494 = vpack.c.b16 %v490, %v488
        %v563 = vunpack.c.l.b16 %v393
        %v564 = vunpack.c.h.b16 %v393
        %v565 = vunpack.c.l.b16 %v394
        %v566 = vunpack.c.h.b16 %v394
        %v567 = vunpack.c.l.b16 %v395
        %v568 = vunpack.c.h.b16 %v395
        %v569 = vunpack.c.l.b16 %v396
        %v570 = vunpack.c.h.b16 %v396
        %v571 = vunpack.c.l.b16 %v397
        %v572 = vunpack.c.h.b16 %v397
        %v573 = vunpack.c.l.b16 %v398
        %v574 = vunpack.c.h.b16 %v398
        %v575 = vunpack.c.l.b16 %v399
        %v576 = vunpack.c.h.b16 %v399
        %v577 = vunpack.c.l.b16 %v400
        %v578 = vunpack.c.h.b16 %v400
        %v579 = vunpack.c.l.b16 %v401
        %v580 = vunpack.c.h.b16 %v401
        %v581 = vunpack.c.l.b16 %v402
        %v582 = vunpack.c.h.b16 %v402
        %v583 = vunpack.c.l.b16 %v403
        %v584 = vunpack.c.h.b16 %v403
        %v585 = vunpack.c.l.b16 %v404
        %v586 = vunpack.c.h.b16 %v404
        %v587 = vunpack.c.l.b16 %v405
        %v588 = vunpack.c.h.b16 %v405
        %v589 = vunpack.c.l.b16 %v406
        %v590 = vunpack.c.h.b16 %v406
        %v591 = vunpack.c.l.b16 %v407
        %v592 = vunpack.c.h.b16 %v407
        %v593 = vunpack.c.l.b16 %v408
        %v594 = vunpack.c.h.b16 %v408
        %v595 = vunpack.c.l.b16 %v409
        %v596 = vunpack.c.h.b16 %v409
        %v597 = vunpack.c.l.b16 %v410
        %v598 = vunpack.c.h.b16 %v410
        %v599 = vunpack.c.l.b16 %v411
        %v600 = vunpack.c.h.b16 %v411
        %v601 = vunpack.c.l.b16 %v412
        %v602 = vunpack.c.h.b16 %v412
        %v603 = vunpack.c.l.b16 %v413
        %v604 = vunpack.c.h.b16 %v413
        %v605 = vunpack.c.l.b16 %v414
        %v606 = vunpack.c.h.b16 %v414
        %v607 = vunpack.c.l.b16 %v415
        %v608 = vunpack.c.h.b16 %v415
        %v609 = vunpack.c.l.b16 %v416
        %v610 = vunpack.c.h.b16 %v416
        %v611 = vunpack.c.l.b16 %v417
        %v612 = vunpack.c.h.b16 %v417
        %v613 = vunpack.c.l.b16 %v418
        %v614 = vunpack.c.h.b16 %v418
        %v615 = vunpack.c.l.b16 %v419
        %v616 = vunpack.c.h.b16 %v419
        %v617 = vunpack.c.l.b16 %v420
        %v618 = vunpack.c.h.b16 %v420
        %v619 = vunpack.c.l.b16 %v421
        %v620 = vunpack.c.h.b16 %v421
        %v621 = vunpack.c.l.b16 %v422
        %v622 = vunpack.c.h.b16 %v422
        %v623 = vunpack.c.l.b16 %v423
        %v624 = vunpack.c.h.b16 %v423
        %v625 = vunpack.c.l.b16 %v424
        %v626 = vunpack.c.h.b16 %v424
        %v627 = vunpack.c.l.b16 %v425
        %v628 = vunpack.c.h.b16 %v425
        %v629 = vunpack.c.l.b16 %v426
        %v630 = vunpack.c.h.b16 %v426
        %v631 = vunpack.c.l.b16 %v427
        %v632 = vunpack.c.h.b16 %v427
        %v633 = vunpack.c.l.b16 %v428
        %v634 = vunpack.c.h.b16 %v428
        %v635 = vunpack.c.l.b16 %v429
        %v636 = vunpack.c.h.b16 %v429
        %v637 = vunpack.c.l.b16 %v430
        %v638 = vunpack.c.h.b16 %v430
        %v639 = vunpack.c.l.b16 %v431
        %v640 = vunpack.c.h.b16 %v431
        %v641 = vunpack.c.l.b16 %v432
        %v642 = vunpack.c.h.b16 %v432
        %v643 = vunpack.c.l.b16 %v433
        %v644 = vunpack.c.h.b16 %v433
        %v645 = vunpack.c.l.b16 %v434
        %v646 = vunpack.c.h.b16 %v434
        %v647 = vunpack.c.l.b16 %v435
        %v648 = vunpack.c.h.b16 %v435
        %v649 = vunpack.c.l.b16 %v436
        %v650 = vunpack.c.h.b16 %v436
        %v651 = vunpack.c.l.b16 %v437
        %v652 = vunpack.c.h.b16 %v437
        %v653 = vunpack.c.l.b16 %v438
        %v654 = vunpack.c.h.b16 %v438
        %v655 = vunpack.c.l.b16 %v439
        %v656 = vunpack.c.h.b16 %v439
        %v657 = vunpack.c.l.b16 %v440
        %v658 = vunpack.c.h.b16 %v440
        %v659 = vunpack.c.l.b16 %v441
        %v660 = vunpack.c.h.b16 %v441
        %v661 = vunpack.c.l.b16 %v442
        %v662 = vunpack.c.h.b16 %v442
        %v663 = vunpack.c.l.b16 %v443
        %v664 = vunpack.c.h.b16 %v443
        %v665 = vunpack.c.l.b16 %v444
        %v666 = vunpack.c.h.b16 %v444
        %v667 = vunpack.c.l.b16 %v445
        %v668 = vunpack.c.h.b16 %v445
        %v669 = vunpack.c.l.b16 %v446
        %v670 = vunpack.c.h.b16 %v446
        %v671 = vunpack.c.l.b16 %v447
        %v672 = vunpack.c.h.b16 %v447
        %v673 = vunpack.c.l.b16 %v448
        %v674 = vunpack.c.h.b16 %v448
        %v675 = vunpack.c.l.b16 %v449
        %v676 = vunpack.c.h.b16 %v449
        %v677 = vunpack.c.l.b16 %v450
        %v678 = vunpack.c.h.b16 %v450
        %v679 = vunpack.c.l.b16 %v451
        %v680 = vunpack.c.h.b16 %v451
        %v681 = vunpack.c.l.b16 %v452
        %v682 = vunpack.c.h.b16 %v452
        %v683 = vunpack.c.l.b16 %v453
        %v684 = vunpack.c.h.b16 %v453
        %v685 = vunpack.c.l.b16 %v454
        %v686 = vunpack.c.h.b16 %v454
        %v687 = vunpack.c.l.b16 %v455
        %v688 = vunpack.c.h.b16 %v455
        %v689 = vunpack.c.l.b16 %v456
        %v690 = vunpack.c.h.b16 %v456
        %v691 = vpack.c.b16 %v567, %v563
        %v692 = vpack.c.b16 %v568, %v564
        %v693 = vpack.c.b16 %v569, %v565
        %v694 = vpack.c.b16 %v570, %v566
        %v695 = vpack.c.b16 %v575, %v571
        %v696 = vpack.c.b16 %v576, %v572
        %v697 = vpack.c.b16 %v577, %v573
        %v698 = vpack.c.b16 %v578, %v574
        %v699 = vpack.c.b16 %v583, %v579
        %v700 = vpack.c.b16 %v584, %v580
        %v701 = vpack.c.b16 %v585, %v581
        %v702 = vpack.c.b16 %v586, %v582
        %v703 = vpack.c.b16 %v591, %v587
        %v704 = vpack.c.b16 %v592, %v588
        %v705 = vpack.c.b16 %v593, %v589
        %v706 = vpack.c.b16 %v594, %v590
        %v707 = vpack.c.b16 %v599, %v595
        %v708 = vpack.c.b16 %v600, %v596
        %v709 = vpack.c.b16 %v601, %v597
        %v710 = vpack.c.b16 %v602, %v598
        %v711 = vpack.c.b16 %v607, %v603
        %v712 = vpack.c.b16 %v608, %v604
        %v713 = vpack.c.b16 %v609, %v605
        %v714 = vpack.c.b16 %v610, %v606
        %v715 = vpack.c.b16 %v615, %v611
        %v716 = vpack.c.b16 %v616, %v612
        %v717 = vpack.c.b16 %v617, %v613
        %v718 = vpack.c.b16 %v618, %v614
        %v719 = vpack.c.b16 %v623, %v619
        %v720 = vpack.c.b16 %v624, %v620
        %v721 = vpack.c.b16 %v625, %v621
        %v722 = vpack.c.b16 %v626, %v622
        %v723 = vpack.c.b16 %v631, %v627
        %v724 = vpack.c.b16 %v632, %v628
        %v725 = vpack.c.b16 %v633, %v629
        %v726 = vpack.c.b16 %v634, %v630
        %v727 = vpack.c.b16 %v639, %v635
        %v728 = vpack.c.b16 %v640, %v636
        %v729 = vpack.c.b16 %v641, %v637
        %v730 = vpack.c.b16 %v642, %v638
        %v731 = vpack.c.b16 %v647, %v643
        %v732 = vpack.c.b16 %v648, %v644
        %v733 = vpack.c.b16 %v649, %v645
        %v734 = vpack.c.b16 %v650, %v646
        %v735 = vpack.c.b16 %v655, %v651
        %v736 = vpack.c.b16 %v656, %v652
        %v737 = vpack.c.b16 %v657, %v653
        %v738 = vpack.c.b16 %v658, %v654
        %v739 = vpack.c.b16 %v663, %v659
        %v740 = vpack.c.b16 %v664, %v660
        %v741 = vpack.c.b16 %v665, %v661
        %v742 = vpack.c.b16 %v666, %v662
        %v743 = vpack.c.b16 %v671, %v667
        %v744 = vpack.c.b16 %v672, %v668
        %v745 = vpack.c.b16 %v673, %v669
        %v746 = vpack.c.b16 %v674, %v670
        %v747 = vpack.c.b16 %v679, %v675
        %v748 = vpack.c.b16 %v680, %v676
        %v749 = vpack.c.b16 %v681, %v677
        %v750 = vpack.c.b16 %v682, %v678
        %v751 = vpack.c.b16 %v687, %v683
        %v752 = vpack.c.b16 %v688, %v684
        %v753 = vpack.c.b16 %v689, %v685
        %v754 = vpack.c.b16 %v690, %v686
        %819 = vmatprep.subr.bf16.mxu0 %v692
        %820 = vmatpush1.bf16.msra.mxu0 %v691
        %821 = vmatprep.subr.bf16.mxu0 %v696
        %822 = vmatpush1.bf16.msra.mxu0 %v695
        %823 = vmatprep.subr.bf16.mxu0 %v700
        %824 = vmatpush1.bf16.msra.mxu0 %v699
        %825 = vmatprep.subr.bf16.mxu0 %v704
        %826 = vmatpush1.bf16.msra.mxu0 %v703
        %827 = vmatprep.subr.bf16.mxu0 %v708
        %828 = vmatpush1.bf16.msra.mxu0 %v707
        %829 = vmatprep.subr.bf16.mxu0 %v712
        %830 = vmatpush1.bf16.msra.mxu0 %v711
        %831 = vmatprep.subr.bf16.mxu0 %v716
        %832 = vmatpush1.bf16.msra.mxu0 %v715
        %833 = vmatprep.subr.bf16.mxu0 %v720
        %834 = vmatpush1.bf16.msra.mxu0 %v719
        %835 = vmatprep.subr.bf16.mxu0 %v724
        %836 = vmatpush1.bf16.msra.mxu0 %v723
        %837 = vmatprep.subr.bf16.mxu0 %v728
        %838 = vmatpush1.bf16.msra.mxu0 %v727
        %839 = vmatprep.subr.bf16.mxu0 %v732
        %840 = vmatpush1.bf16.msra.mxu0 %v731
        %841 = vmatprep.subr.bf16.mxu0 %v736
        %842 = vmatpush1.bf16.msra.mxu0 %v735
        %843 = vmatprep.subr.bf16.mxu0 %v740
        %844 = vmatpush1.bf16.msra.mxu0 %v739
        %845 = vmatprep.subr.bf16.mxu0 %v744
        %846 = vmatpush1.bf16.msra.mxu0 %v743
        %847 = vmatprep.subr.bf16.mxu0 %v748
        %848 = vmatpush1.bf16.msra.mxu0 %v747
        %849 = vmatprep.subr.bf16.mxu0 %v752
        %850 = vmatpush1.bf16.msra.mxu0 %v751
        %851 = vmatprep.mubr.bf16.mxu0 %v492
        %852 = vmatmul.mubr.bf16.gmra.mrb[0].mxu0 %v491
        %v853 = vpop.f32.mrb[0].mxu0
        %v854 = vadd.f32 %v462, %v853
        %v855 = vpop.f32.mrb[0].mxu0
        %v856 = vadd.f32 %v466, %v855
        %v857 = vpop.f32.mrb[0].mxu0
        %v858 = vadd.f32 %v462, %v857
        %v859 = vpop.f32.mrb[0].mxu0
        %v860 = vadd.f32 %v466, %v859
        %861 = vmatprep.mubr.bf16.mxu0 %v494
        %862 = vmatmul.mubr.bf16.gmra.mrb[0].mxu0 %v493
        %v863 = vpop.f32.mrb[0].mxu0
        %v864 = vadd.f32 %v462, %v863
        %v865 = vpop.f32.mrb[0].mxu0
        %v866 = vadd.f32 %v466, %v865
        %v867 = vpop.f32.mrb[0].mxu0
        %v868 = vadd.f32 %v462, %v867
        %v869 = vpop.f32.mrb[0].mxu0
        %v870 = vadd.f32 %v466, %v869
        %871 = vdwg.mxu0
        %872 = vmatprep.subr.bf16.mxu0 %v694
        %873 = vmatpush1.bf16.msra.mxu0 %v693
        %874 = vmatprep.subr.bf16.mxu0 %v698
        %875 = vmatpush1.bf16.msra.mxu0 %v697
        %876 = vmatprep.subr.bf16.mxu0 %v702
        %877 = vmatpush1.bf16.msra.mxu0 %v701
        %878 = vmatprep.subr.bf16.mxu0 %v706
        %879 = vmatpush1.bf16.msra.mxu0 %v705
        %880 = vmatprep.subr.bf16.mxu0 %v710
        %881 = vmatpush1.bf16.msra.mxu0 %v709
        %882 = vmatprep.subr.bf16.mxu0 %v714
        %883 = vmatpush1.bf16.msra.mxu0 %v713
        %884 = vmatprep.subr.bf16.mxu0 %v718
        %885 = vmatpush1.bf16.msra.mxu0 %v717
        %886 = vmatprep.subr.bf16.mxu0 %v722
        %887 = vmatpush1.bf16.msra.mxu0 %v721
        %888 = vmatprep.subr.bf16.mxu0 %v726
        %889 = vmatpush1.bf16.msra.mxu0 %v725
        %890 = vmatprep.subr.bf16.mxu0 %v730
        %891 = vmatpush1.bf16.msra.mxu0 %v729
        %892 = vmatprep.subr.bf16.mxu0 %v734
        %893 = vmatpush1.bf16.msra.mxu0 %v733
        %894 = vmatprep.subr.bf16.mxu0 %v738
        %895 = vmatpush1.bf16.msra.mxu0 %v737
        %896 = vmatprep.subr.bf16.mxu0 %v742
        %897 = vmatpush1.bf16.msra.mxu0 %v741
        %898 = vmatprep.subr.bf16.mxu0 %v746
        %899 = vmatpush1.bf16.msra.mxu0 %v745
        %900 = vmatprep.subr.bf16.mxu0 %v750
        %901 = vmatpush1.bf16.msra.mxu0 %v749
        %902 = vmatprep.subr.bf16.mxu0 %v754
        %903 = vmatpush1.bf16.msra.mxu0 %v753
        %904 = vmatprep.mubr.bf16.mxu0 %v492
        %905 = vmatmul.mubr.bf16.gmra.mrb[0].mxu0 %v491
        %v906 = vpop.f32.mrb[0].mxu0
        %v907 = vadd.f32 %v470, %v906
        %v908 = vpop.f32.mrb[0].mxu0
        %v909 = vadd.f32 %v474, %v908
        %v910 = vpop.f32.mrb[0].mxu0
        %v911 = vadd.f32 %v470, %v910
        %v912 = vpop.f32.mrb[0].mxu0
        %v913 = vadd.f32 %v474, %v912
        %914 = vmatprep.mubr.bf16.mxu0 %v494
        %915 = vmatmul.mubr.bf16.gmra.mrb[0].mxu0 %v493
        %v916 = vpop.f32.mrb[0].mxu0
        %v917 = vadd.f32 %v470, %v916
        %v918 = vpop.f32.mrb[0].mxu0
        %v919 = vadd.f32 %v474, %v918
        %v920 = vpop.f32.mrb[0].mxu0
        %v921 = vadd.f32 %v470, %v920
        %v922 = vpop.f32.mrb[0].mxu0
        %v923 = vadd.f32 %v474, %v922
        %924 = vdwg.mxu0
        %925 = vst [vmem:[#allocation4] sm:$0xff] %v854
        %926 = vst [vmem:[#allocation4 + $0x8] sm:$0xff] %v856
        %927 = vst [vmem:[#allocation4 + $0x10] sm:$0xff] %v907
        %928 = vst [vmem:[#allocation4 + $0x18] sm:$0xff] %v909
        %929 = vst [vmem:[#allocation4 + $0x20] sm:$0xff] %v858
        %930 = vst [vmem:[#allocation4 + $0x28] sm:$0xff] %v860
        %931 = vst [vmem:[#allocation4 + $0x30] sm:$0xff] %v911
        %932 = vst [vmem:[#allocation4 + $0x38] sm:$0xff] %v913
        %933 = vst [vmem:[#allocation4 + $0x40] sm:$0xff] %v864
        %934 = vst [vmem:[#allocation4 + $0x48] sm:$0xff] %v866
        %935 = vst [vmem:[#allocation4 + $0x50] sm:$0xff] %v917
        %936 = vst [vmem:[#allocation4 + $0x58] sm:$0xff] %v919
        %937 = vst [vmem:[#allocation4 + $0x60] sm:$0xff] %v868
        %938 = vst [vmem:[#allocation4 + $0x68] sm:$0xff] %v870
        %939 = vst [vmem:[#allocation4 + $0x70] sm:$0xff] %v921
        %940 = vst [vmem:[#allocation4 + $0x78] sm:$0xff] %v923
        %s941 = smul.u32 %s22, 3
        %s942 = smul.u32 %s22, 2
        %s943 = ssub.s32 1, %s942
        %v944 = vld [vmem:[#allocation2] sm:$0xff]
        %v945 = vld [vmem:[#allocation3] sm:$0xff]
        %s946 = smul.u32 %s941, 4
        %s947 = smul.addr %s946, 8
        %s948 = scalar_lea.vmem [#allocation4], %s947
        %v949 = vld [vmem:[%s948] sm:$0xff]
        %v950 = vld [vmem:[%s948 + $0x8] sm:$0xff]
        %v951 = vld [vmem:[%s948 + $0x10] sm:$0xff]
        %v952 = vld [vmem:[%s948 + $0x18] sm:$0xff]
        %v953 = vpack.c.bf16 %v944, %v944
        %v954 = vld [vmem:[%s364] sm:$0xff]
        %v955 = vld [vmem:[%s364 + $0x8] sm:$0xff]
        %v956 = vld [vmem:[%s364 + $0x10] sm:$0xff]
        %v957 = vld [vmem:[%s364 + $0x18] sm:$0xff]
        %v958 = vld [vmem:[%s364 + $0x20] sm:$0xff]
        %v959 = vld [vmem:[%s364 + $0x28] sm:$0xff]
        %v960 = vld [vmem:[%s364 + $0x30] sm:$0xff]
        %v961 = vld [vmem:[%s364 + $0x38] sm:$0xff]
        %v962 = vld [vmem:[%s364 + $0x40] sm:$0xff]
        %v963 = vld [vmem:[%s364 + $0x48] sm:$0xff]
        %v964 = vld [vmem:[%s364 + $0x50] sm:$0xff]
        %v965 = vld [vmem:[%s364 + $0x58] sm:$0xff]
        %v966 = vld [vmem:[%s364 + $0x60] sm:$0xff]
        %v967 = vld [vmem:[%s364 + $0x68] sm:$0xff]
        %v968 = vld [vmem:[%s364 + $0x70] sm:$0xff]
        %v969 = vld [vmem:[%s364 + $0x78] sm:$0xff]
        %v970 = vld [vmem:[%s364 + $0x80] sm:$0xff]
        %v971 = vld [vmem:[%s364 + $0x88] sm:$0xff]
        %v972 = vld [vmem:[%s364 + $0x90] sm:$0xff]
        %v973 = vld [vmem:[%s364 + $0x98] sm:$0xff]
        %v974 = vld [vmem:[%s364 + $0xa0] sm:$0xff]
        %v975 = vld [vmem:[%s364 + $0xa8] sm:$0xff]
        %v976 = vld [vmem:[%s364 + $0xb0] sm:$0xff]
        %v977 = vld [vmem:[%s364 + $0xb8] sm:$0xff]
        %v978 = vld [vmem:[%s364 + $0xc0] sm:$0xff]
        %v979 = vld [vmem:[%s364 + $0xc8] sm:$0xff]
        %v980 = vld [vmem:[%s364 + $0xd0] sm:$0xff]
        %v981 = vld [vmem:[%s364 + $0xd8] sm:$0xff]
        %v982 = vld [vmem:[%s364 + $0xe0] sm:$0xff]
        %v983 = vld [vmem:[%s364 + $0xe8] sm:$0xff]
        %v984 = vld [vmem:[%s364 + $0xf0] sm:$0xff]
        %v985 = vld [vmem:[%s364 + $0xf8] sm:$0xff]
        %v1018 = vunpack.c.l.b16 %v954
        %v1019 = vunpack.c.h.b16 %v954
        %v1020 = vunpack.c.l.b16 %v955
        %v1021 = vunpack.c.h.b16 %v955
        %v1022 = vunpack.c.l.b16 %v956
        %v1023 = vunpack.c.h.b16 %v956
        %v1024 = vunpack.c.l.b16 %v957
        %v1025 = vunpack.c.h.b16 %v957
        %v1026 = vunpack.c.l.b16 %v958
        %v1027 = vunpack.c.h.b16 %v958
        %v1028 = vunpack.c.l.b16 %v959
        %v1029 = vunpack.c.h.b16 %v959
        %v1030 = vunpack.c.l.b16 %v960
        %v1031 = vunpack.c.h.b16 %v960
        %v1032 = vunpack.c.l.b16 %v961
        %v1033 = vunpack.c.h.b16 %v961
        %v1034 = vunpack.c.l.b16 %v962
        %v1035 = vunpack.c.h.b16 %v962
        %v1036 = vunpack.c.l.b16 %v963
        %v1037 = vunpack.c.h.b16 %v963
        %v1038 = vunpack.c.l.b16 %v964
        %v1039 = vunpack.c.h.b16 %v964
        %v1040 = vunpack.c.l.b16 %v965
        %v1041 = vunpack.c.h.b16 %v965
        %v1042 = vunpack.c.l.b16 %v966
        %v1043 = vunpack.c.h.b16 %v966
        %v1044 = vunpack.c.l.b16 %v967
        %v1045 = vunpack.c.h.b16 %v967
        %v1046 = vunpack.c.l.b16 %v968
        %v1047 = vunpack.c.h.b16 %v968
        %v1048 = vunpack.c.l.b16 %v969
        %v1049 = vunpack.c.h.b16 %v969
        %v1050 = vunpack.c.l.b16 %v970
        %v1051 = vunpack.c.h.b16 %v970
        %v1052 = vunpack.c.l.b16 %v971
        %v1053 = vunpack.c.h.b16 %v971
        %v1054 = vunpack.c.l.b16 %v972
        %v1055 = vunpack.c.h.b16 %v972
        %v1056 = vunpack.c.l.b16 %v973
        %v1057 = vunpack.c.h.b16 %v973
        %v1058 = vunpack.c.l.b16 %v974
        %v1059 = vunpack.c.h.b16 %v974
        %v1060 = vunpack.c.l.b16 %v975
        %v1061 = vunpack.c.h.b16 %v975
        %v1062 = vunpack.c.l.b16 %v976
        %v1063 = vunpack.c.h.b16 %v976
        %v1064 = vunpack.c.l.b16 %v977
        %v1065 = vunpack.c.h.b16 %v977
        %v1066 = vunpack.c.l.b16 %v978
        %v1067 = vunpack.c.h.b16 %v978
        %v1068 = vunpack.c.l.b16 %v979
        %v1069 = vunpack.c.h.b16 %v979
        %v1070 = vunpack.c.l.b16 %v980
        %v1071 = vunpack.c.h.b16 %v980
        %v1072 = vunpack.c.l.b16 %v981
        %v1073 = vunpack.c.h.b16 %v981
        %v1074 = vunpack.c.l.b16 %v982
        %v1075 = vunpack.c.h.b16 %v982
        %v1076 = vunpack.c.l.b16 %v983
        %v1077 = vunpack.c.h.b16 %v983
        %v1078 = vunpack.c.l.b16 %v984
        %v1079 = vunpack.c.h.b16 %v984
        %v1080 = vunpack.c.l.b16 %v985
        %v1081 = vunpack.c.h.b16 %v985
        %v1082 = vpack.c.b16 %v1022, %v1018
        %v1083 = vpack.c.b16 %v1023, %v1019
        %v1084 = vpack.c.b16 %v1024, %v1020
        %v1085 = vpack.c.b16 %v1025, %v1021
        %v1086 = vpack.c.b16 %v1030, %v1026
        %v1087 = vpack.c.b16 %v1031, %v1027
        %v1088 = vpack.c.b16 %v1032, %v1028
        %v1089 = vpack.c.b16 %v1033, %v1029
        %v1090 = vpack.c.b16 %v1038, %v1034
        %v1091 = vpack.c.b16 %v1039, %v1035
        %v1092 = vpack.c.b16 %v1040, %v1036
        %v1093 = vpack.c.b16 %v1041, %v1037
        %v1094 = vpack.c.b16 %v1046, %v1042
        %v1095 = vpack.c.b16 %v1047, %v1043
        %v1096 = vpack.c.b16 %v1048, %v1044
        %v1097 = vpack.c.b16 %v1049, %v1045
        %v1098 = vpack.c.b16 %v1054, %v1050
        %v1099 = vpack.c.b16 %v1055, %v1051
        %v1100 = vpack.c.b16 %v1056, %v1052
        %v1101 = vpack.c.b16 %v1057, %v1053
        %v1102 = vpack.c.b16 %v1062, %v1058
        %v1103 = vpack.c.b16 %v1063, %v1059
        %v1104 = vpack.c.b16 %v1064, %v1060
        %v1105 = vpack.c.b16 %v1065, %v1061
        %v1106 = vpack.c.b16 %v1070, %v1066
        %v1107 = vpack.c.b16 %v1071, %v1067
        %v1108 = vpack.c.b16 %v1072, %v1068
        %v1109 = vpack.c.b16 %v1073, %v1069
        %v1110 = vpack.c.b16 %v1078, %v1074
        %v1111 = vpack.c.b16 %v1079, %v1075
        %v1112 = vpack.c.b16 %v1080, %v1076
        %v1113 = vpack.c.b16 %v1081, %v1077
        %1146 = vmatprep.subr.bf16.mxu0 %v1083
        %1147 = vmatpush1.bf16.msra.mxu0 %v1082
        %1148 = vmatprep.subr.bf16.mxu0 %v1087
        %1149 = vmatpush1.bf16.msra.mxu0 %v1086
        %1150 = vmatprep.subr.bf16.mxu0 %v1091
        %1151 = vmatpush1.bf16.msra.mxu0 %v1090
        %1152 = vmatprep.subr.bf16.mxu0 %v1095
        %1153 = vmatpush1.bf16.msra.mxu0 %v1094
        %1154 = vmatprep.subr.bf16.mxu0 %v1099
        %1155 = vmatpush1.bf16.msra.mxu0 %v1098
        %1156 = vmatprep.subr.bf16.mxu0 %v1103
        %1157 = vmatpush1.bf16.msra.mxu0 %v1102
        %1158 = vmatprep.subr.bf16.mxu0 %v1107
        %1159 = vmatpush1.bf16.msra.mxu0 %v1106
        %1160 = vmatprep.subr.bf16.mxu0 %v1111
        %1161 = vmatpush1.bf16.msra.mxu0 %v1110
        %1162 = vmatprep.subr.bf16.mxu0 0
        %1163 = vmatpush1.bf16.msra.mxu0 0
        %1164 = vmatprep.subr.bf16.mxu0 0
        %1165 = vmatpush1.bf16.msra.mxu0 0
        %1166 = vmatprep.subr.bf16.mxu0 0
        %1167 = vmatpush1.bf16.msra.mxu0 0
        %1168 = vmatprep.subr.bf16.mxu0 0
        %1169 = vmatpush1.bf16.msra.mxu0 0
        %1170 = vmatprep.subr.bf16.mxu0 0
        %1171 = vmatpush1.bf16.msra.mxu0 0
        %1172 = vmatprep.subr.bf16.mxu0 0
        %1173 = vmatpush1.bf16.msra.mxu0 0
        %1174 = vmatprep.subr.bf16.mxu0 0
        %1175 = vmatpush1.bf16.msra.mxu0 0
        %1176 = vmatprep.subr.bf16.mxu0 0
        %1177 = vmatpush1.bf16.msra.mxu0 0
        %1178 = vmatprep.mubr.bf16.mxu0 0
        %1179 = vmatmul.mubr.bf16.gmra.mrb[0].mxu0 %v953
        %v1180 = vpop.f32.mrb[0].mxu0
        %v1181 = vadd.f32 0.0, %v1180
        %v1182 = vpop.f32.mrb[0].mxu0
        %v1183 = vadd.f32 0.0, %v1182
        %v1184 = vpop.f32.mrb[0].mxu0
        %v1185 = vpop.f32.mrb[0].mxu0
        %1186 = vdwg.mxu0
        %1187 = vmatprep.subr.bf16.mxu0 %v1085
        %1188 = vmatpush1.bf16.msra.mxu0 %v1084
        %1189 = vmatprep.subr.bf16.mxu0 %v1089
        %1190 = vmatpush1.bf16.msra.mxu0 %v1088
        %1191 = vmatprep.subr.bf16.mxu0 %v1093
        %1192 = vmatpush1.bf16.msra.mxu0 %v1092
        %1193 = vmatprep.subr.bf16.mxu0 %v1097
        %1194 = vmatpush1.bf16.msra.mxu0 %v1096
        %1195 = vmatprep.subr.bf16.mxu0 %v1101
        %1196 = vmatpush1.bf16.msra.mxu0 %v1100
        %1197 = vmatprep.subr.bf16.mxu0 %v1105
        %1198 = vmatpush1.bf16.msra.mxu0 %v1104
        %1199 = vmatprep.subr.bf16.mxu0 %v1109
        %1200 = vmatpush1.bf16.msra.mxu0 %v1108
        %1201 = vmatprep.subr.bf16.mxu0 %v1113
        %1202 = vmatpush1.bf16.msra.mxu0 %v1112
        %1203 = vmatprep.subr.bf16.mxu0 0
        %1204 = vmatpush1.bf16.msra.mxu0 0
        %1205 = vmatprep.subr.bf16.mxu0 0
        %1206 = vmatpush1.bf16.msra.mxu0 0
        %1207 = vmatprep.subr.bf16.mxu0 0
        %1208 = vmatpush1.bf16.msra.mxu0 0
        %1209 = vmatprep.subr.bf16.mxu0 0
        %1210 = vmatpush1.bf16.msra.mxu0 0
        %1211 = vmatprep.subr.bf16.mxu0 0
        %1212 = vmatpush1.bf16.msra.mxu0 0
        %1213 = vmatprep.subr.bf16.mxu0 0
        %1214 = vmatpush1.bf16.msra.mxu0 0
        %1215 = vmatprep.subr.bf16.mxu0 0
        %1216 = vmatpush1.bf16.msra.mxu0 0
        %1217 = vmatprep.subr.bf16.mxu0 0
        %1218 = vmatpush1.bf16.msra.mxu0 0
        %1219 = vmatprep.mubr.bf16.mxu0 0
        %1220 = vmatmul.mubr.bf16.gmra.mrb[0].mxu0 %v953
        %v1221 = vpop.f32.mrb[0].mxu0
        %v1222 = vadd.f32 0.0, %v1221
        %v1223 = vpop.f32.mrb[0].mxu0
        %v1224 = vadd.f32 0.0, %v1223
        %v1225 = vpop.f32.mrb[0].mxu0
        %v1226 = vpop.f32.mrb[0].mxu0
        %1227 = vdwg.mxu0
        %v1228 = vadd.f32 %v949, %v1181
        %v1229 = vadd.f32 %v950, %v1183
        %v1230 = vadd.f32 %v951, %v1222
        %v1231 = vadd.f32 %v952, %v1224
        %v1232 = vmul.f32 %v1228, 0.5
        %v1233 = vtanh.pop %v1232
        %v1234 = vmul.f32 %v1233, 0.5
        %v1235 = vadd.f32 %v1234, 0.5
        %v1236 = vmul.f32 %v1229, 0.5
        %v1237 = vtanh.pop %v1236
        %v1238 = vmul.f32 %v1237, 0.5
        %v1239 = vadd.f32 %v1238, 0.5
        %v1240 = vtanh.pop %v1230
        %v1241 = vmul.f32 %v1231, 0.5
        %v1242 = vtanh.pop %v1241
        %v1243 = vmul.f32 %v1242, 0.5
        %v1244 = vadd.f32 %v1243, 0.5
        %v1245 = vmul.f32 %v1239, %v945
        %v1246 = vmul.f32 %v1235, %v1240
        %v1247 = vadd.f32 %v1245, %v1246
        %v1248 = vtanh.pop %v1247
        %v1249 = vmul.f32 %v1244, %v1248
        %s1250 = smul.u32 %s941, 8
        %s1251 = scalar_lea.vmem [#allocation5], %s1250
        %1252 = vst [vmem:[%s1251] sm:$0xff] %v1249
        %s1253 = sadd.s32 %s941, %s943
        %s1254 = smul.u32 %s1253, 4
        %s1255 = smul.addr %s1254, 8
        %s1256 = scalar_lea.vmem [#allocation4], %s1255
        %v1257 = vld [vmem:[%s1256] sm:$0xff]
        %v1258 = vld [vmem:[%s1256 + $0x8] sm:$0xff]
        %v1259 = vld [vmem:[%s1256 + $0x10] sm:$0xff]
        %v1260 = vld [vmem:[%s1256 + $0x18] sm:$0xff]
        %v1261 = vpack.c.bf16 %v1249, %v1249
        %v1262 = vld [vmem:[%s364] sm:$0xff]
        %v1263 = vld [vmem:[%s364 + $0x8] sm:$0xff]
        %v1264 = vld [vmem:[%s364 + $0x10] sm:$0xff]
        %v1265 = vld [vmem:[%s364 + $0x18] sm:$0xff]
        %v1266 = vld [vmem:[%s364 + $0x20] sm:$0xff]
        %v1267 = vld [vmem:[%s364 + $0x28] sm:$0xff]
        %v1268 = vld [vmem:[%s364 + $0x30] sm:$0xff]
        %v1269 = vld [vmem:[%s364 + $0x38] sm:$0xff]
        %v1270 = vld [vmem:[%s364 + $0x40] sm:$0xff]
        %v1271 = vld [vmem:[%s364 + $0x48] sm:$0xff]
        %v1272 = vld [vmem:[%s364 + $0x50] sm:$0xff]
        %v1273 = vld [vmem:[%s364 + $0x58] sm:$0xff]
        %v1274 = vld [vmem:[%s364 + $0x60] sm:$0xff]
        %v1275 = vld [vmem:[%s364 + $0x68] sm:$0xff]
        %v1276 = vld [vmem:[%s364 + $0x70] sm:$0xff]
        %v1277 = vld [vmem:[%s364 + $0x78] sm:$0xff]
        %v1278 = vld [vmem:[%s364 + $0x80] sm:$0xff]
        %v1279 = vld [vmem:[%s364 + $0x88] sm:$0xff]
        %v1280 = vld [vmem:[%s364 + $0x90] sm:$0xff]
        %v1281 = vld [vmem:[%s364 + $0x98] sm:$0xff]
        %v1282 = vld [vmem:[%s364 + $0xa0] sm:$0xff]
        %v1283 = vld [vmem:[%s364 + $0xa8] sm:$0xff]
        %v1284 = vld [vmem:[%s364 + $0xb0] sm:$0xff]
        %v1285 = vld [vmem:[%s364 + $0xb8] sm:$0xff]
        %v1286 = vld [vmem:[%s364 + $0xc0] sm:$0xff]
        %v1287 = vld [vmem:[%s364 + $0xc8] sm:$0xff]
        %v1288 = vld [vmem:[%s364 + $0xd0] sm:$0xff]
        %v1289 = vld [vmem:[%s364 + $0xd8] sm:$0xff]
        %v1290 = vld [vmem:[%s364 + $0xe0] sm:$0xff]
        %v1291 = vld [vmem:[%s364 + $0xe8] sm:$0xff]
        %v1292 = vld [vmem:[%s364 + $0xf0] sm:$0xff]
        %v1293 = vld [vmem:[%s364 + $0xf8] sm:$0xff]
        %v1326 = vunpack.c.l.b16 %v1262
        %v1327 = vunpack.c.h.b16 %v1262
        %v1328 = vunpack.c.l.b16 %v1263
        %v1329 = vunpack.c.h.b16 %v1263
        %v1330 = vunpack.c.l.b16 %v1264
        %v1331 = vunpack.c.h.b16 %v1264
        %v1332 = vunpack.c.l.b16 %v1265
        %v1333 = vunpack.c.h.b16 %v1265
        %v1334 = vunpack.c.l.b16 %v1266
        %v1335 = vunpack.c.h.b16 %v1266
        %v1336 = vunpack.c.l.b16 %v1267
        %v1337 = vunpack.c.h.b16 %v1267
        %v1338 = vunpack.c.l.b16 %v1268
        %v1339 = vunpack.c.h.b16 %v1268
        %v1340 = vunpack.c.l.b16 %v1269
        %v1341 = vunpack.c.h.b16 %v1269
        %v1342 = vunpack.c.l.b16 %v1270
        %v1343 = vunpack.c.h.b16 %v1270
        %v1344 = vunpack.c.l.b16 %v1271
        %v1345 = vunpack.c.h.b16 %v1271
        %v1346 = vunpack.c.l.b16 %v1272
        %v1347 = vunpack.c.h.b16 %v1272
        %v1348 = vunpack.c.l.b16 %v1273
        %v1349 = vunpack.c.h.b16 %v1273
        %v1350 = vunpack.c.l.b16 %v1274
        %v1351 = vunpack.c.h.b16 %v1274
        %v1352 = vunpack.c.l.b16 %v1275
        %v1353 = vunpack.c.h.b16 %v1275
        %v1354 = vunpack.c.l.b16 %v1276
        %v1355 = vunpack.c.h.b16 %v1276
        %v1356 = vunpack.c.l.b16 %v1277
        %v1357 = vunpack.c.h.b16 %v1277
        %v1358 = vunpack.c.l.b16 %v1278
        %v1359 = vunpack.c.h.b16 %v1278
        %v1360 = vunpack.c.l.b16 %v1279
        %v1361 = vunpack.c.h.b16 %v1279
        %v1362 = vunpack.c.l.b16 %v1280
        %v1363 = vunpack.c.h.b16 %v1280
        %v1364 = vunpack.c.l.b16 %v1281
        %v1365 = vunpack.c.h.b16 %v1281
        %v1366 = vunpack.c.l.b16 %v1282
        %v1367 = vunpack.c.h.b16 %v1282
        %v1368 = vunpack.c.l.b16 %v1283
        %v1369 = vunpack.c.h.b16 %v1283
        %v1370 = vunpack.c.l.b16 %v1284
        %v1371 = vunpack.c.h.b16 %v1284
        %v1372 = vunpack.c.l.b16 %v1285
        %v1373 = vunpack.c.h.b16 %v1285
        %v1374 = vunpack.c.l.b16 %v1286
        %v1375 = vunpack.c.h.b16 %v1286
        %v1376 = vunpack.c.l.b16 %v1287
        %v1377 = vunpack.c.h.b16 %v1287
        %v1378 = vunpack.c.l.b16 %v1288
        %v1379 = vunpack.c.h.b16 %v1288
        %v1380 = vunpack.c.l.b16 %v1289
        %v1381 = vunpack.c.h.b16 %v1289
        %v1382 = vunpack.c.l.b16 %v1290
        %v1383 = vunpack.c.h.b16 %v1290
        %v1384 = vunpack.c.l.b16 %v1291
        %v1385 = vunpack.c.h.b16 %v1291
        %v1386 = vunpack.c.l.b16 %v1292
        %v1387 = vunpack.c.h.b16 %v1292
        %v1388 = vunpack.c.l.b16 %v1293
        %v1389 = vunpack.c.h.b16 %v1293
        %v1390 = vpack.c.b16 %v1330, %v1326
        %v1391 = vpack.c.b16 %v1331, %v1327
        %v1392 = vpack.c.b16 %v1332, %v1328
        %v1393 = vpack.c.b16 %v1333, %v1329
        %v1394 = vpack.c.b16 %v1338, %v1334
        %v1395 = vpack.c.b16 %v1339, %v1335
        %v1396 = vpack.c.b16 %v1340, %v1336
        %v1397 = vpack.c.b16 %v1341, %v1337
        %v1398 = vpack.c.b16 %v1346, %v1342
        %v1399 = vpack.c.b16 %v1347, %v1343
        %v1400 = vpack.c.b16 %v1348, %v1344
        %v1401 = vpack.c.b16 %v1349, %v1345
        %v1402 = vpack.c.b16 %v1354, %v1350
        %v1403 = vpack.c.b16 %v1355, %v1351
        %v1404 = vpack.c.b16 %v1356, %v1352
        %v1405 = vpack.c.b16 %v1357, %v1353
        %v1406 = vpack.c.b16 %v1362, %v1358
        %v1407 = vpack.c.b16 %v1363, %v1359
        %v1408 = vpack.c.b16 %v1364, %v1360
        %v1409 = vpack.c.b16 %v1365, %v1361
        %v1410 = vpack.c.b16 %v1370, %v1366
        %v1411 = vpack.c.b16 %v1371, %v1367
        %v1412 = vpack.c.b16 %v1372, %v1368
        %v1413 = vpack.c.b16 %v1373, %v1369
        %v1414 = vpack.c.b16 %v1378, %v1374
        %v1415 = vpack.c.b16 %v1379, %v1375
        %v1416 = vpack.c.b16 %v1380, %v1376
        %v1417 = vpack.c.b16 %v1381, %v1377
        %v1418 = vpack.c.b16 %v1386, %v1382
        %v1419 = vpack.c.b16 %v1387, %v1383
        %v1420 = vpack.c.b16 %v1388, %v1384
        %v1421 = vpack.c.b16 %v1389, %v1385
        %1454 = vmatprep.subr.bf16.mxu0 %v1391
        %1455 = vmatpush1.bf16.msra.mxu0 %v1390
        %1456 = vmatprep.subr.bf16.mxu0 %v1395
        %1457 = vmatpush1.bf16.msra.mxu0 %v1394
        %1458 = vmatprep.subr.bf16.mxu0 %v1399
        %1459 = vmatpush1.bf16.msra.mxu0 %v1398
        %1460 = vmatprep.subr.bf16.mxu0 %v1403
        %1461 = vmatpush1.bf16.msra.mxu0 %v1402
        %1462 = vmatprep.subr.bf16.mxu0 %v1407
        %1463 = vmatpush1.bf16.msra.mxu0 %v1406
        %1464 = vmatprep.subr.bf16.mxu0 %v1411
        %1465 = vmatpush1.bf16.msra.mxu0 %v1410
        %1466 = vmatprep.subr.bf16.mxu0 %v1415
        %1467 = vmatpush1.bf16.msra.mxu0 %v1414
        %1468 = vmatprep.subr.bf16.mxu0 %v1419
        %1469 = vmatpush1.bf16.msra.mxu0 %v1418
        %1470 = vmatprep.subr.bf16.mxu0 0
        %1471 = vmatpush1.bf16.msra.mxu0 0
        %1472 = vmatprep.subr.bf16.mxu0 0
        %1473 = vmatpush1.bf16.msra.mxu0 0
        %1474 = vmatprep.subr.bf16.mxu0 0
        %1475 = vmatpush1.bf16.msra.mxu0 0
        %1476 = vmatprep.subr.bf16.mxu0 0
        %1477 = vmatpush1.bf16.msra.mxu0 0
        %1478 = vmatprep.subr.bf16.mxu0 0
        %1479 = vmatpush1.bf16.msra.mxu0 0
        %1480 = vmatprep.subr.bf16.mxu0 0
        %1481 = vmatpush1.bf16.msra.mxu0 0
        %1482 = vmatprep.subr.bf16.mxu0 0
        %1483 = vmatpush1.bf16.msra.mxu0 0
        %1484 = vmatprep.subr.bf16.mxu0 0
        %1485 = vmatpush1.bf16.msra.mxu0 0
        %1486 = vmatprep.mubr.bf16.mxu0 0
        %1487 = vmatmul.mubr.bf16.gmra.mrb[0].mxu0 %v1261
        %v1488 = vpop.f32.mrb[0].mxu0
        %v1489 = vadd.f32 0.0, %v1488
        %v1490 = vpop.f32.mrb[0].mxu0
        %v1491 = vadd.f32 0.0, %v1490
        %v1492 = vpop.f32.mrb[0].mxu0
        %v1493 = vpop.f32.mrb[0].mxu0
        %1494 = vdwg.mxu0
        %1495 = vmatprep.subr.bf16.mxu0 %v1393
        %1496 = vmatpush1.bf16.msra.mxu0 %v1392
        %1497 = vmatprep.subr.bf16.mxu0 %v1397
        %1498 = vmatpush1.bf16.msra.mxu0 %v1396
        %1499 = vmatprep.subr.bf16.mxu0 %v1401
        %1500 = vmatpush1.bf16.msra.mxu0 %v1400
        %1501 = vmatprep.subr.bf16.mxu0 %v1405
        %1502 = vmatpush1.bf16.msra.mxu0 %v1404
        %1503 = vmatprep.subr.bf16.mxu0 %v1409
        %1504 = vmatpush1.bf16.msra.mxu0 %v1408
        %1505 = vmatprep.subr.bf16.mxu0 %v1413
        %1506 = vmatpush1.bf16.msra.mxu0 %v1412
        %1507 = vmatprep.subr.bf16.mxu0 %v1417
        %1508 = vmatpush1.bf16.msra.mxu0 %v1416
        %1509 = vmatprep.subr.bf16.mxu0 %v1421
        %1510 = vmatpush1.bf16.msra.mxu0 %v1420
        %1511 = vmatprep.subr.bf16.mxu0 0
        %1512 = vmatpush1.bf16.msra.mxu0 0
        %1513 = vmatprep.subr.bf16.mxu0 0
        %1514 = vmatpush1.bf16.msra.mxu0 0
        %1515 = vmatprep.subr.bf16.mxu0 0
        %1516 = vmatpush1.bf16.msra.mxu0 0
        %1517 = vmatprep.subr.bf16.mxu0 0
        %1518 = vmatpush1.bf16.msra.mxu0 0
        %1519 = vmatprep.subr.bf16.mxu0 0
        %1520 = vmatpush1.bf16.msra.mxu0 0
        %1521 = vmatprep.subr.bf16.mxu0 0
        %1522 = vmatpush1.bf16.msra.mxu0 0
        %1523 = vmatprep.subr.bf16.mxu0 0
        %1524 = vmatpush1.bf16.msra.mxu0 0
        %1525 = vmatprep.subr.bf16.mxu0 0
        %1526 = vmatpush1.bf16.msra.mxu0 0
        %1527 = vmatprep.mubr.bf16.mxu0 0
        %1528 = vmatmul.mubr.bf16.gmra.mrb[0].mxu0 %v1261
        %v1529 = vpop.f32.mrb[0].mxu0
        %v1530 = vadd.f32 0.0, %v1529
        %v1531 = vpop.f32.mrb[0].mxu0
        %v1532 = vadd.f32 0.0, %v1531
        %v1533 = vpop.f32.mrb[0].mxu0
        %v1534 = vpop.f32.mrb[0].mxu0
        %1535 = vdwg.mxu0
        %v1536 = vadd.f32 %v1257, %v1489
        %v1537 = vadd.f32 %v1258, %v1491
        %v1538 = vadd.f32 %v1259, %v1530
        %v1539 = vadd.f32 %v1260, %v1532
        %v1540 = vmul.f32 %v1536, 0.5
        %v1541 = vtanh.pop %v1540
        %v1542 = vmul.f32 %v1541, 0.5
        %v1543 = vadd.f32 %v1542, 0.5
        %v1544 = vmul.f32 %v1537, 0.5
        %v1545 = vtanh.pop %v1544
        %v1546 = vmul.f32 %v1545, 0.5
        %v1547 = vadd.f32 %v1546, 0.5
        %v1548 = vtanh.pop %v1538
        %v1549 = vmul.f32 %v1539, 0.5
        %v1550 = vtanh.pop %v1549
        %v1551 = vmul.f32 %v1550, 0.5
        %v1552 = vadd.f32 %v1551, 0.5
        %v1553 = vmul.f32 %v1547, %v1247
        %v1554 = vmul.f32 %v1543, %v1548
        %v1555 = vadd.f32 %v1553, %v1554
        %v1556 = vtanh.pop %v1555
        %v1557 = vmul.f32 %v1552, %v1556
        %s1558 = smul.u32 %s1253, 8
        %s1559 = scalar_lea.vmem [#allocation5], %s1558
        %1560 = vst [vmem:[%s1559] sm:$0xff] %v1557
        %s1561 = smul.u32 %s943, 2
        %s1562 = sadd.s32 %s941, %s1561
        %s1563 = smul.u32 %s1562, 4
        %s1564 = smul.addr %s1563, 8
        %s1565 = scalar_lea.vmem [#allocation4], %s1564
        %v1566 = vld [vmem:[%s1565] sm:$0xff]
        %v1567 = vld [vmem:[%s1565 + $0x8] sm:$0xff]
        %v1568 = vld [vmem:[%s1565 + $0x10] sm:$0xff]
        %v1569 = vld [vmem:[%s1565 + $0x18] sm:$0xff]
        %v1570 = vpack.c.bf16 %v1557, %v1557
        %v1571 = vld [vmem:[%s364] sm:$0xff]
        %v1572 = vld [vmem:[%s364 + $0x8] sm:$0xff]
        %v1573 = vld [vmem:[%s364 + $0x10] sm:$0xff]
        %v1574 = vld [vmem:[%s364 + $0x18] sm:$0xff]
        %v1575 = vld [vmem:[%s364 + $0x20] sm:$0xff]
        %v1576 = vld [vmem:[%s364 + $0x28] sm:$0xff]
        %v1577 = vld [vmem:[%s364 + $0x30] sm:$0xff]
        %v1578 = vld [vmem:[%s364 + $0x38] sm:$0xff]
        %v1579 = vld [vmem:[%s364 + $0x40] sm:$0xff]
        %v1580 = vld [vmem:[%s364 + $0x48] sm:$0xff]
        %v1581 = vld [vmem:[%s364 + $0x50] sm:$0xff]
        %v1582 = vld [vmem:[%s364 + $0x58] sm:$0xff]
        %v1583 = vld [vmem:[%s364 + $0x60] sm:$0xff]
        %v1584 = vld [vmem:[%s364 + $0x68] sm:$0xff]
        %v1585 = vld [vmem:[%s364 + $0x70] sm:$0xff]
        %v1586 = vld [vmem:[%s364 + $0x78] sm:$0xff]
        %v1587 = vld [vmem:[%s364 + $0x80] sm:$0xff]
        %v1588 = vld [vmem:[%s364 + $0x88] sm:$0xff]
        %v1589 = vld [vmem:[%s364 + $0x90] sm:$0xff]
        %v1590 = vld [vmem:[%s364 + $0x98] sm:$0xff]
        %v1591 = vld [vmem:[%s364 + $0xa0] sm:$0xff]
        %v1592 = vld [vmem:[%s364 + $0xa8] sm:$0xff]
        %v1593 = vld [vmem:[%s364 + $0xb0] sm:$0xff]
        %v1594 = vld [vmem:[%s364 + $0xb8] sm:$0xff]
        %v1595 = vld [vmem:[%s364 + $0xc0] sm:$0xff]
        %v1596 = vld [vmem:[%s364 + $0xc8] sm:$0xff]
        %v1597 = vld [vmem:[%s364 + $0xd0] sm:$0xff]
        %v1598 = vld [vmem:[%s364 + $0xd8] sm:$0xff]
        %v1599 = vld [vmem:[%s364 + $0xe0] sm:$0xff]
        %v1600 = vld [vmem:[%s364 + $0xe8] sm:$0xff]
        %v1601 = vld [vmem:[%s364 + $0xf0] sm:$0xff]
        %v1602 = vld [vmem:[%s364 + $0xf8] sm:$0xff]
        %v1635 = vunpack.c.l.b16 %v1571
        %v1636 = vunpack.c.h.b16 %v1571
        %v1637 = vunpack.c.l.b16 %v1572
        %v1638 = vunpack.c.h.b16 %v1572
        %v1639 = vunpack.c.l.b16 %v1573
        %v1640 = vunpack.c.h.b16 %v1573
        %v1641 = vunpack.c.l.b16 %v1574
        %v1642 = vunpack.c.h.b16 %v1574
        %v1643 = vunpack.c.l.b16 %v1575
        %v1644 = vunpack.c.h.b16 %v1575
        %v1645 = vunpack.c.l.b16 %v1576
        %v1646 = vunpack.c.h.b16 %v1576
        %v1647 = vunpack.c.l.b16 %v1577
        %v1648 = vunpack.c.h.b16 %v1577
        %v1649 = vunpack.c.l.b16 %v1578
        %v1650 = vunpack.c.h.b16 %v1578
        %v1651 = vunpack.c.l.b16 %v1579
        %v1652 = vunpack.c.h.b16 %v1579
        %v1653 = vunpack.c.l.b16 %v1580
        %v1654 = vunpack.c.h.b16 %v1580
        %v1655 = vunpack.c.l.b16 %v1581
        %v1656 = vunpack.c.h.b16 %v1581
        %v1657 = vunpack.c.l.b16 %v1582
        %v1658 = vunpack.c.h.b16 %v1582
        %v1659 = vunpack.c.l.b16 %v1583
        %v1660 = vunpack.c.h.b16 %v1583
        %v1661 = vunpack.c.l.b16 %v1584
        %v1662 = vunpack.c.h.b16 %v1584
        %v1663 = vunpack.c.l.b16 %v1585
        %v1664 = vunpack.c.h.b16 %v1585
        %v1665 = vunpack.c.l.b16 %v1586
        %v1666 = vunpack.c.h.b16 %v1586
        %v1667 = vunpack.c.l.b16 %v1587
        %v1668 = vunpack.c.h.b16 %v1587
        %v1669 = vunpack.c.l.b16 %v1588
        %v1670 = vunpack.c.h.b16 %v1588
        %v1671 = vunpack.c.l.b16 %v1589
        %v1672 = vunpack.c.h.b16 %v1589
        %v1673 = vunpack.c.l.b16 %v1590
        %v1674 = vunpack.c.h.b16 %v1590
        %v1675 = vunpack.c.l.b16 %v1591
        %v1676 = vunpack.c.h.b16 %v1591
        %v1677 = vunpack.c.l.b16 %v1592
        %v1678 = vunpack.c.h.b16 %v1592
        %v1679 = vunpack.c.l.b16 %v1593
        %v1680 = vunpack.c.h.b16 %v1593
        %v1681 = vunpack.c.l.b16 %v1594
        %v1682 = vunpack.c.h.b16 %v1594
        %v1683 = vunpack.c.l.b16 %v1595
        %v1684 = vunpack.c.h.b16 %v1595
        %v1685 = vunpack.c.l.b16 %v1596
        %v1686 = vunpack.c.h.b16 %v1596
        %v1687 = vunpack.c.l.b16 %v1597
        %v1688 = vunpack.c.h.b16 %v1597
        %v1689 = vunpack.c.l.b16 %v1598
        %v1690 = vunpack.c.h.b16 %v1598
        %v1691 = vunpack.c.l.b16 %v1599
        %v1692 = vunpack.c.h.b16 %v1599
        %v1693 = vunpack.c.l.b16 %v1600
        %v1694 = vunpack.c.h.b16 %v1600
        %v1695 = vunpack.c.l.b16 %v1601
        %v1696 = vunpack.c.h.b16 %v1601
        %v1697 = vunpack.c.l.b16 %v1602
        %v1698 = vunpack.c.h.b16 %v1602
        %v1699 = vpack.c.b16 %v1639, %v1635
        %v1700 = vpack.c.b16 %v1640, %v1636
        %v1701 = vpack.c.b16 %v1641, %v1637
        %v1702 = vpack.c.b16 %v1642, %v1638
        %v1703 = vpack.c.b16 %v1647, %v1643
        %v1704 = vpack.c.b16 %v1648, %v1644
        %v1705 = vpack.c.b16 %v1649, %v1645
        %v1706 = vpack.c.b16 %v1650, %v1646
        %v1707 = vpack.c.b16 %v1655, %v1651
        %v1708 = vpack.c.b16 %v1656, %v1652
        %v1709 = vpack.c.b16 %v1657, %v1653
        %v1710 = vpack.c.b16 %v1658, %v1654
        %v1711 = vpack.c.b16 %v1663, %v1659
        %v1712 = vpack.c.b16 %v1664, %v1660
        %v1713 = vpack.c.b16 %v1665, %v1661
        %v1714 = vpack.c.b16 %v1666, %v1662
        %v1715 = vpack.c.b16 %v1671, %v1667
        %v1716 = vpack.c.b16 %v1672, %v1668
        %v1717 = vpack.c.b16 %v1673, %v1669
        %v1718 = vpack.c.b16 %v1674, %v1670
        %v1719 = vpack.c.b16 %v1679, %v1675
        %v1720 = vpack.c.b16 %v1680, %v1676
        %v1721 = vpack.c.b16 %v1681, %v1677
        %v1722 = vpack.c.b16 %v1682, %v1678
        %v1723 = vpack.c.b16 %v1687, %v1683
        %v1724 = vpack.c.b16 %v1688, %v1684
        %v1725 = vpack.c.b16 %v1689, %v1685
        %v1726 = vpack.c.b16 %v1690, %v1686
        %v1727 = vpack.c.b16 %v1695, %v1691
        %v1728 = vpack.c.b16 %v1696, %v1692
        %v1729 = vpack.c.b16 %v1697, %v1693
        %v1730 = vpack.c.b16 %v1698, %v1694
        %1763 = vmatprep.subr.bf16.mxu0 %v1700
        %1764 = vmatpush1.bf16.msra.mxu0 %v1699
        %1765 = vmatprep.subr.bf16.mxu0 %v1704
        %1766 = vmatpush1.bf16.msra.mxu0 %v1703
        %1767 = vmatprep.subr.bf16.mxu0 %v1708
        %1768 = vmatpush1.bf16.msra.mxu0 %v1707
        %1769 = vmatprep.subr.bf16.mxu0 %v1712
        %1770 = vmatpush1.bf16.msra.mxu0 %v1711
        %1771 = vmatprep.subr.bf16.mxu0 %v1716
        %1772 = vmatpush1.bf16.msra.mxu0 %v1715
        %1773 = vmatprep.subr.bf16.mxu0 %v1720
        %1774 = vmatpush1.bf16.msra.mxu0 %v1719
        %1775 = vmatprep.subr.bf16.mxu0 %v1724
        %1776 = vmatpush1.bf16.msra.mxu0 %v1723
        %1777 = vmatprep.subr.bf16.mxu0 %v1728
        %1778 = vmatpush1.bf16.msra.mxu0 %v1727
        %1779 = vmatprep.subr.bf16.mxu0 0
        %1780 = vmatpush1.bf16.msra.mxu0 0
        %1781 = vmatprep.subr.bf16.mxu0 0
        %1782 = vmatpush1.bf16.msra.mxu0 0
        %1783 = vmatprep.subr.bf16.mxu0 0
        %1784 = vmatpush1.bf16.msra.mxu0 0
        %1785 = vmatprep.subr.bf16.mxu0 0
        %1786 = vmatpush1.bf16.msra.mxu0 0
        %1787 = vmatprep.subr.bf16.mxu0 0
        %1788 = vmatpush1.bf16.msra.mxu0 0
        %1789 = vmatprep.subr.bf16.mxu0 0
        %1790 = vmatpush1.bf16.msra.mxu0 0
        %1791 = vmatprep.subr.bf16.mxu0 0
        %1792 = vmatpush1.bf16.msra.mxu0 0
        %1793 = vmatprep.subr.bf16.mxu0 0
        %1794 = vmatpush1.bf16.msra.mxu0 0
        %1795 = vmatprep.mubr.bf16.mxu0 0
        %1796 = vmatmul.mubr.bf16.gmra.mrb[0].mxu0 %v1570
        %v1797 = vpop.f32.mrb[0].mxu0
        %v1798 = vadd.f32 0.0, %v1797
        %v1799 = vpop.f32.mrb[0].mxu0
        %v1800 = vadd.f32 0.0, %v1799
        %v1801 = vpop.f32.mrb[0].mxu0
        %v1802 = vpop.f32.mrb[0].mxu0
        %1803 = vdwg.mxu0
        %1804 = vmatprep.subr.bf16.mxu0 %v1702
        %1805 = vmatpush1.bf16.msra.mxu0 %v1701
        %1806 = vmatprep.subr.bf16.mxu0 %v1706
        %1807 = vmatpush1.bf16.msra.mxu0 %v1705
        %1808 = vmatprep.subr.bf16.mxu0 %v1710
        %1809 = vmatpush1.bf16.msra.mxu0 %v1709
        %1810 = vmatprep.subr.bf16.mxu0 %v1714
        %1811 = vmatpush1.bf16.msra.mxu0 %v1713
        %1812 = vmatprep.subr.bf16.mxu0 %v1718
        %1813 = vmatpush1.bf16.msra.mxu0 %v1717
        %1814 = vmatprep.subr.bf16.mxu0 %v1722
        %1815 = vmatpush1.bf16.msra.mxu0 %v1721
        %1816 = vmatprep.subr.bf16.mxu0 %v1726
        %1817 = vmatpush1.bf16.msra.mxu0 %v1725
        %1818 = vmatprep.subr.bf16.mxu0 %v1730
        %1819 = vmatpush1.bf16.msra.mxu0 %v1729
        %1820 = vmatprep.subr.bf16.mxu0 0
        %1821 = vmatpush1.bf16.msra.mxu0 0
        %1822 = vmatprep.subr.bf16.mxu0 0
        %1823 = vmatpush1.bf16.msra.mxu0 0
        %1824 = vmatprep.subr.bf16.mxu0 0
        %1825 = vmatpush1.bf16.msra.mxu0 0
        %1826 = vmatprep.subr.bf16.mxu0 0
        %1827 = vmatpush1.bf16.msra.mxu0 0
        %1828 = vmatprep.subr.bf16.mxu0 0
        %1829 = vmatpush1.bf16.msra.mxu0 0
        %1830 = vmatprep.subr.bf16.mxu0 0
        %1831 = vmatpush1.bf16.msra.mxu0 0
        %1832 = vmatprep.subr.bf16.mxu0 0
        %1833 = vmatpush1.bf16.msra.mxu0 0
        %1834 = vmatprep.subr.bf16.mxu0 0
        %1835 = vmatpush1.bf16.msra.mxu0 0
        %1836 = vmatprep.mubr.bf16.mxu0 0
        %1837 = vmatmul.mubr.bf16.gmra.mrb[0].mxu0 %v1570
        %v1838 = vpop.f32.mrb[0].mxu0
        %v1839 = vadd.f32 0.0, %v1838
        %v1840 = vpop.f32.mrb[0].mxu0
        %v1841 = vadd.f32 0.0, %v1840
        %v1842 = vpop.f32.mrb[0].mxu0
        %v1843 = vpop.f32.mrb[0].mxu0
        %1844 = vdwg.mxu0
        %v1845 = vadd.f32 %v1566, %v1798
        %v1846 = vadd.f32 %v1567, %v1800
        %v1847 = vadd.f32 %v1568, %v1839
        %v1848 = vadd.f32 %v1569, %v1841
        %v1849 = vmul.f32 %v1845, 0.5
        %v1850 = vtanh.pop %v1849
        %v1851 = vmul.f32 %v1850, 0.5
        %v1852 = vadd.f32 %v1851, 0.5
        %v1853 = vmul.f32 %v1846, 0.5
        %v1854 = vtanh.pop %v1853
        %v1855 = vmul.f32 %v1854, 0.5
        %v1856 = vadd.f32 %v1855, 0.5
        %v1857 = vtanh.pop %v1847
        %v1858 = vmul.f32 %v1848, 0.5
        %v1859 = vtanh.pop %v1858
        %v1860 = vmul.f32 %v1859, 0.5
        %v1861 = vadd.f32 %v1860, 0.5
        %v1862 = vmul.f32 %v1856, %v1555
        %v1863 = vmul.f32 %v1852, %v1857
        %v1864 = vadd.f32 %v1862, %v1863
        %v1865 = vtanh.pop %v1864
        %v1866 = vmul.f32 %v1861, %v1865
        %s1867 = smul.u32 %s1562, 8
        %s1868 = scalar_lea.vmem [#allocation5], %s1867
        %1869 = vst [vmem:[%s1868] sm:$0xff] %v1866
        %s1870 = smul.u32 %s943, 3
        %s1871 = sadd.s32 %s941, %s1870
        %s1872 = smul.u32 %s1871, 4
        %s1873 = smul.addr %s1872, 8
        %s1874 = scalar_lea.vmem [#allocation4], %s1873
        %v1875 = vld [vmem:[%s1874] sm:$0xff]
        %v1876 = vld [vmem:[%s1874 + $0x8] sm:$0xff]
        %v1877 = vld [vmem:[%s1874 + $0x10] sm:$0xff]
        %v1878 = vld [vmem:[%s1874 + $0x18] sm:$0xff]
        %v1879 = vpack.c.bf16 %v1866, %v1866
        %v1880 = vld [vmem:[%s364] sm:$0xff]
        %v1881 = vld [vmem:[%s364 + $0x8] sm:$0xff]
        %v1882 = vld [vmem:[%s364 + $0x10] sm:$0xff]
        %v1883 = vld [vmem:[%s364 + $0x18] sm:$0xff]
        %v1884 = vld [vmem:[%s364 + $0x20] sm:$0xff]
        %v1885 = vld [vmem:[%s364 + $0x28] sm:$0xff]
        %v1886 = vld [vmem:[%s364 + $0x30] sm:$0xff]
        %v1887 = vld [vmem:[%s364 + $0x38] sm:$0xff]
        %v1888 = vld [vmem:[%s364 + $0x40] sm:$0xff]
        %v1889 = vld [vmem:[%s364 + $0x48] sm:$0xff]
        %v1890 = vld [vmem:[%s364 + $0x50] sm:$0xff]
        %v1891 = vld [vmem:[%s364 + $0x58] sm:$0xff]
        %v1892 = vld [vmem:[%s364 + $0x60] sm:$0xff]
        %v1893 = vld [vmem:[%s364 + $0x68] sm:$0xff]
        %v1894 = vld [vmem:[%s364 + $0x70] sm:$0xff]
        %v1895 = vld [vmem:[%s364 + $0x78] sm:$0xff]
        %v1896 = vld [vmem:[%s364 + $0x80] sm:$0xff]
        %v1897 = vld [vmem:[%s364 + $0x88] sm:$0xff]
        %v1898 = vld [vmem:[%s364 + $0x90] sm:$0xff]
        %v1899 = vld [vmem:[%s364 + $0x98] sm:$0xff]
        %v1900 = vld [vmem:[%s364 + $0xa0] sm:$0xff]
        %v1901 = vld [vmem:[%s364 + $0xa8] sm:$0xff]
        %v1902 = vld [vmem:[%s364 + $0xb0] sm:$0xff]
        %v1903 = vld [vmem:[%s364 + $0xb8] sm:$0xff]
        %v1904 = vld [vmem:[%s364 + $0xc0] sm:$0xff]
        %v1905 = vld [vmem:[%s364 + $0xc8] sm:$0xff]
        %v1906 = vld [vmem:[%s364 + $0xd0] sm:$0xff]
        %v1907 = vld [vmem:[%s364 + $0xd8] sm:$0xff]
        %v1908 = vld [vmem:[%s364 + $0xe0] sm:$0xff]
        %v1909 = vld [vmem:[%s364 + $0xe8] sm:$0xff]
        %v1910 = vld [vmem:[%s364 + $0xf0] sm:$0xff]
        %v1911 = vld [vmem:[%s364 + $0xf8] sm:$0xff]
        %v1944 = vunpack.c.l.b16 %v1880
        %v1945 = vunpack.c.h.b16 %v1880
        %v1946 = vunpack.c.l.b16 %v1881
        %v1947 = vunpack.c.h.b16 %v1881
        %v1948 = vunpack.c.l.b16 %v1882
        %v1949 = vunpack.c.h.b16 %v1882
        %v1950 = vunpack.c.l.b16 %v1883
        %v1951 = vunpack.c.h.b16 %v1883
        %v1952 = vunpack.c.l.b16 %v1884
        %v1953 = vunpack.c.h.b16 %v1884
        %v1954 = vunpack.c.l.b16 %v1885
        %v1955 = vunpack.c.h.b16 %v1885
        %v1956 = vunpack.c.l.b16 %v1886
        %v1957 = vunpack.c.h.b16 %v1886
        %v1958 = vunpack.c.l.b16 %v1887
        %v1959 = vunpack.c.h.b16 %v1887
        %v1960 = vunpack.c.l.b16 %v1888
        %v1961 = vunpack.c.h.b16 %v1888
        %v1962 = vunpack.c.l.b16 %v1889
        %v1963 = vunpack.c.h.b16 %v1889
        %v1964 = vunpack.c.l.b16 %v1890
        %v1965 = vunpack.c.h.b16 %v1890
        %v1966 = vunpack.c.l.b16 %v1891
        %v1967 = vunpack.c.h.b16 %v1891
        %v1968 = vunpack.c.l.b16 %v1892
        %v1969 = vunpack.c.h.b16 %v1892
        %v1970 = vunpack.c.l.b16 %v1893
        %v1971 = vunpack.c.h.b16 %v1893
        %v1972 = vunpack.c.l.b16 %v1894
        %v1973 = vunpack.c.h.b16 %v1894
        %v1974 = vunpack.c.l.b16 %v1895
        %v1975 = vunpack.c.h.b16 %v1895
        %v1976 = vunpack.c.l.b16 %v1896
        %v1977 = vunpack.c.h.b16 %v1896
        %v1978 = vunpack.c.l.b16 %v1897
        %v1979 = vunpack.c.h.b16 %v1897
        %v1980 = vunpack.c.l.b16 %v1898
        %v1981 = vunpack.c.h.b16 %v1898
        %v1982 = vunpack.c.l.b16 %v1899
        %v1983 = vunpack.c.h.b16 %v1899
        %v1984 = vunpack.c.l.b16 %v1900
        %v1985 = vunpack.c.h.b16 %v1900
        %v1986 = vunpack.c.l.b16 %v1901
        %v1987 = vunpack.c.h.b16 %v1901
        %v1988 = vunpack.c.l.b16 %v1902
        %v1989 = vunpack.c.h.b16 %v1902
        %v1990 = vunpack.c.l.b16 %v1903
        %v1991 = vunpack.c.h.b16 %v1903
        %v1992 = vunpack.c.l.b16 %v1904
        %v1993 = vunpack.c.h.b16 %v1904
        %v1994 = vunpack.c.l.b16 %v1905
        %v1995 = vunpack.c.h.b16 %v1905
        %v1996 = vunpack.c.l.b16 %v1906
        %v1997 = vunpack.c.h.b16 %v1906
        %v1998 = vunpack.c.l.b16 %v1907
        %v1999 = vunpack.c.h.b16 %v1907
        %v2000 = vunpack.c.l.b16 %v1908
        %v2001 = vunpack.c.h.b16 %v1908
        %v2002 = vunpack.c.l.b16 %v1909
        %v2003 = vunpack.c.h.b16 %v1909
        %v2004 = vunpack.c.l.b16 %v1910
        %v2005 = vunpack.c.h.b16 %v1910
        %v2006 = vunpack.c.l.b16 %v1911
        %v2007 = vunpack.c.h.b16 %v1911
        %v2008 = vpack.c.b16 %v1948, %v1944
        %v2009 = vpack.c.b16 %v1949, %v1945
        %v2010 = vpack.c.b16 %v1950, %v1946
        %v2011 = vpack.c.b16 %v1951, %v1947
        %v2012 = vpack.c.b16 %v1956, %v1952
        %v2013 = vpack.c.b16 %v1957, %v1953
        %v2014 = vpack.c.b16 %v1958, %v1954
        %v2015 = vpack.c.b16 %v1959, %v1955
        %v2016 = vpack.c.b16 %v1964, %v1960
        %v2017 = vpack.c.b16 %v1965, %v1961
        %v2018 = vpack.c.b16 %v1966, %v1962
        %v2019 = vpack.c.b16 %v1967, %v1963
        %v2020 = vpack.c.b16 %v1972, %v1968
        %v2021 = vpack.c.b16 %v1973, %v1969
        %v2022 = vpack.c.b16 %v1974, %v1970
        %v2023 = vpack.c.b16 %v1975, %v1971
        %v2024 = vpack.c.b16 %v1980, %v1976
        %v2025 = vpack.c.b16 %v1981, %v1977
        %v2026 = vpack.c.b16 %v1982, %v1978
        %v2027 = vpack.c.b16 %v1983, %v1979
        %v2028 = vpack.c.b16 %v1988, %v1984
        %v2029 = vpack.c.b16 %v1989, %v1985
        %v2030 = vpack.c.b16 %v1990, %v1986
        %v2031 = vpack.c.b16 %v1991, %v1987
        %v2032 = vpack.c.b16 %v1996, %v1992
        %v2033 = vpack.c.b16 %v1997, %v1993
        %v2034 = vpack.c.b16 %v1998, %v1994
        %v2035 = vpack.c.b16 %v1999, %v1995
        %v2036 = vpack.c.b16 %v2004, %v2000
        %v2037 = vpack.c.b16 %v2005, %v2001
        %v2038 = vpack.c.b16 %v2006, %v2002
        %v2039 = vpack.c.b16 %v2007, %v2003
        %2072 = vmatprep.subr.bf16.mxu0 %v2009
        %2073 = vmatpush1.bf16.msra.mxu0 %v2008
        %2074 = vmatprep.subr.bf16.mxu0 %v2013
        %2075 = vmatpush1.bf16.msra.mxu0 %v2012
        %2076 = vmatprep.subr.bf16.mxu0 %v2017
        %2077 = vmatpush1.bf16.msra.mxu0 %v2016
        %2078 = vmatprep.subr.bf16.mxu0 %v2021
        %2079 = vmatpush1.bf16.msra.mxu0 %v2020
        %2080 = vmatprep.subr.bf16.mxu0 %v2025
        %2081 = vmatpush1.bf16.msra.mxu0 %v2024
        %2082 = vmatprep.subr.bf16.mxu0 %v2029
        %2083 = vmatpush1.bf16.msra.mxu0 %v2028
        %2084 = vmatprep.subr.bf16.mxu0 %v2033
        %2085 = vmatpush1.bf16.msra.mxu0 %v2032
        %2086 = vmatprep.subr.bf16.mxu0 %v2037
        %2087 = vmatpush1.bf16.msra.mxu0 %v2036
        %2088 = vmatprep.subr.bf16.mxu0 0
        %2089 = vmatpush1.bf16.msra.mxu0 0
        %2090 = vmatprep.subr.bf16.mxu0 0
        %2091 = vmatpush1.bf16.msra.mxu0 0
        %2092 = vmatprep.subr.bf16.mxu0 0
        %2093 = vmatpush1.bf16.msra.mxu0 0
        %2094 = vmatprep.subr.bf16.mxu0 0
        %2095 = vmatpush1.bf16.msra.mxu0 0
        %2096 = vmatprep.subr.bf16.mxu0 0
        %2097 = vmatpush1.bf16.msra.mxu0 0
        %2098 = vmatprep.subr.bf16.mxu0 0
        %2099 = vmatpush1.bf16.msra.mxu0 0
        %2100 = vmatprep.subr.bf16.mxu0 0
        %2101 = vmatpush1.bf16.msra.mxu0 0
        %2102 = vmatprep.subr.bf16.mxu0 0
        %2103 = vmatpush1.bf16.msra.mxu0 0
        %2104 = vmatprep.mubr.bf16.mxu0 0
        %2105 = vmatmul.mubr.bf16.gmra.mrb[0].mxu0 %v1879
        %v2106 = vpop.f32.mrb[0].mxu0
        %v2107 = vadd.f32 0.0, %v2106
        %v2108 = vpop.f32.mrb[0].mxu0
        %v2109 = vadd.f32 0.0, %v2108
        %v2110 = vpop.f32.mrb[0].mxu0
        %v2111 = vpop.f32.mrb[0].mxu0
        %2112 = vdwg.mxu0
        %2113 = vmatprep.subr.bf16.mxu0 %v2011
        %2114 = vmatpush1.bf16.msra.mxu0 %v2010
        %2115 = vmatprep.subr.bf16.mxu0 %v2015
        %2116 = vmatpush1.bf16.msra.mxu0 %v2014
        %2117 = vmatprep.subr.bf16.mxu0 %v2019
        %2118 = vmatpush1.bf16.msra.mxu0 %v2018
        %2119 = vmatprep.subr.bf16.mxu0 %v2023
        %2120 = vmatpush1.bf16.msra.mxu0 %v2022
        %2121 = vmatprep.subr.bf16.mxu0 %v2027
        %2122 = vmatpush1.bf16.msra.mxu0 %v2026
        %2123 = vmatprep.subr.bf16.mxu0 %v2031
        %2124 = vmatpush1.bf16.msra.mxu0 %v2030
        %2125 = vmatprep.subr.bf16.mxu0 %v2035
        %2126 = vmatpush1.bf16.msra.mxu0 %v2034
        %2127 = vmatprep.subr.bf16.mxu0 %v2039
        %2128 = vmatpush1.bf16.msra.mxu0 %v2038
        %2129 = vmatprep.subr.bf16.mxu0 0
        %2130 = vmatpush1.bf16.msra.mxu0 0
        %2131 = vmatprep.subr.bf16.mxu0 0
        %2132 = vmatpush1.bf16.msra.mxu0 0
        %2133 = vmatprep.subr.bf16.mxu0 0
        %2134 = vmatpush1.bf16.msra.mxu0 0
        %2135 = vmatprep.subr.bf16.mxu0 0
        %2136 = vmatpush1.bf16.msra.mxu0 0
        %2137 = vmatprep.subr.bf16.mxu0 0
        %2138 = vmatpush1.bf16.msra.mxu0 0
        %2139 = vmatprep.subr.bf16.mxu0 0
        %2140 = vmatpush1.bf16.msra.mxu0 0
        %2141 = vmatprep.subr.bf16.mxu0 0
        %2142 = vmatpush1.bf16.msra.mxu0 0
        %2143 = vmatprep.subr.bf16.mxu0 0
        %2144 = vmatpush1.bf16.msra.mxu0 0
        %2145 = vmatprep.mubr.bf16.mxu0 0
        %2146 = vmatmul.mubr.bf16.gmra.mrb[0].mxu0 %v1879
        %v2147 = vpop.f32.mrb[0].mxu0
        %v2148 = vadd.f32 0.0, %v2147
        %v2149 = vpop.f32.mrb[0].mxu0
        %v2150 = vadd.f32 0.0, %v2149
        %v2151 = vpop.f32.mrb[0].mxu0
        %v2152 = vpop.f32.mrb[0].mxu0
        %2153 = vdwg.mxu0
        %v2154 = vadd.f32 %v1875, %v2107
        %v2155 = vadd.f32 %v1876, %v2109
        %v2156 = vadd.f32 %v1877, %v2148
        %v2157 = vadd.f32 %v1878, %v2150
        %v2158 = vmul.f32 %v2154, 0.5
        %v2159 = vtanh.pop %v2158
        %v2160 = vmul.f32 %v2159, 0.5
        %v2161 = vadd.f32 %v2160, 0.5
        %v2162 = vmul.f32 %v2155, 0.5
        %v2163 = vtanh.pop %v2162
        %v2164 = vmul.f32 %v2163, 0.5
        %v2165 = vadd.f32 %v2164, 0.5
        %v2166 = vtanh.pop %v2156
        %v2167 = vmul.f32 %v2157, 0.5
        %v2168 = vtanh.pop %v2167
        %v2169 = vmul.f32 %v2168, 0.5
        %v2170 = vadd.f32 %v2169, 0.5
        %v2171 = vmul.f32 %v2165, %v1864
        %v2172 = vmul.f32 %v2161, %v2166
        %v2173 = vadd.f32 %v2171, %v2172
        %v2174 = vtanh.pop %v2173
        %v2175 = vmul.f32 %v2170, %v2174
        %s2176 = smul.u32 %s1871, 8
        %s2177 = scalar_lea.vmem [#allocation5], %s2176
        %2178 = vst [vmem:[%s2177] sm:$0xff] %v2175
        %2179 = vst [vmem:[#allocation2] sm:$0xff] %v2175
        %2180 = vst [vmem:[#allocation3] sm:$0xff] %v2173
        %v2181 = vld [vmem:[#allocation5] sm:$0xff]
        %v2182 = vld [vmem:[#allocation5 + $0x8] sm:$0xff]
        %v2183 = vld [vmem:[#allocation5 + $0x10] sm:$0xff]
        %v2184 = vld [vmem:[#allocation5 + $0x18] sm:$0xff]
        %v2185 = vpack.c.bf16 %v2181, %v2181
        %v2186 = vpack.c.bf16 %v2182, %v2182
        %v2187 = vpack.c.bf16 %v2183, %v2183
        %v2188 = vpack.c.bf16 %v2184, %v2184
        %2189 = vst [vmem:[%s329] sm:$0xf] %v2185
        %2190 = vst [vmem:[%s329 + $0x4] sm:$0xf] %v2186
        %2191 = vst [vmem:[%s329 + $0x8] sm:$0xf] %v2187
        %2192 = vst [vmem:[%s329 + $0xc] sm:$0xf] %v2188
        %v2193 = vld [vmem:[%s376] sm:$0x1]
        %vm2194 = vcmask 1041408
        %v2195 = vsel %vm2194, %v2181, 0.0
        %v2196 = vsel %vm2194, %v2182, 0.0
        %v2197 = vadd.f32 %v2195, %v2196
        %v2198 = vsel %vm2194, %v2183, 0.0
        %v2199 = vadd.f32 %v2197, %v2198
        %v2200 = vsel %vm2194, %v2184, 0.0
        %v2201 = vadd.f32 %v2199, %v2200
        %v2202 = vrot.slane %v2201, 4
        %v2203 = vadd.f32 %v2201, %v2202
        %v2204 = vrot.slane %v2203, 2
        %v2205 = vadd.f32 %v2203, %v2204
        %v2206 = vrot.slane %v2205, 1
        %v2207 = vadd.f32 %v2205, %v2206
        %v2208 = vadd.f32 %v2193, %v2207
        %2209 = vst [vmem:[%s376] sm:$0x1] %v2208
        %v2210 = vld [vmem:[%s379] sm:$0x1]
        %v2211 = vmul.f32 %v2181, %v2181
        %v2212 = vmul.f32 %v2182, %v2182
        %v2213 = vmul.f32 %v2183, %v2183
        %v2214 = vmul.f32 %v2184, %v2184
        %v2215 = vsel %vm2194, %v2211, 0.0
        %v2216 = vsel %vm2194, %v2212, 0.0
        %v2217 = vadd.f32 %v2215, %v2216
        %v2218 = vsel %vm2194, %v2213, 0.0
        %v2219 = vadd.f32 %v2217, %v2218
        %v2220 = vsel %vm2194, %v2214, 0.0
        %v2221 = vadd.f32 %v2219, %v2220
        %v2222 = vrot.slane %v2221, 4
        %v2223 = vadd.f32 %v2221, %v2222
        %v2224 = vrot.slane %v2223, 2
        %v2225 = vadd.f32 %v2223, %v2224
        %v2226 = vrot.slane %v2225, 1
        %v2227 = vadd.f32 %v2225, %v2226
        %v2228 = vadd.f32 %v2210, %v2227
        %2229 = vst [vmem:[%s379] sm:$0x1] %v2228
        %s2230 = sand.u32 %s160, 1
        %s2231 = sand.u32 %s160, 1
        %s2232 = smul.addr %s2231, 16
        %s2233 = scalar_lea.vmem [#allocation6], %s2232
        %p2234 = scmp.lt.s32.totalorder %s22, 1
        %s2235 = scalar_select %p2234, %s22, 1
        %s2236 = scalar_lea.vmem %s5, %s2235
        %p2237 = scmp.lt.s32.totalorder %s22, 1
        %s2238 = scalar_select %p2237, %s22, 1
        %s2239 = scalar_lea.vmem %s6, %s2238
        // Predicated region
        $region41: #{blstm_forward.4} parent=35 // pred_check
          %p2240 = pneg %p170
        $region42: #{blstm_forward.4} parent=35 // pred_check_branch
          %2242 = sbr.rel (%p2240) target = $region44
        $region43: #{blstm_forward.4} parent=35 // pred_region
          %s2243 = smul.u32 %s23, 2
          %s2244 = ssub.s32 1, %s2243
          %s2245 = smul.u32 %s22, %s2244
          %s2246 = sadd.s32 %s23, %s2245
          %s2247 = smul.u32 4, %s2246
          %s2248 = smul.addr %s2247, 2
          %s2249 = sadd.s32 %s22, %s2248
          %s2250 = smul.addr %s2249, 4
          %s2251 = scalar_lea.vmem %s4, %s2250
          // Predicated region
          $region45: #{blstm_forward.4} parent=43 // pred_check
            _
          $region46: #{blstm_forward.4} parent=43 // pred_check_branch
            %2253 = sbr.rel (0) target = $region48
          $region47: #{blstm_forward.4} parent=43 // pred_region
            // Predicated region
            $region49: #{blstm_forward.4} parent=47 // pred_check
              _
            $region50: #{blstm_forward.4} parent=47 // pred_check_branch
              %2255 = sbr.rel target = $region52
            $region51: #{blstm_forward.4} parent=47 // pred_region
              // Predicated region
              $region64: #{blstm_forward.4} parent=51 // pred_check
                _
              $region65: #{blstm_forward.4} parent=51 // pred_check_branch
                %2276 = sbr.rel (0) target = $region67
              $region66: #{blstm_forward.4} parent=51 // pred_region
                loop: start=0, step=1, limit=1
                $region68: #{blstm_forward.4} parent=66 // loop_pre_header
                  _
                $region69: #{blstm_forward.4} parent=66 // loop_header
                  %s2278 = sphi 0, %s2282
                  %p2279 = scmp.ge.s32.totalorder %s2278, 1
                  %s2283 = sphi %s2233, %s2233
                  %s2284 = sphi %s2251, %s2251
                $region70: #{blstm_forward.4} parent=66 // loop_header_branch
                  %2281 = sbr.rel (%p2279) target = $region74
                $region71: #{blstm_forward.4} parent=66 // loop_body
                  _
                $region72: #{blstm_forward.4} parent=66 // loop_footer
                  %s2282 = sadd.s32 1, %s2278
                $region73: #{blstm_forward.4} parent=66 // loop_footer_branch
                  %2277 = sbr.rel target = $region69
                $region74: #{blstm_forward.4} parent=66 // loop_exit
                  _
                loop: start=0, step=1, limit=1
                $region75: #{blstm_forward.4} parent=66 // loop_pre_header
                  _
                $region76: #{blstm_forward.4} parent=66 // loop_header
                  %s2287 = sphi 0, %s2291
                  %p2288 = scmp.ge.s32.totalorder %s2287, 1
                  %s2292 = sphi %s2233, %s2233
                  %s2293 = sphi %s2251, %s2251
                $region77: #{blstm_forward.4} parent=66 // loop_header_branch
                  %2290 = sbr.rel (%p2288) target = $region81
                $region78: #{blstm_forward.4} parent=66 // loop_body
                  %v2294 = vld [vmem:[%s2292] sm:$0xf]
                  %2295 = vst [vmem:[%s2293] sm:$0xf] %v2294
                  %v2296 = vld [vmem:[%s2292 + $0x4] sm:$0xf]
                  %2297 = vst [vmem:[%s2293 + $0x8] sm:$0xf] %v2296
                  %v2298 = vld [vmem:[%s2292 + $0x8] sm:$0xf]
                  %2299 = vst [vmem:[%s2293 + $0x10] sm:$0xf] %v2298
                  %v2300 = vld [vmem:[%s2292 + $0xc] sm:$0xf]
                  %2301 = vst [vmem:[%s2293 + $0x18] sm:$0xf] %v2300
                $region79: #{blstm_forward.4} parent=66 // loop_footer
                  %s2291 = sadd.s32 1, %s2287
                $region80: #{blstm_forward.4} parent=66 // loop_footer_branch
                  %2286 = sbr.rel target = $region76
                $region81: #{blstm_forward.4} parent=66 // loop_exit
                  _
              $region67: #{blstm_forward.4} parent=51 // pred_fallthru
                _
            $region52: #{blstm_forward.4} parent=47 // pred_fallthru
              _
            // Predicated region
            $region53: #{blstm_forward.4} parent=47 // pred_check
              _
            $region54: #{blstm_forward.4} parent=47 // pred_check_branch
              %2257 = sbr.rel (0) target = $region56
            $region55: #{blstm_forward.4} parent=47 // pred_region
              loop: start=0, step=1, limit=1
              $region57: #{blstm_forward.4} parent=55 // loop_pre_header
                _
              $region58: #{blstm_forward.4} parent=55 // loop_header
                %s2260 = sphi 0, %s2264
                %p2261 = scmp.ge.s32.totalorder %s2260, 1
                %s2265 = sphi %s2233, %s2233
                %s2266 = sphi %s2251, %s2251
              $region59: #{blstm_forward.4} parent=55 // loop_header_branch
                %2263 = sbr.rel (%p2261) target = $region63
              $region60: #{blstm_forward.4} parent=55 // loop_body
                %v2267 = vld [vmem:[%s2265] sm:$0xf]
                %2268 = vst [vmem:[%s2266] sm:$0xf] %v2267
                %v2269 = vld [vmem:[%s2265 + $0x4] sm:$0xf]
                %2270 = vst [vmem:[%s2266 + $0x8] sm:$0xf] %v2269
                %v2271 = vld [vmem:[%s2265 + $0x8] sm:$0xf]
                %2272 = vst [vmem:[%s2266 + $0x10] sm:$0xf] %v2271
                %v2273 = vld [vmem:[%s2265 + $0xc] sm:$0xf]
                %2274 = vst [vmem:[%s2266 + $0x18] sm:$0xf] %v2273
              $region61: #{blstm_forward.4} parent=55 // loop_footer
                %s2264 = sadd.s32 1, %s2260
              $region62: #{blstm_forward.4} parent=55 // loop_footer_branch
                %2259 = sbr.rel target = $region58
              $region63: #{blstm_forward.4} parent=55 // loop_exit
                _
            $region56: #{blstm_forward.4} parent=47 // pred_fallthru
              _
          $region48: #{blstm_forward.4} parent=43 // pred_fallthru
            _
          %2302 = vnop
        $region44: #{blstm_forward.4} parent=35 // pred_fallthru
          _
        // Predicated region
        $region82: #{blstm_forward.4} parent=35 // pred_check
          %p2303 = pneg %p196
        $region83: #{blstm_forward.4} parent=35 // pred_check_branch
          %2305 = sbr.rel (%p2303) target = $region85
        $region84: #{blstm_forward.4} parent=35 // pred_region
          _
        $region85: #{blstm_forward.4} parent=35 // pred_fallthru
          _
        // Predicated region
        $region86: #{blstm_forward.4} parent=35 // pred_check
          %p2306 = pneg %p222
        $region87: #{blstm_forward.4} parent=35 // pred_check_branch
          %2308 = sbr.rel (%p2306) target = $region89
        $region88: #{blstm_forward.4} parent=35 // pred_region
          _
        $region89: #{blstm_forward.4} parent=35 // pred_fallthru
          _
      $region36: #{blstm_forward.4} parent=5 // pred_fallthru
        _
      %p2309 = scmp.le.s32.totalorder 2, %s13
      // Predicated region
      $region90: #{blstm_forward.4} parent=5 // pred_check
        %p2310 = pneg %p2309
      $region91: #{blstm_forward.4} parent=5 // pred_check_branch
        %2312 = sbr.rel (%p2310) target = $region93
      $region92: #{blstm_forward.4} parent=5 // pred_region
        %s2313 = ssub.s32 %s13, 2
        // Predicated region
        $region94: #{blstm_forward.4} parent=92 // pred_check
          %p2314 = pneg %p176
        $region95: #{blstm_forward.4} parent=92 // pred_check_branch
          %2316 = sbr.rel (%p2314) target = $region97
        $region96: #{blstm_forward.4} parent=92 // pred_region
          %s2317 = sand.u32 %s161, 1
          %s2318 = sand.u32 %s161, 1
          %s2319 = smul.addr %s2318, 16
          %s2320 = scalar_lea.vmem [#allocation6], %s2319
        $region97: #{blstm_forward.4} parent=92 // pred_fallthru
          _
        // Predicated region
        $region98: #{blstm_forward.4} parent=92 // pred_check
          %p2321 = pneg %p202
        $region99: #{blstm_forward.4} parent=92 // pred_check_branch
          %2323 = sbr.rel (%p2321) target = $region101
        $region100: #{blstm_forward.4} parent=92 // pred_region
          %p2324 = scmp.lt.s32.totalorder %s24, 1
          %s2325 = scalar_select %p2324, %s24, 1
          %s2326 = scalar_lea.vmem %s5, %s2325
        $region101: #{blstm_forward.4} parent=92 // pred_fallthru
          _
        // Predicated region
        $region102: #{blstm_forward.4} parent=92 // pred_check
          %p2327 = pneg %p228
        $region103: #{blstm_forward.4} parent=92 // pred_check_branch
          %2329 = sbr.rel (%p2327) target = $region105
        $region104: #{blstm_forward.4} parent=92 // pred_region
          %p2330 = scmp.lt.s32.totalorder %s24, 1
          %s2331 = scalar_select %p2330, %s24, 1
          %s2332 = scalar_lea.vmem %s6, %s2331
        $region105: #{blstm_forward.4} parent=92 // pred_fallthru
          _
      $region93: #{blstm_forward.4} parent=5 // pred_fallthru
        _
    $region6: #{blstm_forward.4} parent=1 // loop_footer
      %s17 = sadd.s32 1, %s13
    $region7: #{blstm_forward.4} parent=1 // loop_footer_branch
      %12 = sbr.rel target = $region3
    $region8: #{blstm_forward.4} parent=1 // loop_exit
      _

</llo_original>
